<compile_context>
chip_gen: v5e
topology: v5e:2x2
jax: 0.10.0
libtpu: 0.0.40
codegen_flags: <defaults>
</compile_context>

<pallas_src>
import math
from functools import partial

import jax
import jax.numpy as jnp
from jax import lax
from jax.experimental import pallas as pl
from jax.experimental.pallas import tpu as pltpu


def _ln_channels(v, gamma, beta, eps=1e-5):
    """LayerNorm over the channel (sublane) axis of a (C, L) tile."""
    mu = jnp.mean(v, axis=0, keepdims=True)
    var = jnp.mean((v - mu) ** 2, axis=0, keepdims=True)
    return (v - mu) * lax.rsqrt(var + eps) * gamma + beta


def make_kernel(num_channels, num_heads, seq_len, q_tile):
    C, H, L, TQ = num_channels, num_heads, seq_len, q_tile
    hd = C // H
    n_qt = L // TQ
    scale = 1.0 / math.sqrt(hd)

    def kernel(x_ref, wqkv_ref, bqkv_ref, wo_ref, w1_ref, w2_ref, cvec_ref,
               o_ref):
        x = x_ref[0]                                         # (C, L)

        # packed per-channel vectors, each (C, 1)
        ln_g, ln_b = cvec_ref[0], cvec_ref[1]
        bo = cvec_ref[2]
        f1_g, f1_b, b1 = cvec_ref[3], cvec_ref[4], cvec_ref[5]
        f2_g, f2_b, b2 = cvec_ref[6], cvec_ref[7], cvec_ref[8]

        # --- pre-attention LayerNorm (self.ln), reduction over channels ---
        x_ln = _ln_channels(x, ln_g, ln_b)                   # (C, L)

        # --- multi-head attention: one head per fori_loop iteration ---
        def head_body(h, attn):
            w = wqkv_ref[h]                                  # (3*hd, C)
            b = bqkv_ref[h]                                  # (3*hd, 1)
            wo_h = wo_ref[h]                                 # (C, hd)

            qh = (jnp.dot(w[0:hd], x_ln,
                          preferred_element_type=jnp.float32)
                  + b[0:hd]) * scale                         # (hd, L)
            kh = jnp.dot(w[hd:2 * hd], x_ln,
                         preferred_element_type=jnp.float32) + b[hd:2 * hd]
            vh = jnp.dot(w[2 * hd:3 * hd], x_ln,
                         preferred_element_type=jnp.float32) + b[2 * hd:3 * hd]

            parts = []
            for t in range(n_qt):                            # query tiles (lane aligned)
                q_t = qh[:, t * TQ:(t + 1) * TQ]             # (hd, TQ)
                # scores: q_t^T @ kh  (contract head dim of both operands)
                s = lax.dot_general(q_t, kh, (((0,), (0,)), ((), ())),
                                    preferred_element_type=jnp.float32)   # (TQ, L)
                s = s - jnp.max(s, axis=-1, keepdims=True)
                p = jnp.exp(s)
                p = p * pl.reciprocal(jnp.sum(p, axis=-1, keepdims=True),
                                      approx=True)
                # per-head output: vh @ p^T  -> (hd, TQ)
                o_t = lax.dot_general(vh, p, (((1,), (1,)), ((), ())),
                                      preferred_element_type=jnp.float32)
                # fused out-projection contribution for this head
                parts.append(jnp.dot(wo_h, o_t,
                                     preferred_element_type=jnp.float32))  # (C, TQ)
            contrib = parts[0] if n_qt == 1 else jnp.concatenate(parts, axis=-1)
            return attn + contrib

        attn0 = jnp.broadcast_to(bo, (C, L))                 # out_proj bias
        attn = lax.fori_loop(0, H, head_body, attn0, unroll=True)

        # --- residual 1: attention_value + x ---
        h1 = attn + x

        # --- ff_self: LN -> Linear -> LN -> Linear, residual 2 ---
        y = _ln_channels(h1, f1_g, f1_b)
        y = jnp.dot(w1_ref[...], y, preferred_element_type=jnp.float32) + b1
        y = _ln_channels(y, f2_g, f2_b)
        y = jnp.dot(w2_ref[...], y, preferred_element_type=jnp.float32) + b2

        o_ref[0] = y + h1

    return kernel


def pack_params(params, num_heads):
    """Pre-split per-head weights and pack per-channel vectors (wrapper-side)."""
    C = params["ln_gamma"].shape[0]
    hd = C // num_heads
    Wqkv = params["in_proj_weight"]                      # (3C, C) = [Wq; Wk; Wv]
    bqkv = params["in_proj_bias"]                        # (3C,)
    wq = Wqkv[0:C].reshape(num_heads, hd, C)
    wk = Wqkv[C:2 * C].reshape(num_heads, hd, C)
    wv = Wqkv[2 * C:3 * C].reshape(num_heads, hd, C)
    wqkv_h = jnp.concatenate([wq, wk, wv], axis=1)       # (H, 3*hd, C)
    bq = bqkv[0:C].reshape(num_heads, hd, 1)
    bk = bqkv[C:2 * C].reshape(num_heads, hd, 1)
    bv = bqkv[2 * C:3 * C].reshape(num_heads, hd, 1)
    bqkv_h = jnp.concatenate([bq, bk, bv], axis=1)       # (H, 3*hd, 1)
    # out_proj columns per head: Wo[:, h*hd:(h+1)*hd] -> (H, C, hd)
    wo_h = params["out_proj_weight"].reshape(C, num_heads, hd).transpose(1, 0, 2)
    cvec = jnp.stack([
        params["ln_gamma"], params["ln_beta"], params["out_proj_bias"],
        params["ff_ln1_gamma"], params["ff_ln1_beta"], params["ff_b1"],
        params["ff_ln2_gamma"], params["ff_ln2_beta"], params["ff_b2"],
    ], axis=0).reshape(9, C, 1)
    return wqkv_h, bqkv_h, wo_h, params["ff_w1"], params["ff_w2"], cvec


def transformer_encoder_sa(x, params, num_heads: int = 4, q_tile: int = 128):
    """x: [B, C, H, W] float32 (NCHW, like the PyTorch module)."""
    B, C, Himg, Wimg = x.shape
    L = Himg * Wimg
    # pure reshape (no transpose): C on sublanes, L on lanes
    x_cm = x.reshape(B, C, L).astype(jnp.float32)

    wqkv_h, bqkv_h, wo_h, w1, w2, cvec = pack_params(params, num_heads)

    TQ = min(q_tile, L)
    assert L % TQ == 0, "sequence length must be a multiple of the query tile"

    kernel = make_kernel(C, num_heads, L, TQ)
    out = pl.pallas_call(
        kernel,
        out_shape=jax.ShapeDtypeStruct((B, C, L), jnp.float32),
        grid=(B,),
        in_specs=[
            pl.BlockSpec((1, C, L), lambda b: (b, 0, 0)),      # x, per-batch block
            pl.BlockSpec(wqkv_h.shape, lambda b: (0, 0, 0)),   # per-head Wq|Wk|Wv
            pl.BlockSpec(bqkv_h.shape, lambda b: (0, 0, 0)),   # per-head biases
            pl.BlockSpec(wo_h.shape, lambda b: (0, 0, 0)),     # per-head Wout cols
            pl.BlockSpec(w1.shape, lambda b: (0, 0)),          # ff linear 1
            pl.BlockSpec(w2.shape, lambda b: (0, 0)),          # ff linear 2
            pl.BlockSpec(cvec.shape, lambda b: (0, 0, 0)),     # packed channel vecs
        ],
        out_specs=pl.BlockSpec((1, C, L), lambda b: (b, 0, 0)),
        compiler_params=pltpu.CompilerParams(
            dimension_semantics=("parallel",)),
    )(x_cm, wqkv_h, bqkv_h, wo_h, w1, w2, cvec)

    return out.reshape(B, C, Himg, Wimg)


def init_params(key, C):
    ks = jax.random.split(key, 14)
    w = 0.05
    return dict(
        ln_gamma=1.0 + 0.1 * jax.random.normal(ks[0], (C,), jnp.float32),
        ln_beta=0.05 * jax.random.normal(ks[1], (C,), jnp.float32),
        in_proj_weight=w * jax.random.normal(ks[2], (3 * C, C), jnp.float32),
        in_proj_bias=w * jax.random.normal(ks[3], (3 * C,), jnp.float32),
        out_proj_weight=w * jax.random.normal(ks[4], (C, C), jnp.float32),
        out_proj_bias=w * jax.random.normal(ks[5], (C,), jnp.float32),
        ff_ln1_gamma=1.0 + 0.1 * jax.random.normal(ks[6], (C,), jnp.float32),
        ff_ln1_beta=0.05 * jax.random.normal(ks[7], (C,), jnp.float32),
        ff_w1=w * jax.random.normal(ks[8], (C, C), jnp.float32),
        ff_b1=w * jax.random.normal(ks[9], (C,), jnp.float32),
        ff_ln2_gamma=1.0 + 0.1 * jax.random.normal(ks[10], (C,), jnp.float32),
        ff_ln2_beta=0.05 * jax.random.normal(ks[11], (C,), jnp.float32),
        ff_w2=w * jax.random.normal(ks[12], (C, C), jnp.float32),
        ff_b2=w * jax.random.normal(ks[13], (C,), jnp.float32),
    )


def _ln_last(v, gamma, beta, eps=1e-5):
    mu = jnp.mean(v, axis=-1, keepdims=True)
    var = jnp.mean((v - mu) ** 2, axis=-1, keepdims=True)
    return (v - mu) * lax.rsqrt(var + eps) * gamma + beta


def reference(x, params, num_heads=4):
    """Pure-JAX mirror of the PyTorch forward (row-major) for correctness."""
    B, C, H, W = x.shape
    L = H * W
    hd = C // num_heads
    xs = jnp.transpose(x.reshape(B, C, L), (0, 2, 1))
    x_ln = _ln_last(xs, params["ln_gamma"], params["ln_beta"])
    qkv = x_ln @ params["in_proj_weight"].T + params["in_proj_bias"]
    q, k, v = jnp.split(qkv, 3, axis=-1)
    qh = q.reshape(B, L, num_heads, hd).transpose(0, 2, 1, 3)
    kh = k.reshape(B, L, num_heads, hd).transpose(0, 2, 1, 3)
    vh = v.reshape(B, L, num_heads, hd).transpose(0, 2, 1, 3)
    s = jnp.einsum("bhqd,bhkd->bhqk", qh, kh) / math.sqrt(hd)
    p = jax.nn.softmax(s, axis=-1)
    o = jnp.einsum("bhqk,bhkd->bhqd", p, vh).transpose(0, 2, 1, 3).reshape(B, L, C)
    attn = o @ params["out_proj_weight"].T + params["out_proj_bias"]
    h1 = attn + xs
    y = _ln_last(h1, params["ff_ln1_gamma"], params["ff_ln1_beta"])
    y = y @ params["ff_w1"].T + params["ff_b1"]
    y = _ln_last(y, params["ff_ln2_gamma"], params["ff_ln2_beta"])
    y = y @ params["ff_w2"].T + params["ff_b2"]
    out = y + h1
    return jnp.transpose(out, (0, 2, 1)).reshape(B, C, H, W)


if __name__ == "__main__":
    B, C, size, num_heads = 2, 32, 16, 4   # seq length L = size*size = 256
    key = jax.random.PRNGKey(0)
    kx, kp = jax.random.split(key)
    x = jax.random.normal(kx, (B, C, size, size), jnp.float32)
    params = init_params(kp, C)

    fwd = jax.jit(partial(transformer_encoder_sa, num_heads=num_heads))
    out = jax.block_until_ready(fwd(x, params))
    assert out.shape == (B, C, size, size)

    ref = reference(x, params, num_heads=num_heads)
    err = float(jnp.max(jnp.abs(out - ref)))
    assert err < 2e-2, f"max abs err {err}"
    print("KERNEL_OK")
</pallas_src>

<mosaic_0001>
module attributes {stable_mosaic.version = 11 : i64} {
  func.func @kernel(%arg0: i32, %arg1: memref<1x32x256xf32, #tpu.memory_space<vmem>>, %arg2: memref<4x24x32xf32, #tpu.memory_space<vmem>>, %arg3: memref<4x24x1xf32, #tpu.memory_space<vmem>>, %arg4: memref<4x32x8xf32, #tpu.memory_space<vmem>>, %arg5: memref<32x32xf32, #tpu.memory_space<vmem>>, %arg6: memref<32x32xf32, #tpu.memory_space<vmem>>, %arg7: memref<9x32x1xf32, #tpu.memory_space<vmem>>, %arg8: memref<1x32x256xf32, #tpu.memory_space<vmem>>) attributes {dimension_semantics = [#tpu.dimension_semantics<parallel>], iteration_bounds = array<i64: 2>, scalar_prefetch = 0 : i64, scratch_operands = 0 : i64, tpu.core_type = #tpu.core_type<tc>, window_params = [{transform_indices = @transform_0, window_bounds = array<i64: 1, 32, 256>}, {pipeline_mode = #tpu.pipeline_mode<synchronous>, transform_indices = @transform_1, window_bounds = array<i64: 4, 24, 32>}, {pipeline_mode = #tpu.pipeline_mode<synchronous>, transform_indices = @transform_2, window_bounds = array<i64: 4, 24, 1>}, {pipeline_mode = #tpu.pipeline_mode<synchronous>, transform_indices = @transform_3, window_bounds = array<i64: 4, 32, 8>}, {pipeline_mode = #tpu.pipeline_mode<synchronous>, transform_indices = @transform_4, window_bounds = array<i64: 32, 32>}, {pipeline_mode = #tpu.pipeline_mode<synchronous>, transform_indices = @transform_5, window_bounds = array<i64: 32, 32>}, {pipeline_mode = #tpu.pipeline_mode<synchronous>, transform_indices = @transform_6, window_bounds = array<i64: 9, 32, 1>}, {transform_indices = @transform_7, window_bounds = array<i64: 1, 32, 256>}]} {
    %c0 = arith.constant 0 : index
    %c0_0 = arith.constant 0 : index
    %c0_1 = arith.constant 0 : index
    %0 = vector.load %arg1[%c0, %c0_0, %c0_1] : memref<1x32x256xf32, #tpu.memory_space<vmem>>, vector<1x32x256xf32>
    %1 = vector.shape_cast %0 : vector<1x32x256xf32> to vector<32x256xf32>
    %c0_2 = arith.constant 0 : index
    %c0_3 = arith.constant 0 : index
    %c0_4 = arith.constant 0 : index
    %2 = vector.load %arg7[%c0_2, %c0_3, %c0_4] : memref<9x32x1xf32, #tpu.memory_space<vmem>>, vector<1x32x1xf32>
    %3 = vector.shape_cast %2 : vector<1x32x1xf32> to vector<32x1xf32>
    %c1 = arith.constant 1 : index
    %c0_5 = arith.constant 0 : index
    %c0_6 = arith.constant 0 : index
    %4 = vector.load %arg7[%c1, %c0_5, %c0_6] : memref<9x32x1xf32, #tpu.memory_space<vmem>>, vector<1x32x1xf32>
    %5 = vector.shape_cast %4 : vector<1x32x1xf32> to vector<32x1xf32>
    %c2 = arith.constant 2 : index
    %c0_7 = arith.constant 0 : index
    %c0_8 = arith.constant 0 : index
    %6 = vector.load %arg7[%c2, %c0_7, %c0_8] : memref<9x32x1xf32, #tpu.memory_space<vmem>>, vector<1x32x1xf32>
    %7 = vector.shape_cast %6 : vector<1x32x1xf32> to vector<32x1xf32>
    %c3 = arith.constant 3 : index
    %c0_9 = arith.constant 0 : index
    %c0_10 = arith.constant 0 : index
    %8 = vector.load %arg7[%c3, %c0_9, %c0_10] : memref<9x32x1xf32, #tpu.memory_space<vmem>>, vector<1x32x1xf32>
    %9 = vector.shape_cast %8 : vector<1x32x1xf32> to vector<32x1xf32>
    %c4 = arith.constant 4 : index
    %c0_11 = arith.constant 0 : index
    %c0_12 = arith.constant 0 : index
    %10 = vector.load %arg7[%c4, %c0_11, %c0_12] : memref<9x32x1xf32, #tpu.memory_space<vmem>>, vector<1x32x1xf32>
    %11 = vector.shape_cast %10 : vector<1x32x1xf32> to vector<32x1xf32>
    %c5 = arith.constant 5 : index
    %c0_13 = arith.constant 0 : index
    %c0_14 = arith.constant 0 : index
    %12 = vector.load %arg7[%c5, %c0_13, %c0_14] : memref<9x32x1xf32, #tpu.memory_space<vmem>>, vector<1x32x1xf32>
    %13 = vector.shape_cast %12 : vector<1x32x1xf32> to vector<32x1xf32>
    %c6 = arith.constant 6 : index
    %c0_15 = arith.constant 0 : index
    %c0_16 = arith.constant 0 : index
    %14 = vector.load %arg7[%c6, %c0_15, %c0_16] : memref<9x32x1xf32, #tpu.memory_space<vmem>>, vector<1x32x1xf32>
    %15 = vector.shape_cast %14 : vector<1x32x1xf32> to vector<32x1xf32>
    %c7 = arith.constant 7 : index
    %c0_17 = arith.constant 0 : index
    %c0_18 = arith.constant 0 : index
    %16 = vector.load %arg7[%c7, %c0_17, %c0_18] : memref<9x32x1xf32, #tpu.memory_space<vmem>>, vector<1x32x1xf32>
    %17 = vector.shape_cast %16 : vector<1x32x1xf32> to vector<32x1xf32>
    %c8 = arith.constant 8 : index
    %c0_19 = arith.constant 0 : index
    %c0_20 = arith.constant 0 : index
    %18 = vector.load %arg7[%c8, %c0_19, %c0_20] : memref<9x32x1xf32, #tpu.memory_space<vmem>>, vector<1x32x1xf32>
    %19 = vector.shape_cast %18 : vector<1x32x1xf32> to vector<32x1xf32>
    %cst = arith.constant dense<0.000000e+00> : vector<256xf32>
    %20 = vector.multi_reduction <add>, %1, %cst [0] : vector<32x256xf32> to vector<256xf32>
    %21 = vector.shape_cast %20 : vector<256xf32> to vector<1x256xf32>
    %cst_21 = arith.constant 3.200000e+01 : f32
    %22 = vector.broadcast %cst_21 : f32 to vector<1x256xf32>
    %23 = arith.divf %21, %22 : vector<1x256xf32>
    %24 = vector.broadcast %23 : vector<1x256xf32> to vector<32x256xf32>
    %25 = arith.subf %1, %24 : vector<32x256xf32>
    %26 = arith.mulf %25, %25 : vector<32x256xf32>
    %cst_22 = arith.constant dense<0.000000e+00> : vector<256xf32>
    %27 = vector.multi_reduction <add>, %26, %cst_22 [0] : vector<32x256xf32> to vector<256xf32>
    %28 = vector.shape_cast %27 : vector<256xf32> to vector<1x256xf32>
    %cst_23 = arith.constant 3.200000e+01 : f32
    %29 = vector.broadcast %cst_23 : f32 to vector<1x256xf32>
    %30 = arith.divf %28, %29 : vector<1x256xf32>
    %31 = vector.broadcast %23 : vector<1x256xf32> to vector<32x256xf32>
    %32 = arith.subf %1, %31 : vector<32x256xf32>
    %cst_24 = arith.constant 9.99999974E-6 : f32
    %33 = vector.broadcast %cst_24 : f32 to vector<1x256xf32>
    %34 = arith.addf %30, %33 : vector<1x256xf32>
    %35 = math.rsqrt %34 : vector<1x256xf32>
    %36 = vector.broadcast %35 : vector<1x256xf32> to vector<32x256xf32>
    %37 = arith.mulf %32, %36 : vector<32x256xf32>
    %38 = vector.broadcast %3 : vector<32x1xf32> to vector<32x256xf32>
    %39 = arith.mulf %37, %38 : vector<32x256xf32>
    %40 = vector.broadcast %5 : vector<32x1xf32> to vector<32x256xf32>
    %41 = arith.addf %39, %40 : vector<32x256xf32>
    %42 = vector.shape_cast %7 : vector<32x1xf32> to vector<32x1xf32>
    %43 = vector.broadcast %42 : vector<32x1xf32> to vector<32x256xf32>
    %c0_i32 = arith.constant 0 : i32
    %44 = arith.index_cast %c0_i32 : i32 to index
    %c0_25 = arith.constant 0 : index
    %c0_26 = arith.constant 0 : index
    %45 = vector.load %arg2[%44, %c0_25, %c0_26] : memref<4x24x32xf32, #tpu.memory_space<vmem>>, vector<1x24x32xf32>
    %46 = vector.shape_cast %45 : vector<1x24x32xf32> to vector<24x32xf32>
    %47 = arith.index_cast %c0_i32 : i32 to index
    %c0_27 = arith.constant 0 : index
    %c0_28 = arith.constant 0 : index
    %48 = vector.load %arg3[%47, %c0_27, %c0_28] : memref<4x24x1xf32, #tpu.memory_space<vmem>>, vector<1x24x1xf32>
    %49 = vector.shape_cast %48 : vector<1x24x1xf32> to vector<24x1xf32>
    %50 = arith.index_cast %c0_i32 : i32 to index
    %c0_29 = arith.constant 0 : index
    %c0_30 = arith.constant 0 : index
    %51 = vector.load %arg4[%50, %c0_29, %c0_30] : memref<4x32x8xf32, #tpu.memory_space<vmem>>, vector<1x32x8xf32>
    %52 = vector.shape_cast %51 : vector<1x32x8xf32> to vector<32x8xf32>
    %53 = vector.extract_strided_slice %46 {offsets = [0, 0], sizes = [8, 32], strides = [1, 1]} : vector<24x32xf32> to vector<8x32xf32>
    %cst_31 = arith.constant dense<0.000000e+00> : vector<8x256xf32>
    %54 = tpu.matmul %53, %41, %cst_31 {dimension_numbers = #tpu.dot_dimension_numbers<[1], [0], [0], [1], [0, 0, 1, 1], [], []>} : vector<8x32xf32>, vector<32x256xf32>, vector<8x256xf32> -> vector<8x256xf32>
    %55 = vector.extract_strided_slice %49 {offsets = [0, 0], sizes = [8, 1], strides = [1, 1]} : vector<24x1xf32> to vector<8x1xf32>
    %56 = vector.broadcast %55 : vector<8x1xf32> to vector<8x256xf32>
    %57 = arith.addf %54, %56 : vector<8x256xf32>
    %cst_32 = arith.constant 0.353553385 : f32
    %58 = vector.broadcast %cst_32 : f32 to vector<8x256xf32>
    %59 = arith.mulf %57, %58 : vector<8x256xf32>
    %60 = vector.extract_strided_slice %46 {offsets = [8, 0], sizes = [8, 32], strides = [1, 1]} : vector<24x32xf32> to vector<8x32xf32>
    %cst_33 = arith.constant dense<0.000000e+00> : vector<8x256xf32>
    %61 = tpu.matmul %60, %41, %cst_33 {dimension_numbers = #tpu.dot_dimension_numbers<[1], [0], [0], [1], [0, 0, 1, 1], [], []>} : vector<8x32xf32>, vector<32x256xf32>, vector<8x256xf32> -> vector<8x256xf32>
    %62 = vector.extract_strided_slice %49 {offsets = [8, 0], sizes = [8, 1], strides = [1, 1]} : vector<24x1xf32> to vector<8x1xf32>
    %63 = vector.broadcast %62 : vector<8x1xf32> to vector<8x256xf32>
    %64 = arith.addf %61, %63 : vector<8x256xf32>
    %65 = vector.extract_strided_slice %46 {offsets = [16, 0], sizes = [8, 32], strides = [1, 1]} : vector<24x32xf32> to vector<8x32xf32>
    %cst_34 = arith.constant dense<0.000000e+00> : vector<8x256xf32>
    %66 = tpu.matmul %65, %41, %cst_34 {dimension_numbers = #tpu.dot_dimension_numbers<[1], [0], [0], [1], [0, 0, 1, 1], [], []>} : vector<8x32xf32>, vector<32x256xf32>, vector<8x256xf32> -> vector<8x256xf32>
    %67 = vector.extract_strided_slice %49 {offsets = [16, 0], sizes = [8, 1], strides = [1, 1]} : vector<24x1xf32> to vector<8x1xf32>
    %68 = vector.broadcast %67 : vector<8x1xf32> to vector<8x256xf32>
    %69 = arith.addf %66, %68 : vector<8x256xf32>
    %70 = vector.extract_strided_slice %59 {offsets = [0, 0], sizes = [8, 128], strides = [1, 1]} : vector<8x256xf32> to vector<8x128xf32>
    %cst_35 = arith.constant dense<0.000000e+00> : vector<128x256xf32>
    %71 = tpu.matmul %70, %64, %cst_35 {dimension_numbers = #tpu.dot_dimension_numbers<[0], [0], [1], [1], [0, 1, 1, 1], [], []>} : vector<8x128xf32>, vector<8x256xf32>, vector<128x256xf32> -> vector<128x256xf32>
    %cst_36 = arith.constant dense<0xFF800000> : vector<128xf32>
    %72 = vector.multi_reduction <maximumf>, %71, %cst_36 [1] : vector<128x256xf32> to vector<128xf32>
    %73 = vector.shape_cast %72 : vector<128xf32> to vector<128x1xf32>
    %74 = vector.broadcast %73 : vector<128x1xf32> to vector<128x256xf32>
    %75 = arith.subf %71, %74 : vector<128x256xf32>
    %76 = math.exp %75 : vector<128x256xf32>
    %cst_37 = arith.constant dense<0.000000e+00> : vector<128xf32>
    %77 = vector.multi_reduction <add>, %76, %cst_37 [1] : vector<128x256xf32> to vector<128xf32>
    %78 = vector.shape_cast %77 : vector<128xf32> to vector<128x1xf32>
    %79 = tpu.reciprocal %78 {approx = true} : vector<128x1xf32> -> vector<128x1xf32>
    %80 = vector.broadcast %79 : vector<128x1xf32> to vector<128x256xf32>
    %81 = arith.mulf %76, %80 : vector<128x256xf32>
    %cst_38 = arith.constant dense<0.000000e+00> : vector<8x128xf32>
    %82 = tpu.matmul %69, %81, %cst_38 {dimension_numbers = #tpu.dot_dimension_numbers<[1], [1], [0], [0], [0, 0, 1, 0], [], []>} : vector<8x256xf32>, vector<128x256xf32>, vector<8x128xf32> -> vector<8x128xf32>
    %cst_39 = arith.constant dense<0.000000e+00> : vector<32x128xf32>
    %83 = tpu.matmul %52, %82, %cst_39 {dimension_numbers = #tpu.dot_dimension_numbers<[1], [0], [0], [1], [0, 0, 1, 1], [], []>} : vector<32x8xf32>, vector<8x128xf32>, vector<32x128xf32> -> vector<32x128xf32>
    %84 = vector.extract_strided_slice %59 {offsets = [0, 128], sizes = [8, 128], strides = [1, 1]} : vector<8x256xf32> to vector<8x128xf32>
    %cst_40 = arith.constant dense<0.000000e+00> : vector<128x256xf32>
    %85 = tpu.matmul %84, %64, %cst_40 {dimension_numbers = #tpu.dot_dimension_numbers<[0], [0], [1], [1], [0, 1, 1, 1], [], []>} : vector<8x128xf32>, vector<8x256xf32>, vector<128x256xf32> -> vector<128x256xf32>
    %cst_41 = arith.constant dense<0xFF800000> : vector<128xf32>
    %86 = vector.multi_reduction <maximumf>, %85, %cst_41 [1] : vector<128x256xf32> to vector<128xf32>
    %87 = vector.shape_cast %86 : vector<128xf32> to vector<128x1xf32>
    %88 = vector.broadcast %87 : vector<128x1xf32> to vector<128x256xf32>
    %89 = arith.subf %85, %88 : vector<128x256xf32>
    %90 = math.exp %89 : vector<128x256xf32>
    %cst_42 = arith.constant dense<0.000000e+00> : vector<128xf32>
    %91 = vector.multi_reduction <add>, %90, %cst_42 [1] : vector<128x256xf32> to vector<128xf32>
    %92 = vector.shape_cast %91 : vector<128xf32> to vector<128x1xf32>
    %93 = tpu.reciprocal %92 {approx = true} : vector<128x1xf32> -> vector<128x1xf32>
    %94 = vector.broadcast %93 : vector<128x1xf32> to vector<128x256xf32>
    %95 = arith.mulf %90, %94 : vector<128x256xf32>
    %cst_43 = arith.constant dense<0.000000e+00> : vector<8x128xf32>
    %96 = tpu.matmul %69, %95, %cst_43 {dimension_numbers = #tpu.dot_dimension_numbers<[1], [1], [0], [0], [0, 0, 1, 0], [], []>} : vector<8x256xf32>, vector<128x256xf32>, vector<8x128xf32> -> vector<8x128xf32>
    %cst_44 = arith.constant dense<0.000000e+00> : vector<32x128xf32>
    %97 = tpu.matmul %52, %96, %cst_44 {dimension_numbers = #tpu.dot_dimension_numbers<[1], [0], [0], [1], [0, 0, 1, 1], [], []>} : vector<32x8xf32>, vector<8x128xf32>, vector<32x128xf32> -> vector<32x128xf32>
    %98 = tpu.concatenate %83, %97 in 1 : vector<32x128xf32>, vector<32x128xf32> -> vector<32x256xf32>
    %99 = arith.addf %43, %98 : vector<32x256xf32>
    %c1_i32 = arith.constant 1 : i32
    %100 = arith.index_cast %c1_i32 : i32 to index
    %c0_45 = arith.constant 0 : index
    %c0_46 = arith.constant 0 : index
    %101 = vector.load %arg2[%100, %c0_45, %c0_46] : memref<4x24x32xf32, #tpu.memory_space<vmem>>, vector<1x24x32xf32>
    %102 = vector.shape_cast %101 : vector<1x24x32xf32> to vector<24x32xf32>
    %103 = arith.index_cast %c1_i32 : i32 to index
    %c0_47 = arith.constant 0 : index
    %c0_48 = arith.constant 0 : index
    %104 = vector.load %arg3[%103, %c0_47, %c0_48] : memref<4x24x1xf32, #tpu.memory_space<vmem>>, vector<1x24x1xf32>
    %105 = vector.shape_cast %104 : vector<1x24x1xf32> to vector<24x1xf32>
    %106 = arith.index_cast %c1_i32 : i32 to index
    %c0_49 = arith.constant 0 : index
    %c0_50 = arith.constant 0 : index
    %107 = vector.load %arg4[%106, %c0_49, %c0_50] : memref<4x32x8xf32, #tpu.memory_space<vmem>>, vector<1x32x8xf32>
    %108 = vector.shape_cast %107 : vector<1x32x8xf32> to vector<32x8xf32>
    %109 = vector.extract_strided_slice %102 {offsets = [0, 0], sizes = [8, 32], strides = [1, 1]} : vector<24x32xf32> to vector<8x32xf32>
    %cst_51 = arith.constant dense<0.000000e+00> : vector<8x256xf32>
    %110 = tpu.matmul %109, %41, %cst_51 {dimension_numbers = #tpu.dot_dimension_numbers<[1], [0], [0], [1], [0, 0, 1, 1], [], []>} : vector<8x32xf32>, vector<32x256xf32>, vector<8x256xf32> -> vector<8x256xf32>
    %111 = vector.extract_strided_slice %105 {offsets = [0, 0], sizes = [8, 1], strides = [1, 1]} : vector<24x1xf32> to vector<8x1xf32>
    %112 = vector.broadcast %111 : vector<8x1xf32> to vector<8x256xf32>
    %113 = arith.addf %110, %112 : vector<8x256xf32>
    %cst_52 = arith.constant 0.353553385 : f32
    %114 = vector.broadcast %cst_52 : f32 to vector<8x256xf32>
    %115 = arith.mulf %113, %114 : vector<8x256xf32>
    %116 = vector.extract_strided_slice %102 {offsets = [8, 0], sizes = [8, 32], strides = [1, 1]} : vector<24x32xf32> to vector<8x32xf32>
    %cst_53 = arith.constant dense<0.000000e+00> : vector<8x256xf32>
    %117 = tpu.matmul %116, %41, %cst_53 {dimension_numbers = #tpu.dot_dimension_numbers<[1], [0], [0], [1], [0, 0, 1, 1], [], []>} : vector<8x32xf32>, vector<32x256xf32>, vector<8x256xf32> -> vector<8x256xf32>
    %118 = vector.extract_strided_slice %105 {offsets = [8, 0], sizes = [8, 1], strides = [1, 1]} : vector<24x1xf32> to vector<8x1xf32>
    %119 = vector.broadcast %118 : vector<8x1xf32> to vector<8x256xf32>
    %120 = arith.addf %117, %119 : vector<8x256xf32>
    %121 = vector.extract_strided_slice %102 {offsets = [16, 0], sizes = [8, 32], strides = [1, 1]} : vector<24x32xf32> to vector<8x32xf32>
    %cst_54 = arith.constant dense<0.000000e+00> : vector<8x256xf32>
    %122 = tpu.matmul %121, %41, %cst_54 {dimension_numbers = #tpu.dot_dimension_numbers<[1], [0], [0], [1], [0, 0, 1, 1], [], []>} : vector<8x32xf32>, vector<32x256xf32>, vector<8x256xf32> -> vector<8x256xf32>
    %123 = vector.extract_strided_slice %105 {offsets = [16, 0], sizes = [8, 1], strides = [1, 1]} : vector<24x1xf32> to vector<8x1xf32>
    %124 = vector.broadcast %123 : vector<8x1xf32> to vector<8x256xf32>
    %125 = arith.addf %122, %124 : vector<8x256xf32>
    %126 = vector.extract_strided_slice %115 {offsets = [0, 0], sizes = [8, 128], strides = [1, 1]} : vector<8x256xf32> to vector<8x128xf32>
    %cst_55 = arith.constant dense<0.000000e+00> : vector<128x256xf32>
    %127 = tpu.matmul %126, %120, %cst_55 {dimension_numbers = #tpu.dot_dimension_numbers<[0], [0], [1], [1], [0, 1, 1, 1], [], []>} : vector<8x128xf32>, vector<8x256xf32>, vector<128x256xf32> -> vector<128x256xf32>
    %cst_56 = arith.constant dense<0xFF800000> : vector<128xf32>
    %128 = vector.multi_reduction <maximumf>, %127, %cst_56 [1] : vector<128x256xf32> to vector<128xf32>
    %129 = vector.shape_cast %128 : vector<128xf32> to vector<128x1xf32>
    %130 = vector.broadcast %129 : vector<128x1xf32> to vector<128x256xf32>
    %131 = arith.subf %127, %130 : vector<128x256xf32>
    %132 = math.exp %131 : vector<128x256xf32>
    %cst_57 = arith.constant dense<0.000000e+00> : vector<128xf32>
    %133 = vector.multi_reduction <add>, %132, %cst_57 [1] : vector<128x256xf32> to vector<128xf32>
    %134 = vector.shape_cast %133 : vector<128xf32> to vector<128x1xf32>
    %135 = tpu.reciprocal %134 {approx = true} : vector<128x1xf32> -> vector<128x1xf32>
    %136 = vector.broadcast %135 : vector<128x1xf32> to vector<128x256xf32>
    %137 = arith.mulf %132, %136 : vector<128x256xf32>
    %cst_58 = arith.constant dense<0.000000e+00> : vector<8x128xf32>
    %138 = tpu.matmul %125, %137, %cst_58 {dimension_numbers = #tpu.dot_dimension_numbers<[1], [1], [0], [0], [0, 0, 1, 0], [], []>} : vector<8x256xf32>, vector<128x256xf32>, vector<8x128xf32> -> vector<8x128xf32>
    %cst_59 = arith.constant dense<0.000000e+00> : vector<32x128xf32>
    %139 = tpu.matmul %108, %138, %cst_59 {dimension_numbers = #tpu.dot_dimension_numbers<[1], [0], [0], [1], [0, 0, 1, 1], [], []>} : vector<32x8xf32>, vector<8x128xf32>, vector<32x128xf32> -> vector<32x128xf32>
    %140 = vector.extract_strided_slice %115 {offsets = [0, 128], sizes = [8, 128], strides = [1, 1]} : vector<8x256xf32> to vector<8x128xf32>
    %cst_60 = arith.constant dense<0.000000e+00> : vector<128x256xf32>
    %141 = tpu.matmul %140, %120, %cst_60 {dimension_numbers = #tpu.dot_dimension_numbers<[0], [0], [1], [1], [0, 1, 1, 1], [], []>} : vector<8x128xf32>, vector<8x256xf32>, vector<128x256xf32> -> vector<128x256xf32>
    %cst_61 = arith.constant dense<0xFF800000> : vector<128xf32>
    %142 = vector.multi_reduction <maximumf>, %141, %cst_61 [1] : vector<128x256xf32> to vector<128xf32>
    %143 = vector.shape_cast %142 : vector<128xf32> to vector<128x1xf32>
    %144 = vector.broadcast %143 : vector<128x1xf32> to vector<128x256xf32>
    %145 = arith.subf %141, %144 : vector<128x256xf32>
    %146 = math.exp %145 : vector<128x256xf32>
    %cst_62 = arith.constant dense<0.000000e+00> : vector<128xf32>
    %147 = vector.multi_reduction <add>, %146, %cst_62 [1] : vector<128x256xf32> to vector<128xf32>
    %148 = vector.shape_cast %147 : vector<128xf32> to vector<128x1xf32>
    %149 = tpu.reciprocal %148 {approx = true} : vector<128x1xf32> -> vector<128x1xf32>
    %150 = vector.broadcast %149 : vector<128x1xf32> to vector<128x256xf32>
    %151 = arith.mulf %146, %150 : vector<128x256xf32>
    %cst_63 = arith.constant dense<0.000000e+00> : vector<8x128xf32>
    %152 = tpu.matmul %125, %151, %cst_63 {dimension_numbers = #tpu.dot_dimension_numbers<[1], [1], [0], [0], [0, 0, 1, 0], [], []>} : vector<8x256xf32>, vector<128x256xf32>, vector<8x128xf32> -> vector<8x128xf32>
    %cst_64 = arith.constant dense<0.000000e+00> : vector<32x128xf32>
    %153 = tpu.matmul %108, %152, %cst_64 {dimension_numbers = #tpu.dot_dimension_numbers<[1], [0], [0], [1], [0, 0, 1, 1], [], []>} : vector<32x8xf32>, vector<8x128xf32>, vector<32x128xf32> -> vector<32x128xf32>
    %154 = tpu.concatenate %139, %153 in 1 : vector<32x128xf32>, vector<32x128xf32> -> vector<32x256xf32>
    %155 = arith.addf %99, %154 : vector<32x256xf32>
    %c2_i32 = arith.constant 2 : i32
    %156 = arith.index_cast %c2_i32 : i32 to index
    %c0_65 = arith.constant 0 : index
    %c0_66 = arith.constant 0 : index
    %157 = vector.load %arg2[%156, %c0_65, %c0_66] : memref<4x24x32xf32, #tpu.memory_space<vmem>>, vector<1x24x32xf32>
    %158 = vector.shape_cast %157 : vector<1x24x32xf32> to vector<24x32xf32>
    %159 = arith.index_cast %c2_i32 : i32 to index
    %c0_67 = arith.constant 0 : index
    %c0_68 = arith.constant 0 : index
    %160 = vector.load %arg3[%159, %c0_67, %c0_68] : memref<4x24x1xf32, #tpu.memory_space<vmem>>, vector<1x24x1xf32>
    %161 = vector.shape_cast %160 : vector<1x24x1xf32> to vector<24x1xf32>
    %162 = arith.index_cast %c2_i32 : i32 to index
    %c0_69 = arith.constant 0 : index
    %c0_70 = arith.constant 0 : index
    %163 = vector.load %arg4[%162, %c0_69, %c0_70] : memref<4x32x8xf32, #tpu.memory_space<vmem>>, vector<1x32x8xf32>
    %164 = vector.shape_cast %163 : vector<1x32x8xf32> to vector<32x8xf32>
    %165 = vector.extract_strided_slice %158 {offsets = [0, 0], sizes = [8, 32], strides = [1, 1]} : vector<24x32xf32> to vector<8x32xf32>
    %cst_71 = arith.constant dense<0.000000e+00> : vector<8x256xf32>
    %166 = tpu.matmul %165, %41, %cst_71 {dimension_numbers = #tpu.dot_dimension_numbers<[1], [0], [0], [1], [0, 0, 1, 1], [], []>} : vector<8x32xf32>, vector<32x256xf32>, vector<8x256xf32> -> vector<8x256xf32>
    %167 = vector.extract_strided_slice %161 {offsets = [0, 0], sizes = [8, 1], strides = [1, 1]} : vector<24x1xf32> to vector<8x1xf32>
    %168 = vector.broadcast %167 : vector<8x1xf32> to vector<8x256xf32>
    %169 = arith.addf %166, %168 : vector<8x256xf32>
    %cst_72 = arith.constant 0.353553385 : f32
    %170 = vector.broadcast %cst_72 : f32 to vector<8x256xf32>
    %171 = arith.mulf %169, %170 : vector<8x256xf32>
    %172 = vector.extract_strided_slice %158 {offsets = [8, 0], sizes = [8, 32], strides = [1, 1]} : vector<24x32xf32> to vector<8x32xf32>
    %cst_73 = arith.constant dense<0.000000e+00> : vector<8x256xf32>
    %173 = tpu.matmul %172, %41, %cst_73 {dimension_numbers = #tpu.dot_dimension_numbers<[1], [0], [0], [1], [0, 0, 1, 1], [], []>} : vector<8x32xf32>, vector<32x256xf32>, vector<8x256xf32> -> vector<8x256xf32>
    %174 = vector.extract_strided_slice %161 {offsets = [8, 0], sizes = [8, 1], strides = [1, 1]} : vector<24x1xf32> to vector<8x1xf32>
    %175 = vector.broadcast %174 : vector<8x1xf32> to vector<8x256xf32>
    %176 = arith.addf %173, %175 : vector<8x256xf32>
    %177 = vector.extract_strided_slice %158 {offsets = [16, 0], sizes = [8, 32], strides = [1, 1]} : vector<24x32xf32> to vector<8x32xf32>
    %cst_74 = arith.constant dense<0.000000e+00> : vector<8x256xf32>
    %178 = tpu.matmul %177, %41, %cst_74 {dimension_numbers = #tpu.dot_dimension_numbers<[1], [0], [0], [1], [0, 0, 1, 1], [], []>} : vector<8x32xf32>, vector<32x256xf32>, vector<8x256xf32> -> vector<8x256xf32>
    %179 = vector.extract_strided_slice %161 {offsets = [16, 0], sizes = [8, 1], strides = [1, 1]} : vector<24x1xf32> to vector<8x1xf32>
    %180 = vector.broadcast %179 : vector<8x1xf32> to vector<8x256xf32>
    %181 = arith.addf %178, %180 : vector<8x256xf32>
    %182 = vector.extract_strided_slice %171 {offsets = [0, 0], sizes = [8, 128], strides = [1, 1]} : vector<8x256xf32> to vector<8x128xf32>
    %cst_75 = arith.constant dense<0.000000e+00> : vector<128x256xf32>
    %183 = tpu.matmul %182, %176, %cst_75 {dimension_numbers = #tpu.dot_dimension_numbers<[0], [0], [1], [1], [0, 1, 1, 1], [], []>} : vector<8x128xf32>, vector<8x256xf32>, vector<128x256xf32> -> vector<128x256xf32>
    %cst_76 = arith.constant dense<0xFF800000> : vector<128xf32>
    %184 = vector.multi_reduction <maximumf>, %183, %cst_76 [1] : vector<128x256xf32> to vector<128xf32>
    %185 = vector.shape_cast %184 : vector<128xf32> to vector<128x1xf32>
    %186 = vector.broadcast %185 : vector<128x1xf32> to vector<128x256xf32>
    %187 = arith.subf %183, %186 : vector<128x256xf32>
    %188 = math.exp %187 : vector<128x256xf32>
    %cst_77 = arith.constant dense<0.000000e+00> : vector<128xf32>
    %189 = vector.multi_reduction <add>, %188, %cst_77 [1] : vector<128x256xf32> to vector<128xf32>
    %190 = vector.shape_cast %189 : vector<128xf32> to vector<128x1xf32>
    %191 = tpu.reciprocal %190 {approx = true} : vector<128x1xf32> -> vector<128x1xf32>
    %192 = vector.broadcast %191 : vector<128x1xf32> to vector<128x256xf32>
    %193 = arith.mulf %188, %192 : vector<128x256xf32>
    %cst_78 = arith.constant dense<0.000000e+00> : vector<8x128xf32>
    %194 = tpu.matmul %181, %193, %cst_78 {dimension_numbers = #tpu.dot_dimension_numbers<[1], [1], [0], [0], [0, 0, 1, 0], [], []>} : vector<8x256xf32>, vector<128x256xf32>, vector<8x128xf32> -> vector<8x128xf32>
    %cst_79 = arith.constant dense<0.000000e+00> : vector<32x128xf32>
    %195 = tpu.matmul %164, %194, %cst_79 {dimension_numbers = #tpu.dot_dimension_numbers<[1], [0], [0], [1], [0, 0, 1, 1], [], []>} : vector<32x8xf32>, vector<8x128xf32>, vector<32x128xf32> -> vector<32x128xf32>
    %196 = vector.extract_strided_slice %171 {offsets = [0, 128], sizes = [8, 128], strides = [1, 1]} : vector<8x256xf32> to vector<8x128xf32>
    %cst_80 = arith.constant dense<0.000000e+00> : vector<128x256xf32>
    %197 = tpu.matmul %196, %176, %cst_80 {dimension_numbers = #tpu.dot_dimension_numbers<[0], [0], [1], [1], [0, 1, 1, 1], [], []>} : vector<8x128xf32>, vector<8x256xf32>, vector<128x256xf32> -> vector<128x256xf32>
    %cst_81 = arith.constant dense<0xFF800000> : vector<128xf32>
    %198 = vector.multi_reduction <maximumf>, %197, %cst_81 [1] : vector<128x256xf32> to vector<128xf32>
    %199 = vector.shape_cast %198 : vector<128xf32> to vector<128x1xf32>
    %200 = vector.broadcast %199 : vector<128x1xf32> to vector<128x256xf32>
    %201 = arith.subf %197, %200 : vector<128x256xf32>
    %202 = math.exp %201 : vector<128x256xf32>
    %cst_82 = arith.constant dense<0.000000e+00> : vector<128xf32>
    %203 = vector.multi_reduction <add>, %202, %cst_82 [1] : vector<128x256xf32> to vector<128xf32>
    %204 = vector.shape_cast %203 : vector<128xf32> to vector<128x1xf32>
    %205 = tpu.reciprocal %204 {approx = true} : vector<128x1xf32> -> vector<128x1xf32>
    %206 = vector.broadcast %205 : vector<128x1xf32> to vector<128x256xf32>
    %207 = arith.mulf %202, %206 : vector<128x256xf32>
    %cst_83 = arith.constant dense<0.000000e+00> : vector<8x128xf32>
    %208 = tpu.matmul %181, %207, %cst_83 {dimension_numbers = #tpu.dot_dimension_numbers<[1], [1], [0], [0], [0, 0, 1, 0], [], []>} : vector<8x256xf32>, vector<128x256xf32>, vector<8x128xf32> -> vector<8x128xf32>
    %cst_84 = arith.constant dense<0.000000e+00> : vector<32x128xf32>
    %209 = tpu.matmul %164, %208, %cst_84 {dimension_numbers = #tpu.dot_dimension_numbers<[1], [0], [0], [1], [0, 0, 1, 1], [], []>} : vector<32x8xf32>, vector<8x128xf32>, vector<32x128xf32> -> vector<32x128xf32>
    %210 = tpu.concatenate %195, %209 in 1 : vector<32x128xf32>, vector<32x128xf32> -> vector<32x256xf32>
    %211 = arith.addf %155, %210 : vector<32x256xf32>
    %c3_i32 = arith.constant 3 : i32
    %212 = arith.index_cast %c3_i32 : i32 to index
    %c0_85 = arith.constant 0 : index
    %c0_86 = arith.constant 0 : index
    %213 = vector.load %arg2[%212, %c0_85, %c0_86] : memref<4x24x32xf32, #tpu.memory_space<vmem>>, vector<1x24x32xf32>
    %214 = vector.shape_cast %213 : vector<1x24x32xf32> to vector<24x32xf32>
    %215 = arith.index_cast %c3_i32 : i32 to index
    %c0_87 = arith.constant 0 : index
    %c0_88 = arith.constant 0 : index
    %216 = vector.load %arg3[%215, %c0_87, %c0_88] : memref<4x24x1xf32, #tpu.memory_space<vmem>>, vector<1x24x1xf32>
    %217 = vector.shape_cast %216 : vector<1x24x1xf32> to vector<24x1xf32>
    %218 = arith.index_cast %c3_i32 : i32 to index
    %c0_89 = arith.constant 0 : index
    %c0_90 = arith.constant 0 : index
    %219 = vector.load %arg4[%218, %c0_89, %c0_90] : memref<4x32x8xf32, #tpu.memory_space<vmem>>, vector<1x32x8xf32>
    %220 = vector.shape_cast %219 : vector<1x32x8xf32> to vector<32x8xf32>
    %221 = vector.extract_strided_slice %214 {offsets = [0, 0], sizes = [8, 32], strides = [1, 1]} : vector<24x32xf32> to vector<8x32xf32>
    %cst_91 = arith.constant dense<0.000000e+00> : vector<8x256xf32>
    %222 = tpu.matmul %221, %41, %cst_91 {dimension_numbers = #tpu.dot_dimension_numbers<[1], [0], [0], [1], [0, 0, 1, 1], [], []>} : vector<8x32xf32>, vector<32x256xf32>, vector<8x256xf32> -> vector<8x256xf32>
    %223 = vector.extract_strided_slice %217 {offsets = [0, 0], sizes = [8, 1], strides = [1, 1]} : vector<24x1xf32> to vector<8x1xf32>
    %224 = vector.broadcast %223 : vector<8x1xf32> to vector<8x256xf32>
    %225 = arith.addf %222, %224 : vector<8x256xf32>
    %cst_92 = arith.constant 0.353553385 : f32
    %226 = vector.broadcast %cst_92 : f32 to vector<8x256xf32>
    %227 = arith.mulf %225, %226 : vector<8x256xf32>
    %228 = vector.extract_strided_slice %214 {offsets = [8, 0], sizes = [8, 32], strides = [1, 1]} : vector<24x32xf32> to vector<8x32xf32>
    %cst_93 = arith.constant dense<0.000000e+00> : vector<8x256xf32>
    %229 = tpu.matmul %228, %41, %cst_93 {dimension_numbers = #tpu.dot_dimension_numbers<[1], [0], [0], [1], [0, 0, 1, 1], [], []>} : vector<8x32xf32>, vector<32x256xf32>, vector<8x256xf32> -> vector<8x256xf32>
    %230 = vector.extract_strided_slice %217 {offsets = [8, 0], sizes = [8, 1], strides = [1, 1]} : vector<24x1xf32> to vector<8x1xf32>
    %231 = vector.broadcast %230 : vector<8x1xf32> to vector<8x256xf32>
    %232 = arith.addf %229, %231 : vector<8x256xf32>
    %233 = vector.extract_strided_slice %214 {offsets = [16, 0], sizes = [8, 32], strides = [1, 1]} : vector<24x32xf32> to vector<8x32xf32>
    %cst_94 = arith.constant dense<0.000000e+00> : vector<8x256xf32>
    %234 = tpu.matmul %233, %41, %cst_94 {dimension_numbers = #tpu.dot_dimension_numbers<[1], [0], [0], [1], [0, 0, 1, 1], [], []>} : vector<8x32xf32>, vector<32x256xf32>, vector<8x256xf32> -> vector<8x256xf32>
    %235 = vector.extract_strided_slice %217 {offsets = [16, 0], sizes = [8, 1], strides = [1, 1]} : vector<24x1xf32> to vector<8x1xf32>
    %236 = vector.broadcast %235 : vector<8x1xf32> to vector<8x256xf32>
    %237 = arith.addf %234, %236 : vector<8x256xf32>
    %238 = vector.extract_strided_slice %227 {offsets = [0, 0], sizes = [8, 128], strides = [1, 1]} : vector<8x256xf32> to vector<8x128xf32>
    %cst_95 = arith.constant dense<0.000000e+00> : vector<128x256xf32>
    %239 = tpu.matmul %238, %232, %cst_95 {dimension_numbers = #tpu.dot_dimension_numbers<[0], [0], [1], [1], [0, 1, 1, 1], [], []>} : vector<8x128xf32>, vector<8x256xf32>, vector<128x256xf32> -> vector<128x256xf32>
    %cst_96 = arith.constant dense<0xFF800000> : vector<128xf32>
    %240 = vector.multi_reduction <maximumf>, %239, %cst_96 [1] : vector<128x256xf32> to vector<128xf32>
    %241 = vector.shape_cast %240 : vector<128xf32> to vector<128x1xf32>
    %242 = vector.broadcast %241 : vector<128x1xf32> to vector<128x256xf32>
    %243 = arith.subf %239, %242 : vector<128x256xf32>
    %244 = math.exp %243 : vector<128x256xf32>
    %cst_97 = arith.constant dense<0.000000e+00> : vector<128xf32>
    %245 = vector.multi_reduction <add>, %244, %cst_97 [1] : vector<128x256xf32> to vector<128xf32>
    %246 = vector.shape_cast %245 : vector<128xf32> to vector<128x1xf32>
    %247 = tpu.reciprocal %246 {approx = true} : vector<128x1xf32> -> vector<128x1xf32>
    %248 = vector.broadcast %247 : vector<128x1xf32> to vector<128x256xf32>
    %249 = arith.mulf %244, %248 : vector<128x256xf32>
    %cst_98 = arith.constant dense<0.000000e+00> : vector<8x128xf32>
    %250 = tpu.matmul %237, %249, %cst_98 {dimension_numbers = #tpu.dot_dimension_numbers<[1], [1], [0], [0], [0, 0, 1, 0], [], []>} : vector<8x256xf32>, vector<128x256xf32>, vector<8x128xf32> -> vector<8x128xf32>
    %cst_99 = arith.constant dense<0.000000e+00> : vector<32x128xf32>
    %251 = tpu.matmul %220, %250, %cst_99 {dimension_numbers = #tpu.dot_dimension_numbers<[1], [0], [0], [1], [0, 0, 1, 1], [], []>} : vector<32x8xf32>, vector<8x128xf32>, vector<32x128xf32> -> vector<32x128xf32>
    %252 = vector.extract_strided_slice %227 {offsets = [0, 128], sizes = [8, 128], strides = [1, 1]} : vector<8x256xf32> to vector<8x128xf32>
    %cst_100 = arith.constant dense<0.000000e+00> : vector<128x256xf32>
    %253 = tpu.matmul %252, %232, %cst_100 {dimension_numbers = #tpu.dot_dimension_numbers<[0], [0], [1], [1], [0, 1, 1, 1], [], []>} : vector<8x128xf32>, vector<8x256xf32>, vector<128x256xf32> -> vector<128x256xf32>
    %cst_101 = arith.constant dense<0xFF800000> : vector<128xf32>
    %254 = vector.multi_reduction <maximumf>, %253, %cst_101 [1] : vector<128x256xf32> to vector<128xf32>
    %255 = vector.shape_cast %254 : vector<128xf32> to vector<128x1xf32>
    %256 = vector.broadcast %255 : vector<128x1xf32> to vector<128x256xf32>
    %257 = arith.subf %253, %256 : vector<128x256xf32>
    %258 = math.exp %257 : vector<128x256xf32>
    %cst_102 = arith.constant dense<0.000000e+00> : vector<128xf32>
    %259 = vector.multi_reduction <add>, %258, %cst_102 [1] : vector<128x256xf32> to vector<128xf32>
    %260 = vector.shape_cast %259 : vector<128xf32> to vector<128x1xf32>
    %261 = tpu.reciprocal %260 {approx = true} : vector<128x1xf32> -> vector<128x1xf32>
    %262 = vector.broadcast %261 : vector<128x1xf32> to vector<128x256xf32>
    %263 = arith.mulf %258, %262 : vector<128x256xf32>
    %cst_103 = arith.constant dense<0.000000e+00> : vector<8x128xf32>
    %264 = tpu.matmul %237, %263, %cst_103 {dimension_numbers = #tpu.dot_dimension_numbers<[1], [1], [0], [0], [0, 0, 1, 0], [], []>} : vector<8x256xf32>, vector<128x256xf32>, vector<8x128xf32> -> vector<8x128xf32>
    %cst_104 = arith.constant dense<0.000000e+00> : vector<32x128xf32>
    %265 = tpu.matmul %220, %264, %cst_104 {dimension_numbers = #tpu.dot_dimension_numbers<[1], [0], [0], [1], [0, 0, 1, 1], [], []>} : vector<32x8xf32>, vector<8x128xf32>, vector<32x128xf32> -> vector<32x128xf32>
    %266 = tpu.concatenate %251, %265 in 1 : vector<32x128xf32>, vector<32x128xf32> -> vector<32x256xf32>
    %267 = arith.addf %211, %266 : vector<32x256xf32>
    %c4_i32 = arith.constant 4 : i32
    %268 = arith.addf %267, %1 : vector<32x256xf32>
    %cst_105 = arith.constant dense<0.000000e+00> : vector<256xf32>
    %269 = vector.multi_reduction <add>, %268, %cst_105 [0] : vector<32x256xf32> to vector<256xf32>
    %270 = vector.shape_cast %269 : vector<256xf32> to vector<1x256xf32>
    %cst_106 = arith.constant 3.200000e+01 : f32
    %271 = vector.broadcast %cst_106 : f32 to vector<1x256xf32>
    %272 = arith.divf %270, %271 : vector<1x256xf32>
    %273 = vector.broadcast %272 : vector<1x256xf32> to vector<32x256xf32>
    %274 = arith.subf %268, %273 : vector<32x256xf32>
    %275 = arith.mulf %274, %274 : vector<32x256xf32>
    %cst_107 = arith.constant dense<0.000000e+00> : vector<256xf32>
    %276 = vector.multi_reduction <add>, %275, %cst_107 [0] : vector<32x256xf32> to vector<256xf32>
    %277 = vector.shape_cast %276 : vector<256xf32> to vector<1x256xf32>
    %cst_108 = arith.constant 3.200000e+01 : f32
    %278 = vector.broadcast %cst_108 : f32 to vector<1x256xf32>
    %279 = arith.divf %277, %278 : vector<1x256xf32>
    %280 = vector.broadcast %272 : vector<1x256xf32> to vector<32x256xf32>
    %281 = arith.subf %268, %280 : vector<32x256xf32>
    %cst_109 = arith.constant 9.99999974E-6 : f32
    %282 = vector.broadcast %cst_109 : f32 to vector<1x256xf32>
    %283 = arith.addf %279, %282 : vector<1x256xf32>
    %284 = math.rsqrt %283 : vector<1x256xf32>
    %285 = vector.broadcast %284 : vector<1x256xf32> to vector<32x256xf32>
    %286 = arith.mulf %281, %285 : vector<32x256xf32>
    %287 = vector.broadcast %9 : vector<32x1xf32> to vector<32x256xf32>
    %288 = arith.mulf %286, %287 : vector<32x256xf32>
    %289 = vector.broadcast %11 : vector<32x1xf32> to vector<32x256xf32>
    %290 = arith.addf %288, %289 : vector<32x256xf32>
    %c0_110 = arith.constant 0 : index
    %c0_111 = arith.constant 0 : index
    %291 = vector.load %arg5[%c0_110, %c0_111] : memref<32x32xf32, #tpu.memory_space<vmem>>, vector<32x32xf32>
    %cst_112 = arith.constant dense<0.000000e+00> : vector<32x256xf32>
    %292 = tpu.matmul %291, %290, %cst_112 {dimension_numbers = #tpu.dot_dimension_numbers<[1], [0], [0], [1], [0, 0, 1, 1], [], []>} : vector<32x32xf32>, vector<32x256xf32>, vector<32x256xf32> -> vector<32x256xf32>
    %293 = vector.broadcast %13 : vector<32x1xf32> to vector<32x256xf32>
    %294 = arith.addf %292, %293 : vector<32x256xf32>
    %cst_113 = arith.constant dense<0.000000e+00> : vector<256xf32>
    %295 = vector.multi_reduction <add>, %294, %cst_113 [0] : vector<32x256xf32> to vector<256xf32>
    %296 = vector.shape_cast %295 : vector<256xf32> to vector<1x256xf32>
    %cst_114 = arith.constant 3.200000e+01 : f32
    %297 = vector.broadcast %cst_114 : f32 to vector<1x256xf32>
    %298 = arith.divf %296, %297 : vector<1x256xf32>
    %299 = vector.broadcast %298 : vector<1x256xf32> to vector<32x256xf32>
    %300 = arith.subf %294, %299 : vector<32x256xf32>
    %301 = arith.mulf %300, %300 : vector<32x256xf32>
    %cst_115 = arith.constant dense<0.000000e+00> : vector<256xf32>
    %302 = vector.multi_reduction <add>, %301, %cst_115 [0] : vector<32x256xf32> to vector<256xf32>
    %303 = vector.shape_cast %302 : vector<256xf32> to vector<1x256xf32>
    %cst_116 = arith.constant 3.200000e+01 : f32
    %304 = vector.broadcast %cst_116 : f32 to vector<1x256xf32>
    %305 = arith.divf %303, %304 : vector<1x256xf32>
    %306 = vector.broadcast %298 : vector<1x256xf32> to vector<32x256xf32>
    %307 = arith.subf %294, %306 : vector<32x256xf32>
    %cst_117 = arith.constant 9.99999974E-6 : f32
    %308 = vector.broadcast %cst_117 : f32 to vector<1x256xf32>
    %309 = arith.addf %305, %308 : vector<1x256xf32>
    %310 = math.rsqrt %309 : vector<1x256xf32>
    %311 = vector.broadcast %310 : vector<1x256xf32> to vector<32x256xf32>
    %312 = arith.mulf %307, %311 : vector<32x256xf32>
    %313 = vector.broadcast %15 : vector<32x1xf32> to vector<32x256xf32>
    %314 = arith.mulf %312, %313 : vector<32x256xf32>
    %315 = vector.broadcast %17 : vector<32x1xf32> to vector<32x256xf32>
    %316 = arith.addf %314, %315 : vector<32x256xf32>
    %c0_118 = arith.constant 0 : index
    %c0_119 = arith.constant 0 : index
    %317 = vector.load %arg6[%c0_118, %c0_119] : memref<32x32xf32, #tpu.memory_space<vmem>>, vector<32x32xf32>
    %cst_120 = arith.constant dense<0.000000e+00> : vector<32x256xf32>
    %318 = tpu.matmul %317, %316, %cst_120 {dimension_numbers = #tpu.dot_dimension_numbers<[1], [0], [0], [1], [0, 0, 1, 1], [], []>} : vector<32x32xf32>, vector<32x256xf32>, vector<32x256xf32> -> vector<32x256xf32>
    %319 = vector.broadcast %19 : vector<32x1xf32> to vector<32x256xf32>
    %320 = arith.addf %318, %319 : vector<32x256xf32>
    %321 = arith.addf %320, %268 : vector<32x256xf32>
    %c0_121 = arith.constant 0 : index
    %c0_122 = arith.constant 0 : index
    %c0_123 = arith.constant 0 : index
    %322 = vector.load %arg8[%c0_121, %c0_122, %c0_123] : memref<1x32x256xf32, #tpu.memory_space<vmem>>, vector<1x32x256xf32>
    %323 = vector.shape_cast %322 : vector<1x32x256xf32> to vector<32x256xf32>
    %324 = vector.shape_cast %321 : vector<32x256xf32> to vector<1x32x256xf32>
    tpu.vector_store %arg8[%c0_121, %c0_122, %c0_123], %324 {strides = array<i32>} : memref<1x32x256xf32, #tpu.memory_space<vmem>>, vector<1x32x256xf32>,
    return
  }
  func.func @transform_0(%arg0: i32) -> (i32, i32, i32) {
    %c0_i32 = arith.constant 0 : i32
    %c0_i32_0 = arith.constant 0 : i32
    %c0_i32_1 = arith.constant 0 : i32
    return %arg0, %c0_i32, %c0_i32_0 : i32, i32, i32
  }
  func.func @transform_1(%arg0: i32) -> (i32, i32, i32) {
    %c0_i32 = arith.constant 0 : i32
    %c0_i32_0 = arith.constant 0 : i32
    %c0_i32_1 = arith.constant 0 : i32
    %c0_i32_2 = arith.constant 0 : i32
    return %c0_i32, %c0_i32_0, %c0_i32_1 : i32, i32, i32
  }
  func.func @transform_2(%arg0: i32) -> (i32, i32, i32) {
    %c0_i32 = arith.constant 0 : i32
    %c0_i32_0 = arith.constant 0 : i32
    %c0_i32_1 = arith.constant 0 : i32
    %c0_i32_2 = arith.constant 0 : i32
    return %c0_i32, %c0_i32_0, %c0_i32_1 : i32, i32, i32
  }
  func.func @transform_3(%arg0: i32) -> (i32, i32, i32) {
    %c0_i32 = arith.constant 0 : i32
    %c0_i32_0 = arith.constant 0 : i32
    %c0_i32_1 = arith.constant 0 : i32
    %c0_i32_2 = arith.constant 0 : i32
    return %c0_i32, %c0_i32_0, %c0_i32_1 : i32, i32, i32
  }
  func.func @transform_4(%arg0: i32) -> (i32, i32) {
    %c0_i32 = arith.constant 0 : i32
    %c0_i32_0 = arith.constant 0 : i32
    %c0_i32_1 = arith.constant 0 : i32
    return %c0_i32, %c0_i32_0 : i32, i32
  }
  func.func @transform_5(%arg0: i32) -> (i32, i32) {
    %c0_i32 = arith.constant 0 : i32
    %c0_i32_0 = arith.constant 0 : i32
    %c0_i32_1 = arith.constant 0 : i32
    return %c0_i32, %c0_i32_0 : i32, i32
  }
  func.func @transform_6(%arg0: i32) -> (i32, i32, i32) {
    %c0_i32 = arith.constant 0 : i32
    %c0_i32_0 = arith.constant 0 : i32
    %c0_i32_1 = arith.constant 0 : i32
    %c0_i32_2 = arith.constant 0 : i32
    return %c0_i32, %c0_i32_0, %c0_i32_1 : i32, i32, i32
  }
  func.func @transform_7(%arg0: i32) -> (i32, i32, i32) {
    %c0_i32 = arith.constant 0 : i32
    %c0_i32_0 = arith.constant 0 : i32
    %c0_i32_1 = arith.constant 0 : i32
    return %arg0, %c0_i32, %c0_i32_0 : i32, i32, i32
  }
}

</mosaic_0001>

<llo_original>
// kernel: transformer_encoder_sa.1
$region0: #{transformer_encoder_sa.1}
  #allocation0 [shape = 'u32[]', space=smem, size = 0x4, offset = 0x4, fixed_abs, tag = 'smem constant byte address 0x4 - core index']
  #allocation1 [shape = 'u32[72,128]{1,0:T(1,128)}', space=vmem, size = 0x9000, scoped, tag = 'internal scratch']
  %s0 = inlined_call_operand.vmem [shape: f32[2,32,256], index: 0, kind: input, shape index: {}]
  %s1 = inlined_call_operand.vmem [shape: f32[4,24,32], index: 1, kind: input, shape index: {}]
  %s2 = inlined_call_operand.vmem [shape: f32[4,24,1], index: 2, kind: input, shape index: {}]
  %s3 = inlined_call_operand.vmem [shape: f32[4,32,8], index: 3, kind: input, shape index: {}]
  %s4 = inlined_call_operand.vmem [shape: f32[32,32], index: 4, kind: input, shape index: {}]
  %s5 = inlined_call_operand.vmem [shape: f32[32,32], index: 5, kind: input, shape index: {}]
  %s6 = inlined_call_operand.vmem [shape: f32[9,32,1], index: 6, kind: input, shape index: {}]
  %s7 = inlined_call_operand.vmem [shape: f32[2,32,256], index: 7, kind: output, shape index: {}]
  %s8 = sld [smem:[#allocation0]]
  $region61: #{transformer_encoder_sa.1} parent=0
    _
  %s10 = ssub.s32 1, %s8
  %s11 = scalar_select 0, %s10, %s8
  loop: start=0, step=1, limit=4
  $region2: #{transformer_encoder_sa.1} parent=0 // loop_pre_header
    _
  $region3: #{transformer_encoder_sa.1} parent=0 // loop_header
    %s13 = sphi 0, %s17
    %p14 = scmp.ge.s32.totalorder %s13, 4
    %s23 = sphi 0, %s25
    %s26 = sphi 0, %s23
    %s27 = sphi 0, %s26
    %s43 = sphi 0, %s27
    %s47 = sphi 0, %s47
    %s49 = sphi 0, %s47
    %s50 = sphi 0, %s49
    %s64 = sphi 0, %s50
    %s68 = sphi 0, %s68
    %s70 = sphi 0, %s68
    %s71 = sphi 0, %s70
    %s85 = sphi 0, %s71
    %s89 = sphi 0, %s89
    %s91 = sphi 0, %s89
    %s92 = sphi 0, %s91
    %s106 = sphi 0, %s92
    %s110 = sphi 0, %s110
    %s112 = sphi 0, %s110
    %s113 = sphi 0, %s112
    %s127 = sphi 0, %s113
    %s131 = sphi 0, %s131
    %s133 = sphi 0, %s131
    %s134 = sphi 0, %s133
    %s148 = sphi 0, %s134
    %s152 = sphi 0, %s152
    %s154 = sphi 0, %s152
    %s155 = sphi 0, %s154
    %s169 = sphi 0, %s155
    %s175 = sphi 0, %s177
    %s178 = sphi 0, %s175
    %s179 = sphi 0, %s178
    %s195 = sphi 0, %s179
  $region4: #{transformer_encoder_sa.1} parent=0 // loop_header_branch
    %16 = sbr.rel (%p14) target = $region8
  $region5: #{transformer_encoder_sa.1} parent=0 // loop_body
    %s18 = ssub.s32 %s13, 1
    %s19 = ssub.s32 %s13, 2
    %s20 = sadd.s32 %s13, 1
    %s21 = ssub.s32 %s13, %s20
    %p22 = scmp.eq.s32.totalorder %s21, 0
    %s24 = sadd.s32 %s23, 1
    %s25 = scalar_select %p22, %s23, %s24
    %p28 = pneg %p22
    %p29 = scmp.eq.s32.totalorder %s13, 1
    %p30 = por %p28, %p29
    %p31 = scmp.ne.s32.totalorder %s23, %s26
    %p32 = scmp.eq.s32.totalorder %s13, 0
    %p33 = por %p31, %p32
    %p34 = scmp.ne.s32.totalorder %s23, %s26
    %p35 = scmp.eq.s32.totalorder %s18, 1
    %p36 = por %p34, %p35
    %p37 = scmp.ne.s32.totalorder %s26, %s27
    %p38 = scmp.eq.s32.totalorder %s18, 0
    %p39 = por %p37, %p38
    %p40 = scmp.ne.s32.totalorder %s26, %s27
    %p41 = scmp.eq.s32.totalorder %s19, 1
    %p42 = por %p40, %p41
    %p44 = scmp.ne.s32.totalorder %s27, %s43
    %p45 = scmp.eq.s32.totalorder %s19, 0
    %p46 = por %p44, %p45
    %s48 = sadd.s32 %s47, 1
    %p51 = scmp.eq.s32.totalorder %s13, 1
    %p52 = scmp.ne.s32.totalorder %s47, %s49
    %p53 = scmp.eq.s32.totalorder %s13, 0
    %p54 = por %p52, %p53
    %p55 = scmp.ne.s32.totalorder %s47, %s49
    %p56 = scmp.eq.s32.totalorder %s18, 1
    %p57 = por %p55, %p56
    %p58 = scmp.ne.s32.totalorder %s49, %s50
    %p59 = scmp.eq.s32.totalorder %s18, 0
    %p60 = por %p58, %p59
    %p61 = scmp.ne.s32.totalorder %s49, %s50
    %p62 = scmp.eq.s32.totalorder %s19, 1
    %p63 = por %p61, %p62
    %p65 = scmp.ne.s32.totalorder %s50, %s64
    %p66 = scmp.eq.s32.totalorder %s19, 0
    %p67 = por %p65, %p66
    %s69 = sadd.s32 %s68, 1
    %p72 = scmp.eq.s32.totalorder %s13, 1
    %p73 = scmp.ne.s32.totalorder %s68, %s70
    %p74 = scmp.eq.s32.totalorder %s13, 0
    %p75 = por %p73, %p74
    %p76 = scmp.ne.s32.totalorder %s68, %s70
    %p77 = scmp.eq.s32.totalorder %s18, 1
    %p78 = por %p76, %p77
    %p79 = scmp.ne.s32.totalorder %s70, %s71
    %p80 = scmp.eq.s32.totalorder %s18, 0
    %p81 = por %p79, %p80
    %p82 = scmp.ne.s32.totalorder %s70, %s71
    %p83 = scmp.eq.s32.totalorder %s19, 1
    %p84 = por %p82, %p83
    %p86 = scmp.ne.s32.totalorder %s71, %s85
    %p87 = scmp.eq.s32.totalorder %s19, 0
    %p88 = por %p86, %p87
    %s90 = sadd.s32 %s89, 1
    %p93 = scmp.eq.s32.totalorder %s13, 1
    %p94 = scmp.ne.s32.totalorder %s89, %s91
    %p95 = scmp.eq.s32.totalorder %s13, 0
    %p96 = por %p94, %p95
    %p97 = scmp.ne.s32.totalorder %s89, %s91
    %p98 = scmp.eq.s32.totalorder %s18, 1
    %p99 = por %p97, %p98
    %p100 = scmp.ne.s32.totalorder %s91, %s92
    %p101 = scmp.eq.s32.totalorder %s18, 0
    %p102 = por %p100, %p101
    %p103 = scmp.ne.s32.totalorder %s91, %s92
    %p104 = scmp.eq.s32.totalorder %s19, 1
    %p105 = por %p103, %p104
    %p107 = scmp.ne.s32.totalorder %s92, %s106
    %p108 = scmp.eq.s32.totalorder %s19, 0
    %p109 = por %p107, %p108
    %s111 = sadd.s32 %s110, 1
    %p114 = scmp.eq.s32.totalorder %s13, 1
    %p115 = scmp.ne.s32.totalorder %s110, %s112
    %p116 = scmp.eq.s32.totalorder %s13, 0
    %p117 = por %p115, %p116
    %p118 = scmp.ne.s32.totalorder %s110, %s112
    %p119 = scmp.eq.s32.totalorder %s18, 1
    %p120 = por %p118, %p119
    %p121 = scmp.ne.s32.totalorder %s112, %s113
    %p122 = scmp.eq.s32.totalorder %s18, 0
    %p123 = por %p121, %p122
    %p124 = scmp.ne.s32.totalorder %s112, %s113
    %p125 = scmp.eq.s32.totalorder %s19, 1
    %p126 = por %p124, %p125
    %p128 = scmp.ne.s32.totalorder %s113, %s127
    %p129 = scmp.eq.s32.totalorder %s19, 0
    %p130 = por %p128, %p129
    %s132 = sadd.s32 %s131, 1
    %p135 = scmp.eq.s32.totalorder %s13, 1
    %p136 = scmp.ne.s32.totalorder %s131, %s133
    %p137 = scmp.eq.s32.totalorder %s13, 0
    %p138 = por %p136, %p137
    %p139 = scmp.ne.s32.totalorder %s131, %s133
    %p140 = scmp.eq.s32.totalorder %s18, 1
    %p141 = por %p139, %p140
    %p142 = scmp.ne.s32.totalorder %s133, %s134
    %p143 = scmp.eq.s32.totalorder %s18, 0
    %p144 = por %p142, %p143
    %p145 = scmp.ne.s32.totalorder %s133, %s134
    %p146 = scmp.eq.s32.totalorder %s19, 1
    %p147 = por %p145, %p146
    %p149 = scmp.ne.s32.totalorder %s134, %s148
    %p150 = scmp.eq.s32.totalorder %s19, 0
    %p151 = por %p149, %p150
    %s153 = sadd.s32 %s152, 1
    %p156 = scmp.eq.s32.totalorder %s13, 1
    %p157 = scmp.ne.s32.totalorder %s152, %s154
    %p158 = scmp.eq.s32.totalorder %s13, 0
    %p159 = por %p157, %p158
    %p160 = scmp.ne.s32.totalorder %s152, %s154
    %p161 = scmp.eq.s32.totalorder %s18, 1
    %p162 = por %p160, %p161
    %p163 = scmp.ne.s32.totalorder %s154, %s155
    %p164 = scmp.eq.s32.totalorder %s18, 0
    %p165 = por %p163, %p164
    %p166 = scmp.ne.s32.totalorder %s154, %s155
    %p167 = scmp.eq.s32.totalorder %s19, 1
    %p168 = por %p166, %p167
    %p170 = scmp.ne.s32.totalorder %s155, %s169
    %p171 = scmp.eq.s32.totalorder %s19, 0
    %p172 = por %p170, %p171
    %s173 = ssub.s32 %s13, %s20
    %p174 = scmp.eq.s32.totalorder %s173, 0
    %s176 = sadd.s32 %s175, 1
    %s177 = scalar_select %p174, %s175, %s176
    %p180 = pneg %p174
    %p181 = scmp.eq.s32.totalorder %s13, 1
    %p182 = por %p180, %p181
    %p183 = scmp.ne.s32.totalorder %s175, %s178
    %p184 = scmp.eq.s32.totalorder %s13, 0
    %p185 = por %p183, %p184
    %p186 = scmp.ne.s32.totalorder %s175, %s178
    %p187 = scmp.eq.s32.totalorder %s18, 1
    %p188 = por %p186, %p187
    %p189 = scmp.ne.s32.totalorder %s178, %s179
    %p190 = scmp.eq.s32.totalorder %s18, 0
    %p191 = por %p189, %p190
    %p192 = scmp.ne.s32.totalorder %s178, %s179
    %p193 = scmp.eq.s32.totalorder %s19, 1
    %p194 = por %p192, %p193
    %p196 = scmp.ne.s32.totalorder %s179, %s195
    %p197 = scmp.eq.s32.totalorder %s19, 0
    %p198 = por %p196, %p197
    %p199 = scmp.le.s32.totalorder 1, %s13
    %p200 = scmp.lt.s32.totalorder %s13, 3
    %p201 = pnand %p199, %p200
    %p202 = pneg %p201
    // Predicated region
    $region9: #{transformer_encoder_sa.1} parent=5 // pred_check
      _
    $region10: #{transformer_encoder_sa.1} parent=5 // pred_check_branch
      %204 = sbr.rel (%p201) target = $region12
    $region11: #{transformer_encoder_sa.1} parent=5 // pred_region
      %s205 = ssub.s32 %s13, 1
      // Predicated region
      $region13: #{transformer_encoder_sa.1} parent=11 // pred_check
        %p206 = pneg %p60
      $region14: #{transformer_encoder_sa.1} parent=11 // pred_check_branch
        %208 = sbr.rel (%p206) target = $region16
      $region15: #{transformer_encoder_sa.1} parent=11 // pred_region
        _
      $region16: #{transformer_encoder_sa.1} parent=11 // pred_fallthru
        _
      // Predicated region
      $region17: #{transformer_encoder_sa.1} parent=11 // pred_check
        %p209 = pneg %p81
      $region18: #{transformer_encoder_sa.1} parent=11 // pred_check_branch
        %211 = sbr.rel (%p209) target = $region20
      $region19: #{transformer_encoder_sa.1} parent=11 // pred_region
        _
      $region20: #{transformer_encoder_sa.1} parent=11 // pred_fallthru
        _
      // Predicated region
      $region21: #{transformer_encoder_sa.1} parent=11 // pred_check
        %p212 = pneg %p102
      $region22: #{transformer_encoder_sa.1} parent=11 // pred_check_branch
        %214 = sbr.rel (%p212) target = $region24
      $region23: #{transformer_encoder_sa.1} parent=11 // pred_region
        _
      $region24: #{transformer_encoder_sa.1} parent=11 // pred_fallthru
        _
      // Predicated region
      $region25: #{transformer_encoder_sa.1} parent=11 // pred_check
        %p215 = pneg %p123
      $region26: #{transformer_encoder_sa.1} parent=11 // pred_check_branch
        %217 = sbr.rel (%p215) target = $region28
      $region27: #{transformer_encoder_sa.1} parent=11 // pred_region
        _
      $region28: #{transformer_encoder_sa.1} parent=11 // pred_fallthru
        _
      // Predicated region
      $region29: #{transformer_encoder_sa.1} parent=11 // pred_check
        %p218 = pneg %p144
      $region30: #{transformer_encoder_sa.1} parent=11 // pred_check_branch
        %220 = sbr.rel (%p218) target = $region32
      $region31: #{transformer_encoder_sa.1} parent=11 // pred_region
        _
      $region32: #{transformer_encoder_sa.1} parent=11 // pred_fallthru
        _
      // Predicated region
      $region33: #{transformer_encoder_sa.1} parent=11 // pred_check
        %p221 = pneg %p165
      $region34: #{transformer_encoder_sa.1} parent=11 // pred_check_branch
        %223 = sbr.rel (%p221) target = $region36
      $region35: #{transformer_encoder_sa.1} parent=11 // pred_region
        _
      $region36: #{transformer_encoder_sa.1} parent=11 // pred_fallthru
        _
    $region12: #{transformer_encoder_sa.1} parent=5 // pred_fallthru
      _
    %p224 = scmp.lt.s32.totalorder %s13, 2
    // Predicated region
    $region37: #{transformer_encoder_sa.1} parent=5 // pred_check
      %p225 = pneg %p224
    $region38: #{transformer_encoder_sa.1} parent=5 // pred_check_branch
      %227 = sbr.rel (%p225) target = $region40
    $region39: #{transformer_encoder_sa.1} parent=5 // pred_region
      // Predicated region
      $region41: #{transformer_encoder_sa.1} parent=39 // pred_check
        %p228 = pneg %p33
      $region42: #{transformer_encoder_sa.1} parent=39 // pred_check_branch
        %230 = sbr.rel (%p228) target = $region44
      $region43: #{transformer_encoder_sa.1} parent=39 // pred_region
        %p231 = scmp.lt.s32.totalorder %s13, 1
        %s232 = scalar_select %p231, %s13, 1
        %s233 = smul.addr %s232, 8
        %s234 = smul.addr %s233, 8
        %s235 = scalar_lea.vmem %s0, %s234
      $region44: #{transformer_encoder_sa.1} parent=39 // pred_fallthru
        _
    $region40: #{transformer_encoder_sa.1} parent=5 // pred_fallthru
      _
    %p236 = scmp.le.s32.totalorder 1, %s13
    %p237 = scmp.lt.s32.totalorder %s13, 3
    %p238 = pnand %p236, %p237
    %p239 = pneg %p238
    // Predicated region
    $region45: #{transformer_encoder_sa.1} parent=5 // pred_check
      _
    $region46: #{transformer_encoder_sa.1} parent=5 // pred_check_branch
      %241 = sbr.rel (%p238) target = $region48
    $region47: #{transformer_encoder_sa.1} parent=5 // pred_region
      %s242 = ssub.s32 %s13, 1
      %p243 = scmp.lt.s32.totalorder %s18, 1
      %s244 = scalar_select %p243, %s18, 1
      %s245 = smul.addr %s244, 8
      %s246 = smul.addr %s245, 8
      %s247 = scalar_lea.vmem %s0, %s246
      %p248 = pneg %p39
      %p249 = pneg %p36
      %p250 = pneg %p60
      %p251 = pneg %p57
      %p252 = pneg %p81
      %p253 = pneg %p78
      %p254 = pneg %p102
      %p255 = pneg %p99
      %p256 = pneg %p123
      %p257 = pneg %p120
      %p258 = pneg %p144
      %p259 = pneg %p141
      %p260 = pneg %p165
      %p261 = pneg %p162
      %p262 = pneg %p191
      %p263 = pneg %p188
      %p264 = scmp.lt.s32.totalorder %s18, 1
      %s265 = scalar_select %p264, %s18, 1
      %s266 = smul.addr %s265, 8
      %s267 = smul.addr %s266, 8
      %s268 = scalar_lea.vmem %s7, %s267
      %p269 = scmp.lt.s32.totalorder %s18, 1
      %s270 = scalar_select %p269, %s18, 1
      %s271 = smul.addr %s270, 8
      %s272 = smul.addr %s271, 8
      %s273 = scalar_lea.vmem %s0, %s272
      %p274 = scmp.lt.s32.totalorder %s18, 1
      %s275 = scalar_select %p274, %s18, 1
      %s276 = smul.addr %s275, 8
      %s277 = smul.addr %s276, 8
      %s278 = scalar_lea.vmem %s7, %s277
      %v279 = vld [vmem:[%s273] sm:$0xff]
      %v280 = vld [vmem:[%s273 + $0x8] sm:$0xff]
      %v281 = vld [vmem:[%s273 + $0x10] sm:$0xff]
      %v282 = vld [vmem:[%s273 + $0x18] sm:$0xff]
      %v283 = vld [vmem:[%s273 + $0x20] sm:$0xff]
      %v284 = vld [vmem:[%s273 + $0x28] sm:$0xff]
      %v285 = vld [vmem:[%s273 + $0x30] sm:$0xff]
      %v286 = vld [vmem:[%s273 + $0x38] sm:$0xff]
      %v287 = vld [vmem:[%s6] sm:$0xff]
      %v288 = vld [vmem:[%s6 + $0x8] sm:$0xff]
      %v289 = vld [vmem:[%s6 + $0x10] sm:$0xff]
      %v290 = vld [vmem:[%s6 + $0x18] sm:$0xff]
      %s291 = scalar_lea.vmem %s6, 32
      %v292 = vld [vmem:[%s291] sm:$0xff]
      %v293 = vld [vmem:[%s291 + $0x8] sm:$0xff]
      %v294 = vld [vmem:[%s291 + $0x10] sm:$0xff]
      %v295 = vld [vmem:[%s291 + $0x18] sm:$0xff]
      %s296 = scalar_lea.vmem %s6, 64
      %v297 = vld [vmem:[%s296] sm:$0xff]
      %v298 = vld [vmem:[%s296 + $0x8] sm:$0xff]
      %v299 = vld [vmem:[%s296 + $0x10] sm:$0xff]
      %v300 = vld [vmem:[%s296 + $0x18] sm:$0xff]
      %s301 = scalar_lea.vmem %s6, 96
      %v302 = vld [vmem:[%s301] sm:$0xff]
      %v303 = vld [vmem:[%s301 + $0x8] sm:$0xff]
      %v304 = vld [vmem:[%s301 + $0x10] sm:$0xff]
      %v305 = vld [vmem:[%s301 + $0x18] sm:$0xff]
      %s306 = scalar_lea.vmem %s6, 128
      %v307 = vld [vmem:[%s306] sm:$0xff]
      %v308 = vld [vmem:[%s306 + $0x8] sm:$0xff]
      %v309 = vld [vmem:[%s306 + $0x10] sm:$0xff]
      %v310 = vld [vmem:[%s306 + $0x18] sm:$0xff]
      %s311 = scalar_lea.vmem %s6, 160
      %v312 = vld [vmem:[%s311] sm:$0xff]
      %v313 = vld [vmem:[%s311 + $0x8] sm:$0xff]
      %v314 = vld [vmem:[%s311 + $0x10] sm:$0xff]
      %v315 = vld [vmem:[%s311 + $0x18] sm:$0xff]
      %s316 = scalar_lea.vmem %s6, 192
      %v317 = vld [vmem:[%s316] sm:$0xff]
      %v318 = vld [vmem:[%s316 + $0x8] sm:$0xff]
      %v319 = vld [vmem:[%s316 + $0x10] sm:$0xff]
      %v320 = vld [vmem:[%s316 + $0x18] sm:$0xff]
      %s321 = scalar_lea.vmem %s6, 224
      %v322 = vld [vmem:[%s321] sm:$0xff]
      %v323 = vld [vmem:[%s321 + $0x8] sm:$0xff]
      %v324 = vld [vmem:[%s321 + $0x10] sm:$0xff]
      %v325 = vld [vmem:[%s321 + $0x18] sm:$0xff]
      %s326 = scalar_lea.vmem %s6, 256
      %v327 = vld [vmem:[%s326] sm:$0xff]
      %v328 = vld [vmem:[%s326 + $0x8] sm:$0xff]
      %v329 = vld [vmem:[%s326 + $0x10] sm:$0xff]
      %v330 = vld [vmem:[%s326 + $0x18] sm:$0xff]
      %v331 = vadd.f32 %v279, %v281
      %v332 = vadd.f32 %v331, %v283
      %v333 = vadd.f32 %v332, %v285
      %v334 = vrot.slane %v333, 4
      %v335 = vadd.f32 %v333, %v334
      %v336 = vrot.slane %v335, 2
      %v337 = vadd.f32 %v335, %v336
      %v338 = vrot.slane %v337, 1
      %v339 = vadd.f32 %v337, %v338
      %v340 = vadd.f32 %v280, %v282
      %v341 = vadd.f32 %v340, %v284
      %v342 = vadd.f32 %v341, %v286
      %v343 = vrot.slane %v342, 4
      %v344 = vadd.f32 %v342, %v343
      %v345 = vrot.slane %v344, 2
      %v346 = vadd.f32 %v344, %v345
      %v347 = vrot.slane %v346, 1
      %v348 = vadd.f32 %v346, %v347
      %v349 = vrcp.pop 32.0
      %v350 = vmul.f32 32.0, %v349
      %v351 = vsub.f32 1.0, %v350
      %v352 = vmul.f32 %v349, %v351
      %v353 = vadd.f32 %v349, %v352
      %vm354 = vweird.f32 %v349
      %v355 = vsel %vm354, %v349, %v353
      %v356 = vmul.f32 %v339, %v355
      %v357 = vmul.f32 %v348, %v355
      %v358 = vsub.f32 %v279, %v356
      %v359 = vsub.f32 %v280, %v357
      %v360 = vsub.f32 %v281, %v356
      %v361 = vsub.f32 %v282, %v357
      %v362 = vsub.f32 %v283, %v356
      %v363 = vsub.f32 %v284, %v357
      %v364 = vsub.f32 %v285, %v356
      %v365 = vsub.f32 %v286, %v357
      %v366 = vmul.f32 %v358, %v358
      %v367 = vmul.f32 %v359, %v359
      %v368 = vmul.f32 %v360, %v360
      %v369 = vmul.f32 %v361, %v361
      %v370 = vmul.f32 %v362, %v362
      %v371 = vmul.f32 %v363, %v363
      %v372 = vmul.f32 %v364, %v364
      %v373 = vmul.f32 %v365, %v365
      %v374 = vadd.f32 %v366, %v368
      %v375 = vadd.f32 %v374, %v370
      %v376 = vadd.f32 %v375, %v372
      %v377 = vrot.slane %v376, 4
      %v378 = vadd.f32 %v376, %v377
      %v379 = vrot.slane %v378, 2
      %v380 = vadd.f32 %v378, %v379
      %v381 = vrot.slane %v380, 1
      %v382 = vadd.f32 %v380, %v381
      %v383 = vadd.f32 %v367, %v369
      %v384 = vadd.f32 %v383, %v371
      %v385 = vadd.f32 %v384, %v373
      %v386 = vrot.slane %v385, 4
      %v387 = vadd.f32 %v385, %v386
      %v388 = vrot.slane %v387, 2
      %v389 = vadd.f32 %v387, %v388
      %v390 = vrot.slane %v389, 1
      %v391 = vadd.f32 %v389, %v390
      %v392 = vmul.f32 %v382, %v355
      %v393 = vmul.f32 %v391, %v355
      %v394 = vadd.f32 %v392, 1e-05
      %v395 = vadd.f32 %v393, 1e-05
      %v396 = vrsqrt.pop %v394
      %v397 = vmul.f32 %v396, %v394
      %v398 = vmul.f32 %v397, %v396
      %v399 = vmul.f32 0.5, %v398
      %v400 = vsub.f32 1.5, %v399
      %v401 = vmul.f32 %v396, %v400
      %vm402 = vweird.f32 %v394
      %vm403 = vweird.f32 %v396
      %vm404 = vmor %vm402, %vm403
      %v405 = vsel %vm404, %v396, %v401
      %v406 = vrsqrt.pop %v395
      %v407 = vmul.f32 %v406, %v395
      %v408 = vmul.f32 %v407, %v406
      %v409 = vmul.f32 0.5, %v408
      %v410 = vsub.f32 1.5, %v409
      %v411 = vmul.f32 %v406, %v410
      %vm412 = vweird.f32 %v395
      %vm413 = vweird.f32 %v406
      %vm414 = vmor %vm412, %vm413
      %v415 = vsel %vm414, %v406, %v411
      %v416 = vmul.f32 %v358, %v405
      %v417 = vmul.f32 %v359, %v415
      %v418 = vmul.f32 %v360, %v405
      %v419 = vmul.f32 %v361, %v415
      %v420 = vmul.f32 %v362, %v405
      %v421 = vmul.f32 %v363, %v415
      %v422 = vmul.f32 %v364, %v405
      %v423 = vmul.f32 %v365, %v415
      %425 = vset.pattern.permute.xlu0 0
      %426 = vperm.xlu0 %425, %v287
      %v427 = vpop.permute.xlu0 %426
      %430 = vset.pattern.permute.xlu0 0
      %431 = vperm.xlu0 %430, %v288
      %v432 = vpop.permute.xlu0 %431
      %435 = vset.pattern.permute.xlu0 0
      %436 = vperm.xlu0 %435, %v289
      %v437 = vpop.permute.xlu0 %436
      %440 = vset.pattern.permute.xlu0 0
      %441 = vperm.xlu0 %440, %v290
      %v442 = vpop.permute.xlu0 %441
      %v444 = vmul.f32 %v416, %v427
      %v445 = vmul.f32 %v417, %v427
      %v446 = vmul.f32 %v418, %v432
      %v447 = vmul.f32 %v419, %v432
      %v448 = vmul.f32 %v420, %v437
      %v449 = vmul.f32 %v421, %v437
      %v450 = vmul.f32 %v422, %v442
      %v451 = vmul.f32 %v423, %v442
      %453 = vset.pattern.permute.xlu0 0
      %454 = vperm.xlu0 %453, %v292
      %v455 = vpop.permute.xlu0 %454
      %458 = vset.pattern.permute.xlu0 0
      %459 = vperm.xlu0 %458, %v293
      %v460 = vpop.permute.xlu0 %459
      %463 = vset.pattern.permute.xlu0 0
      %464 = vperm.xlu0 %463, %v294
      %v465 = vpop.permute.xlu0 %464
      %468 = vset.pattern.permute.xlu0 0
      %469 = vperm.xlu0 %468, %v295
      %v470 = vpop.permute.xlu0 %469
      %v472 = vadd.f32 %v444, %v455
      %v473 = vadd.f32 %v445, %v455
      %v474 = vadd.f32 %v446, %v460
      %v475 = vadd.f32 %v447, %v460
      %v476 = vadd.f32 %v448, %v465
      %v477 = vadd.f32 %v449, %v465
      %v478 = vadd.f32 %v450, %v470
      %v479 = vadd.f32 %v451, %v470
      %481 = vset.pattern.permute.xlu0 0
      %482 = vperm.xlu0 %481, %v297
      %v483 = vpop.permute.xlu0 %482
      %486 = vset.pattern.permute.xlu0 0
      %487 = vperm.xlu0 %486, %v298
      %v488 = vpop.permute.xlu0 %487
      %491 = vset.pattern.permute.xlu0 0
      %492 = vperm.xlu0 %491, %v299
      %v493 = vpop.permute.xlu0 %492
      %496 = vset.pattern.permute.xlu0 0
      %497 = vperm.xlu0 %496, %v300
      %v498 = vpop.permute.xlu0 %497
      %v500 = vld [vmem:[%s1] sm:$0xff]
      %v501 = vld [vmem:[%s1 + $0x8] sm:$0xff]
      %v502 = vld [vmem:[%s1 + $0x10] sm:$0xff]
      %v503 = vld [vmem:[%s2] sm:$0xff]
      %v504 = vld [vmem:[%s2 + $0x8] sm:$0xff]
      %v505 = vld [vmem:[%s2 + $0x10] sm:$0xff]
      %v506 = vld [vmem:[%s3] sm:$0xff]
      %v507 = vld [vmem:[%s3 + $0x8] sm:$0xff]
      %v508 = vld [vmem:[%s3 + $0x10] sm:$0xff]
      %v509 = vld [vmem:[%s3 + $0x18] sm:$0xff]
      %511 = vset.pattern.permute.xlu0 0
      %512 = vperm.xlu0 %511, %v503
      %v513 = vpop.permute.xlu0 %512
      %vm515 = vcmask 261120
      %v517 = vsel %vm515, %v500, 0
      %519 = vmatpush.msra.mxu0 0.0
      %520 = vmatpush.msra.mxu0 0.0
      %521 = vmatpush.msra.mxu0 0.0
      %522 = vmatpush.msra.mxu0 0.0
      %523 = vmatpush.msra.mxu0 0.0
      %524 = vmatpush.msra.mxu0 0.0
      %525 = vmatpush.msra.mxu0 0.0
      %526 = vmatpush.msra.mxu0 0.0
      %527 = vmatpush.msra.mxu0 0.0
      %528 = vmatpush.msra.mxu0 0.0
      %529 = vmatpush.msra.mxu0 0.0
      %530 = vmatpush.msra.mxu0 0.0
      %531 = vmatpush.msra.mxu0 %v478
      %532 = vmatpush.msra.mxu0 %v476
      %533 = vmatpush.msra.mxu0 %v474
      %534 = vmatpush.msra.mxu0 %v472
      %535 = vmatmul.f32.gmra.mxu0 %v517
      %v536 = vpop.f32.mrf.mxu0
      %v537 = vadd.f32 %v513, %v536
      %538 = vdwg.mxu0
      %539 = vmatpush.msra.mxu0 0.0
      %540 = vmatpush.msra.mxu0 0.0
      %541 = vmatpush.msra.mxu0 0.0
      %542 = vmatpush.msra.mxu0 0.0
      %543 = vmatpush.msra.mxu0 0.0
      %544 = vmatpush.msra.mxu0 0.0
      %545 = vmatpush.msra.mxu0 0.0
      %546 = vmatpush.msra.mxu0 0.0
      %547 = vmatpush.msra.mxu0 0.0
      %548 = vmatpush.msra.mxu0 0.0
      %549 = vmatpush.msra.mxu0 0.0
      %550 = vmatpush.msra.mxu0 0.0
      %551 = vmatpush.msra.mxu0 %v479
      %552 = vmatpush.msra.mxu0 %v477
      %553 = vmatpush.msra.mxu0 %v475
      %554 = vmatpush.msra.mxu0 %v473
      %555 = vmatmul.f32.gmra.mxu0 %v517
      %v556 = vpop.f32.mrf.mxu0
      %v557 = vadd.f32 %v513, %v556
      %558 = vdwg.mxu0
      %v559 = vmul.f32 %v537, 0.35355338
      %v560 = vmul.f32 %v557, 0.35355338
      %562 = vset.pattern.permute.xlu0 0
      %563 = vperm.xlu0 %562, %v504
      %v564 = vpop.permute.xlu0 %563
      %v567 = vsel %vm515, %v501, 0
      %569 = vmatpush.msra.mxu0 0.0
      %570 = vmatpush.msra.mxu0 0.0
      %571 = vmatpush.msra.mxu0 0.0
      %572 = vmatpush.msra.mxu0 0.0
      %573 = vmatpush.msra.mxu0 0.0
      %574 = vmatpush.msra.mxu0 0.0
      %575 = vmatpush.msra.mxu0 0.0
      %576 = vmatpush.msra.mxu0 0.0
      %577 = vmatpush.msra.mxu0 0.0
      %578 = vmatpush.msra.mxu0 0.0
      %579 = vmatpush.msra.mxu0 0.0
      %580 = vmatpush.msra.mxu0 0.0
      %581 = vmatpush.msra.mxu0 %v478
      %582 = vmatpush.msra.mxu0 %v476
      %583 = vmatpush.msra.mxu0 %v474
      %584 = vmatpush.msra.mxu0 %v472
      %585 = vmatmul.f32.gmra.mxu0 %v567
      %v586 = vpop.f32.mrf.mxu0
      %v587 = vadd.f32 %v564, %v586
      %588 = vdwg.mxu0
      %589 = vmatpush.msra.mxu0 0.0
      %590 = vmatpush.msra.mxu0 0.0
      %591 = vmatpush.msra.mxu0 0.0
      %592 = vmatpush.msra.mxu0 0.0
      %593 = vmatpush.msra.mxu0 0.0
      %594 = vmatpush.msra.mxu0 0.0
      %595 = vmatpush.msra.mxu0 0.0
      %596 = vmatpush.msra.mxu0 0.0
      %597 = vmatpush.msra.mxu0 0.0
      %598 = vmatpush.msra.mxu0 0.0
      %599 = vmatpush.msra.mxu0 0.0
      %600 = vmatpush.msra.mxu0 0.0
      %601 = vmatpush.msra.mxu0 %v479
      %602 = vmatpush.msra.mxu0 %v477
      %603 = vmatpush.msra.mxu0 %v475
      %604 = vmatpush.msra.mxu0 %v473
      %605 = vmatmul.f32.gmra.mxu0 %v567
      %v606 = vpop.f32.mrf.mxu0
      %v607 = vadd.f32 %v564, %v606
      %608 = vdwg.mxu0
      %610 = vset.pattern.permute.xlu0 0
      %611 = vperm.xlu0 %610, %v505
      %v612 = vpop.permute.xlu0 %611
      %v615 = vsel %vm515, %v502, 0
      %617 = vmatpush.msra.mxu0 0.0
      %618 = vmatpush.msra.mxu0 0.0
      %619 = vmatpush.msra.mxu0 0.0
      %620 = vmatpush.msra.mxu0 0.0
      %621 = vmatpush.msra.mxu0 0.0
      %622 = vmatpush.msra.mxu0 0.0
      %623 = vmatpush.msra.mxu0 0.0
      %624 = vmatpush.msra.mxu0 0.0
      %625 = vmatpush.msra.mxu0 0.0
      %626 = vmatpush.msra.mxu0 0.0
      %627 = vmatpush.msra.mxu0 0.0
      %628 = vmatpush.msra.mxu0 0.0
      %629 = vmatpush.msra.mxu0 %v478
      %630 = vmatpush.msra.mxu0 %v476
      %631 = vmatpush.msra.mxu0 %v474
      %632 = vmatpush.msra.mxu0 %v472
      %633 = vmatmul.f32.gmra.mxu0 %v615
      %v634 = vpop.f32.mrf.mxu0
      %v635 = vadd.f32 %v612, %v634
      %636 = vdwg.mxu0
      %637 = vmatpush.msra.mxu0 0.0
      %638 = vmatpush.msra.mxu0 0.0
      %639 = vmatpush.msra.mxu0 0.0
      %640 = vmatpush.msra.mxu0 0.0
      %641 = vmatpush.msra.mxu0 0.0
      %642 = vmatpush.msra.mxu0 0.0
      %643 = vmatpush.msra.mxu0 0.0
      %644 = vmatpush.msra.mxu0 0.0
      %645 = vmatpush.msra.mxu0 0.0
      %646 = vmatpush.msra.mxu0 0.0
      %647 = vmatpush.msra.mxu0 0.0
      %648 = vmatpush.msra.mxu0 0.0
      %649 = vmatpush.msra.mxu0 %v479
      %650 = vmatpush.msra.mxu0 %v477
      %651 = vmatpush.msra.mxu0 %v475
      %652 = vmatpush.msra.mxu0 %v473
      %653 = vmatmul.f32.gmra.mxu0 %v615
      %v654 = vpop.f32.mrf.mxu0
      %v655 = vadd.f32 %v612, %v654
      %656 = vdwg.mxu0
      %657 = vxpose.xlu0.b32.start [1/16] %v559, 128
      %658 = vxpose.xlu0.b32.cont [2/16] 0.0, 128
      %659 = vxpose.xlu0.b32.cont [3/16] 0.0, 128
      %660 = vxpose.xlu0.b32.cont [4/16] 0.0, 128
      %661 = vxpose.xlu0.b32.cont [5/16] 0.0, 128
      %662 = vxpose.xlu0.b32.cont [6/16] 0.0, 128
      %663 = vxpose.xlu0.b32.cont [7/16] 0.0, 128
      %664 = vxpose.xlu0.b32.cont [8/16] 0.0, 128
      %665 = vxpose.xlu0.b32.cont [9/16] 0.0, 128
      %666 = vxpose.xlu0.b32.cont [10/16] 0.0, 128
      %667 = vxpose.xlu0.b32.cont [11/16] 0.0, 128
      %668 = vxpose.xlu0.b32.cont [12/16] 0.0, 128
      %669 = vxpose.xlu0.b32.cont [13/16] 0.0, 128
      %670 = vxpose.xlu0.b32.cont [14/16] 0.0, 128
      %671 = vxpose.xlu0.b32.cont [15/16] 0.0, 128
      %672 = vxpose.xlu0.b32.end [16/16] 0.0, 128
      %v673 = vpop.trf.xlu0
      %v674 = vpop.trf.xlu0
      %v675 = vpop.trf.xlu0
      %v676 = vpop.trf.xlu0
      %v677 = vpop.trf.xlu0
      %v678 = vpop.trf.xlu0
      %v679 = vpop.trf.xlu0
      %v680 = vpop.trf.xlu0
      %v681 = vpop.trf.xlu0
      %v682 = vpop.trf.xlu0
      %v683 = vpop.trf.xlu0
      %v684 = vpop.trf.xlu0
      %v685 = vpop.trf.xlu0
      %v686 = vpop.trf.xlu0
      %v687 = vpop.trf.xlu0
      %v688 = vpop.trf.xlu0
      %vm689 = vcmask 64512
      %v691 = vsel %vm689, %v673, 0
      %v694 = vsel %vm689, %v674, 0
      %v697 = vsel %vm689, %v675, 0
      %v700 = vsel %vm689, %v676, 0
      %v703 = vsel %vm689, %v677, 0
      %v706 = vsel %vm689, %v678, 0
      %v709 = vsel %vm689, %v679, 0
      %v712 = vsel %vm689, %v680, 0
      %v715 = vsel %vm689, %v681, 0
      %v718 = vsel %vm689, %v682, 0
      %v721 = vsel %vm689, %v683, 0
      %v724 = vsel %vm689, %v684, 0
      %v727 = vsel %vm689, %v685, 0
      %v730 = vsel %vm689, %v686, 0
      %v733 = vsel %vm689, %v687, 0
      %v736 = vsel %vm689, %v688, 0
      %738 = vmatpush.msra.mxu0 0.0
      %739 = vmatpush.msra.mxu0 0.0
      %740 = vmatpush.msra.mxu0 0.0
      %741 = vmatpush.msra.mxu0 0.0
      %742 = vmatpush.msra.mxu0 0.0
      %743 = vmatpush.msra.mxu0 0.0
      %744 = vmatpush.msra.mxu0 0.0
      %745 = vmatpush.msra.mxu0 0.0
      %746 = vmatpush.msra.mxu0 0.0
      %747 = vmatpush.msra.mxu0 0.0
      %748 = vmatpush.msra.mxu0 0.0
      %749 = vmatpush.msra.mxu0 0.0
      %750 = vmatpush.msra.mxu0 0.0
      %751 = vmatpush.msra.mxu0 0.0
      %752 = vmatpush.msra.mxu0 0.0
      %753 = vmatpush.msra.mxu0 %v587
      %754 = vmatmul.f32.gmra.mxu0 %v691
      %v755 = vpop.f32.mrf.mxu0
      %v756 = vadd.f32 0.0, %v755
      %757 = vmatmul.f32.gmra.mxu0 %v694
      %v758 = vpop.f32.mrf.mxu0
      %v759 = vadd.f32 0.0, %v758
      %760 = vmatmul.f32.gmra.mxu0 %v697
      %v761 = vpop.f32.mrf.mxu0
      %v762 = vadd.f32 0.0, %v761
      %763 = vmatmul.f32.gmra.mxu0 %v700
      %v764 = vpop.f32.mrf.mxu0
      %v765 = vadd.f32 0.0, %v764
      %766 = vmatmul.f32.gmra.mxu0 %v703
      %v767 = vpop.f32.mrf.mxu0
      %v768 = vadd.f32 0.0, %v767
      %769 = vmatmul.f32.gmra.mxu0 %v706
      %v770 = vpop.f32.mrf.mxu0
      %v771 = vadd.f32 0.0, %v770
      %772 = vmatmul.f32.gmra.mxu0 %v709
      %v773 = vpop.f32.mrf.mxu0
      %v774 = vadd.f32 0.0, %v773
      %775 = vmatmul.f32.gmra.mxu0 %v712
      %v776 = vpop.f32.mrf.mxu0
      %v777 = vadd.f32 0.0, %v776
      %778 = vmatmul.f32.gmra.mxu0 %v715
      %v779 = vpop.f32.mrf.mxu0
      %v780 = vadd.f32 0.0, %v779
      %781 = vmatmul.f32.gmra.mxu0 %v718
      %v782 = vpop.f32.mrf.mxu0
      %v783 = vadd.f32 0.0, %v782
      %784 = vmatmul.f32.gmra.mxu0 %v721
      %v785 = vpop.f32.mrf.mxu0
      %v786 = vadd.f32 0.0, %v785
      %787 = vmatmul.f32.gmra.mxu0 %v724
      %v788 = vpop.f32.mrf.mxu0
      %v789 = vadd.f32 0.0, %v788
      %790 = vmatmul.f32.gmra.mxu0 %v727
      %v791 = vpop.f32.mrf.mxu0
      %v792 = vadd.f32 0.0, %v791
      %793 = vmatmul.f32.gmra.mxu0 %v730
      %v794 = vpop.f32.mrf.mxu0
      %v795 = vadd.f32 0.0, %v794
      %796 = vmatmul.f32.gmra.mxu0 %v733
      %v797 = vpop.f32.mrf.mxu0
      %v798 = vadd.f32 0.0, %v797
      %799 = vmatmul.f32.gmra.mxu0 %v736
      %v800 = vpop.f32.mrf.mxu0
      %v801 = vadd.f32 0.0, %v800
      %802 = vdwg.mxu0
      %803 = vmatpush.msra.mxu0 0.0
      %804 = vmatpush.msra.mxu0 0.0
      %805 = vmatpush.msra.mxu0 0.0
      %806 = vmatpush.msra.mxu0 0.0
      %807 = vmatpush.msra.mxu0 0.0
      %808 = vmatpush.msra.mxu0 0.0
      %809 = vmatpush.msra.mxu0 0.0
      %810 = vmatpush.msra.mxu0 0.0
      %811 = vmatpush.msra.mxu0 0.0
      %812 = vmatpush.msra.mxu0 0.0
      %813 = vmatpush.msra.mxu0 0.0
      %814 = vmatpush.msra.mxu0 0.0
      %815 = vmatpush.msra.mxu0 0.0
      %816 = vmatpush.msra.mxu0 0.0
      %817 = vmatpush.msra.mxu0 0.0
      %818 = vmatpush.msra.mxu0 %v607
      %819 = vmatmul.f32.gmra.mxu0 %v691
      %v820 = vpop.f32.mrf.mxu0
      %v821 = vadd.f32 0.0, %v820
      %822 = vmatmul.f32.gmra.mxu0 %v694
      %v823 = vpop.f32.mrf.mxu0
      %v824 = vadd.f32 0.0, %v823
      %825 = vmatmul.f32.gmra.mxu0 %v697
      %v826 = vpop.f32.mrf.mxu0
      %v827 = vadd.f32 0.0, %v826
      %828 = vmatmul.f32.gmra.mxu0 %v700
      %v829 = vpop.f32.mrf.mxu0
      %v830 = vadd.f32 0.0, %v829
      %831 = vmatmul.f32.gmra.mxu0 %v703
      %v832 = vpop.f32.mrf.mxu0
      %v833 = vadd.f32 0.0, %v832
      %834 = vmatmul.f32.gmra.mxu0 %v706
      %v835 = vpop.f32.mrf.mxu0
      %v836 = vadd.f32 0.0, %v835
      %837 = vmatmul.f32.gmra.mxu0 %v709
      %v838 = vpop.f32.mrf.mxu0
      %v839 = vadd.f32 0.0, %v838
      %840 = vmatmul.f32.gmra.mxu0 %v712
      %v841 = vpop.f32.mrf.mxu0
      %v842 = vadd.f32 0.0, %v841
      %843 = vmatmul.f32.gmra.mxu0 %v715
      %v844 = vpop.f32.mrf.mxu0
      %v845 = vadd.f32 0.0, %v844
      %846 = vmatmul.f32.gmra.mxu0 %v718
      %v847 = vpop.f32.mrf.mxu0
      %v848 = vadd.f32 0.0, %v847
      %849 = vmatmul.f32.gmra.mxu0 %v721
      %v850 = vpop.f32.mrf.mxu0
      %v851 = vadd.f32 0.0, %v850
      %852 = vmatmul.f32.gmra.mxu0 %v724
      %v853 = vpop.f32.mrf.mxu0
      %v854 = vadd.f32 0.0, %v853
      %855 = vmatmul.f32.gmra.mxu0 %v727
      %v856 = vpop.f32.mrf.mxu0
      %v857 = vadd.f32 0.0, %v856
      %858 = vmatmul.f32.gmra.mxu0 %v730
      %v859 = vpop.f32.mrf.mxu0
      %v860 = vadd.f32 0.0, %v859
      %861 = vmatmul.f32.gmra.mxu0 %v733
      %v862 = vpop.f32.mrf.mxu0
      %v863 = vadd.f32 0.0, %v862
      %864 = vmatmul.f32.gmra.mxu0 %v736
      %v865 = vpop.f32.mrf.mxu0
      %v866 = vadd.f32 0.0, %v865
      %867 = vdwg.mxu0
      %v868 = vmax.f32 %v756, %v821
      %869 = vmax.xlane.f32.xlu0 %v868
      %v870 = vpop.xlane.xlu0 %869
      %v871 = vmax.f32 %v759, %v824
      %872 = vmax.xlane.f32.xlu0 %v871
      %v873 = vpop.xlane.xlu0 %872
      %v874 = vmax.f32 %v762, %v827
      %875 = vmax.xlane.f32.xlu0 %v874
      %v876 = vpop.xlane.xlu0 %875
      %v877 = vmax.f32 %v765, %v830
      %878 = vmax.xlane.f32.xlu0 %v877
      %v879 = vpop.xlane.xlu0 %878
      %v880 = vmax.f32 %v768, %v833
      %881 = vmax.xlane.f32.xlu0 %v880
      %v882 = vpop.xlane.xlu0 %881
      %v883 = vmax.f32 %v771, %v836
      %884 = vmax.xlane.f32.xlu0 %v883
      %v885 = vpop.xlane.xlu0 %884
      %v886 = vmax.f32 %v774, %v839
      %887 = vmax.xlane.f32.xlu0 %v886
      %v888 = vpop.xlane.xlu0 %887
      %v889 = vmax.f32 %v777, %v842
      %890 = vmax.xlane.f32.xlu0 %v889
      %v891 = vpop.xlane.xlu0 %890
      %v892 = vmax.f32 %v780, %v845
      %893 = vmax.xlane.f32.xlu0 %v892
      %v894 = vpop.xlane.xlu0 %893
      %v895 = vmax.f32 %v783, %v848
      %896 = vmax.xlane.f32.xlu0 %v895
      %v897 = vpop.xlane.xlu0 %896
      %v898 = vmax.f32 %v786, %v851
      %899 = vmax.xlane.f32.xlu0 %v898
      %v900 = vpop.xlane.xlu0 %899
      %v901 = vmax.f32 %v789, %v854
      %902 = vmax.xlane.f32.xlu0 %v901
      %v903 = vpop.xlane.xlu0 %902
      %v904 = vmax.f32 %v792, %v857
      %905 = vmax.xlane.f32.xlu0 %v904
      %v906 = vpop.xlane.xlu0 %905
      %v907 = vmax.f32 %v795, %v860
      %908 = vmax.xlane.f32.xlu0 %v907
      %v909 = vpop.xlane.xlu0 %908
      %v910 = vmax.f32 %v798, %v863
      %911 = vmax.xlane.f32.xlu0 %v910
      %v912 = vpop.xlane.xlu0 %911
      %v913 = vmax.f32 %v801, %v866
      %914 = vmax.xlane.f32.xlu0 %v913
      %v915 = vpop.xlane.xlu0 %914
      %v916 = vsub.f32 %v756, %v870
      %v917 = vsub.f32 %v821, %v870
      %v918 = vsub.f32 %v759, %v873
      %v919 = vsub.f32 %v824, %v873
      %v920 = vsub.f32 %v762, %v876
      %v921 = vsub.f32 %v827, %v876
      %v922 = vsub.f32 %v765, %v879
      %v923 = vsub.f32 %v830, %v879
      %v924 = vsub.f32 %v768, %v882
      %v925 = vsub.f32 %v833, %v882
      %v926 = vsub.f32 %v771, %v885
      %v927 = vsub.f32 %v836, %v885
      %v928 = vsub.f32 %v774, %v888
      %v929 = vsub.f32 %v839, %v888
      %v930 = vsub.f32 %v777, %v891
      %v931 = vsub.f32 %v842, %v891
      %v932 = vsub.f32 %v780, %v894
      %v933 = vsub.f32 %v845, %v894
      %v934 = vsub.f32 %v783, %v897
      %v935 = vsub.f32 %v848, %v897
      %v936 = vsub.f32 %v786, %v900
      %v937 = vsub.f32 %v851, %v900
      %v938 = vsub.f32 %v789, %v903
      %v939 = vsub.f32 %v854, %v903
      %v940 = vsub.f32 %v792, %v906
      %v941 = vsub.f32 %v857, %v906
      %v942 = vsub.f32 %v795, %v909
      %v943 = vsub.f32 %v860, %v909
      %v944 = vsub.f32 %v798, %v912
      %v945 = vsub.f32 %v863, %v912
      %v946 = vsub.f32 %v801, %v915
      %v947 = vsub.f32 %v866, %v915
      %v948 = vmul.f32 %v916, 1.442695
      %v949 = vpow.pop %v948
      %v950 = vmul.f32 %v917, 1.442695
      %v951 = vpow.pop %v950
      %v952 = vmul.f32 %v918, 1.442695
      %v953 = vpow.pop %v952
      %v954 = vmul.f32 %v919, 1.442695
      %v955 = vpow.pop %v954
      %v956 = vmul.f32 %v920, 1.442695
      %v957 = vpow.pop %v956
      %v958 = vmul.f32 %v921, 1.442695
      %v959 = vpow.pop %v958
      %v960 = vmul.f32 %v922, 1.442695
      %v961 = vpow.pop %v960
      %v962 = vmul.f32 %v923, 1.442695
      %v963 = vpow.pop %v962
      %v964 = vmul.f32 %v924, 1.442695
      %v965 = vpow.pop %v964
      %v966 = vmul.f32 %v925, 1.442695
      %v967 = vpow.pop %v966
      %v968 = vmul.f32 %v926, 1.442695
      %v969 = vpow.pop %v968
      %v970 = vmul.f32 %v927, 1.442695
      %v971 = vpow.pop %v970
      %v972 = vmul.f32 %v928, 1.442695
      %v973 = vpow.pop %v972
      %v974 = vmul.f32 %v929, 1.442695
      %v975 = vpow.pop %v974
      %v976 = vmul.f32 %v930, 1.442695
      %v977 = vpow.pop %v976
      %v978 = vmul.f32 %v931, 1.442695
      %v979 = vpow.pop %v978
      %v980 = vmul.f32 %v932, 1.442695
      %v981 = vpow.pop %v980
      %v982 = vmul.f32 %v933, 1.442695
      %v983 = vpow.pop %v982
      %v984 = vmul.f32 %v934, 1.442695
      %v985 = vpow.pop %v984
      %v986 = vmul.f32 %v935, 1.442695
      %v987 = vpow.pop %v986
      %v988 = vmul.f32 %v936, 1.442695
      %v989 = vpow.pop %v988
      %v990 = vmul.f32 %v937, 1.442695
      %v991 = vpow.pop %v990
      %v992 = vmul.f32 %v938, 1.442695
      %v993 = vpow.pop %v992
      %v994 = vmul.f32 %v939, 1.442695
      %v995 = vpow.pop %v994
      %v996 = vmul.f32 %v940, 1.442695
      %v997 = vpow.pop %v996
      %v998 = vmul.f32 %v941, 1.442695
      %v999 = vpow.pop %v998
      %v1000 = vmul.f32 %v942, 1.442695
      %v1001 = vpow.pop %v1000
      %v1002 = vmul.f32 %v943, 1.442695
      %v1003 = vpow.pop %v1002
      %v1004 = vmul.f32 %v944, 1.442695
      %v1005 = vpow.pop %v1004
      %v1006 = vmul.f32 %v945, 1.442695
      %v1007 = vpow.pop %v1006
      %v1008 = vmul.f32 %v946, 1.442695
      %v1009 = vpow.pop %v1008
      %v1010 = vmul.f32 %v947, 1.442695
      %v1011 = vpow.pop %v1010
      %v1012 = vadd.f32 %v949, %v951
      %1013 = vadd.xlane.f32.xlu0 %v1012
      %v1014 = vpop.xlane.xlu0 %1013
      %v1015 = vadd.f32 %v953, %v955
      %1016 = vadd.xlane.f32.xlu0 %v1015
      %v1017 = vpop.xlane.xlu0 %1016
      %v1018 = vadd.f32 %v957, %v959
      %1019 = vadd.xlane.f32.xlu0 %v1018
      %v1020 = vpop.xlane.xlu0 %1019
      %v1021 = vadd.f32 %v961, %v963
      %1022 = vadd.xlane.f32.xlu0 %v1021
      %v1023 = vpop.xlane.xlu0 %1022
      %v1024 = vadd.f32 %v965, %v967
      %1025 = vadd.xlane.f32.xlu0 %v1024
      %v1026 = vpop.xlane.xlu0 %1025
      %v1027 = vadd.f32 %v969, %v971
      %1028 = vadd.xlane.f32.xlu0 %v1027
      %v1029 = vpop.xlane.xlu0 %1028
      %v1030 = vadd.f32 %v973, %v975
      %1031 = vadd.xlane.f32.xlu0 %v1030
      %v1032 = vpop.xlane.xlu0 %1031
      %v1033 = vadd.f32 %v977, %v979
      %1034 = vadd.xlane.f32.xlu0 %v1033
      %v1035 = vpop.xlane.xlu0 %1034
      %v1036 = vadd.f32 %v981, %v983
      %1037 = vadd.xlane.f32.xlu0 %v1036
      %v1038 = vpop.xlane.xlu0 %1037
      %v1039 = vadd.f32 %v985, %v987
      %1040 = vadd.xlane.f32.xlu0 %v1039
      %v1041 = vpop.xlane.xlu0 %1040
      %v1042 = vadd.f32 %v989, %v991
      %1043 = vadd.xlane.f32.xlu0 %v1042
      %v1044 = vpop.xlane.xlu0 %1043
      %v1045 = vadd.f32 %v993, %v995
      %1046 = vadd.xlane.f32.xlu0 %v1045
      %v1047 = vpop.xlane.xlu0 %1046
      %v1048 = vadd.f32 %v997, %v999
      %1049 = vadd.xlane.f32.xlu0 %v1048
      %v1050 = vpop.xlane.xlu0 %1049
      %v1051 = vadd.f32 %v1001, %v1003
      %1052 = vadd.xlane.f32.xlu0 %v1051
      %v1053 = vpop.xlane.xlu0 %1052
      %v1054 = vadd.f32 %v1005, %v1007
      %1055 = vadd.xlane.f32.xlu0 %v1054
      %v1056 = vpop.xlane.xlu0 %1055
      %v1057 = vadd.f32 %v1009, %v1011
      %1058 = vadd.xlane.f32.xlu0 %v1057
      %v1059 = vpop.xlane.xlu0 %1058
      %v1060 = vrcp.pop %v1014
      %v1061 = vrcp.pop %v1017
      %v1062 = vrcp.pop %v1020
      %v1063 = vrcp.pop %v1023
      %v1064 = vrcp.pop %v1026
      %v1065 = vrcp.pop %v1029
      %v1066 = vrcp.pop %v1032
      %v1067 = vrcp.pop %v1035
      %v1068 = vrcp.pop %v1038
      %v1069 = vrcp.pop %v1041
      %v1070 = vrcp.pop %v1044
      %v1071 = vrcp.pop %v1047
      %v1072 = vrcp.pop %v1050
      %v1073 = vrcp.pop %v1053
      %v1074 = vrcp.pop %v1056
      %v1075 = vrcp.pop %v1059
      %v1076 = vmul.f32 %v949, %v1060
      %v1077 = vmul.f32 %v951, %v1060
      %v1078 = vmul.f32 %v953, %v1061
      %v1079 = vmul.f32 %v955, %v1061
      %v1080 = vmul.f32 %v957, %v1062
      %v1081 = vmul.f32 %v959, %v1062
      %v1082 = vmul.f32 %v961, %v1063
      %v1083 = vmul.f32 %v963, %v1063
      %v1084 = vmul.f32 %v965, %v1064
      %v1085 = vmul.f32 %v967, %v1064
      %v1086 = vmul.f32 %v969, %v1065
      %v1087 = vmul.f32 %v971, %v1065
      %v1088 = vmul.f32 %v973, %v1066
      %v1089 = vmul.f32 %v975, %v1066
      %v1090 = vmul.f32 %v977, %v1067
      %v1091 = vmul.f32 %v979, %v1067
      %v1092 = vmul.f32 %v981, %v1068
      %v1093 = vmul.f32 %v983, %v1068
      %v1094 = vmul.f32 %v985, %v1069
      %v1095 = vmul.f32 %v987, %v1069
      %v1096 = vmul.f32 %v989, %v1070
      %v1097 = vmul.f32 %v991, %v1070
      %v1098 = vmul.f32 %v993, %v1071
      %v1099 = vmul.f32 %v995, %v1071
      %v1100 = vmul.f32 %v997, %v1072
      %v1101 = vmul.f32 %v999, %v1072
      %v1102 = vmul.f32 %v1001, %v1073
      %v1103 = vmul.f32 %v1003, %v1073
      %v1104 = vmul.f32 %v1005, %v1074
      %v1105 = vmul.f32 %v1007, %v1074
      %v1106 = vmul.f32 %v1009, %v1075
      %v1107 = vmul.f32 %v1011, %v1075
      %1108 = vmatpush.xpose.msra.mxu0 %v1106
      %1109 = vmatpush.xpose.msra.mxu0 %v1104
      %1110 = vmatpush.xpose.msra.mxu0 %v1102
      %1111 = vmatpush.xpose.msra.mxu0 %v1100
      %1112 = vmatpush.xpose.msra.mxu0 %v1098
      %1113 = vmatpush.xpose.msra.mxu0 %v1096
      %1114 = vmatpush.xpose.msra.mxu0 %v1094
      %1115 = vmatpush.xpose.msra.mxu0 %v1092
      %1116 = vmatpush.xpose.msra.mxu0 %v1090
      %1117 = vmatpush.xpose.msra.mxu0 %v1088
      %1118 = vmatpush.xpose.msra.mxu0 %v1086
      %1119 = vmatpush.xpose.msra.mxu0 %v1084
      %1120 = vmatpush.xpose.msra.mxu0 %v1082
      %1121 = vmatpush.xpose.msra.mxu0 %v1080
      %1122 = vmatpush.xpose.msra.mxu0 %v1078
      %1123 = vmatpush.xpose.msra.mxu0 %v1076
      %1124 = vmatmul.f32.gmra.mxu0 %v635
      %v1125 = vpop.f32.mrf.mxu0
      %v1126 = vadd.f32 0.0, %v1125
      %1127 = vdwg.mxu0
      %1128 = vmatpush.xpose.msra.mxu0 %v1107
      %1129 = vmatpush.xpose.msra.mxu0 %v1105
      %1130 = vmatpush.xpose.msra.mxu0 %v1103
      %1131 = vmatpush.xpose.msra.mxu0 %v1101
      %1132 = vmatpush.xpose.msra.mxu0 %v1099
      %1133 = vmatpush.xpose.msra.mxu0 %v1097
      %1134 = vmatpush.xpose.msra.mxu0 %v1095
      %1135 = vmatpush.xpose.msra.mxu0 %v1093
      %1136 = vmatpush.xpose.msra.mxu0 %v1091
      %1137 = vmatpush.xpose.msra.mxu0 %v1089
      %1138 = vmatpush.xpose.msra.mxu0 %v1087
      %1139 = vmatpush.xpose.msra.mxu0 %v1085
      %1140 = vmatpush.xpose.msra.mxu0 %v1083
      %1141 = vmatpush.xpose.msra.mxu0 %v1081
      %1142 = vmatpush.xpose.msra.mxu0 %v1079
      %1143 = vmatpush.xpose.msra.mxu0 %v1077
      %1144 = vmatmul.f32.gmra.mxu0 %v655
      %v1145 = vpop.f32.mrf.mxu0
      %v1146 = vadd.f32 %v1126, %v1145
      %1147 = vdwg.mxu0
      %v1149 = vsel %vm689, %v506, 0
      %v1152 = vsel %vm689, %v507, 0
      %v1155 = vsel %vm689, %v508, 0
      %v1158 = vsel %vm689, %v509, 0
      %1160 = vmatpush.msra.mxu0 0.0
      %1161 = vmatpush.msra.mxu0 0.0
      %1162 = vmatpush.msra.mxu0 0.0
      %1163 = vmatpush.msra.mxu0 0.0
      %1164 = vmatpush.msra.mxu0 0.0
      %1165 = vmatpush.msra.mxu0 0.0
      %1166 = vmatpush.msra.mxu0 0.0
      %1167 = vmatpush.msra.mxu0 0.0
      %1168 = vmatpush.msra.mxu0 0.0
      %1169 = vmatpush.msra.mxu0 0.0
      %1170 = vmatpush.msra.mxu0 0.0
      %1171 = vmatpush.msra.mxu0 0.0
      %1172 = vmatpush.msra.mxu0 0.0
      %1173 = vmatpush.msra.mxu0 0.0
      %1174 = vmatpush.msra.mxu0 0.0
      %1175 = vmatpush.msra.mxu0 %v1146
      %1176 = vmatmul.f32.gmra.mxu0 %v1149
      %v1177 = vpop.f32.mrf.mxu0
      %v1178 = vadd.f32 0.0, %v1177
      %1179 = vmatmul.f32.gmra.mxu0 %v1152
      %v1180 = vpop.f32.mrf.mxu0
      %v1181 = vadd.f32 0.0, %v1180
      %1182 = vmatmul.f32.gmra.mxu0 %v1155
      %v1183 = vpop.f32.mrf.mxu0
      %v1184 = vadd.f32 0.0, %v1183
      %1185 = vmatmul.f32.gmra.mxu0 %v1158
      %v1186 = vpop.f32.mrf.mxu0
      %v1187 = vadd.f32 0.0, %v1186
      %1188 = vdwg.mxu0
      %1189 = vxpose.xlu0.b32.start [1/16] %v560, 128
      %1190 = vxpose.xlu0.b32.cont [2/16] 0.0, 128
      %1191 = vxpose.xlu0.b32.cont [3/16] 0.0, 128
      %1192 = vxpose.xlu0.b32.cont [4/16] 0.0, 128
      %1193 = vxpose.xlu0.b32.cont [5/16] 0.0, 128
      %1194 = vxpose.xlu0.b32.cont [6/16] 0.0, 128
      %1195 = vxpose.xlu0.b32.cont [7/16] 0.0, 128
      %1196 = vxpose.xlu0.b32.cont [8/16] 0.0, 128
      %1197 = vxpose.xlu0.b32.cont [9/16] 0.0, 128
      %1198 = vxpose.xlu0.b32.cont [10/16] 0.0, 128
      %1199 = vxpose.xlu0.b32.cont [11/16] 0.0, 128
      %1200 = vxpose.xlu0.b32.cont [12/16] 0.0, 128
      %1201 = vxpose.xlu0.b32.cont [13/16] 0.0, 128
      %1202 = vxpose.xlu0.b32.cont [14/16] 0.0, 128
      %1203 = vxpose.xlu0.b32.cont [15/16] 0.0, 128
      %1204 = vxpose.xlu0.b32.end [16/16] 0.0, 128
      %v1205 = vpop.trf.xlu0
      %v1206 = vpop.trf.xlu0
      %v1207 = vpop.trf.xlu0
      %v1208 = vpop.trf.xlu0
      %v1209 = vpop.trf.xlu0
      %v1210 = vpop.trf.xlu0
      %v1211 = vpop.trf.xlu0
      %v1212 = vpop.trf.xlu0
      %v1213 = vpop.trf.xlu0
      %v1214 = vpop.trf.xlu0
      %v1215 = vpop.trf.xlu0
      %v1216 = vpop.trf.xlu0
      %v1217 = vpop.trf.xlu0
      %v1218 = vpop.trf.xlu0
      %v1219 = vpop.trf.xlu0
      %v1220 = vpop.trf.xlu0
      %v1222 = vsel %vm689, %v1205, 0
      %v1225 = vsel %vm689, %v1206, 0
      %v1228 = vsel %vm689, %v1207, 0
      %v1231 = vsel %vm689, %v1208, 0
      %v1234 = vsel %vm689, %v1209, 0
      %v1237 = vsel %vm689, %v1210, 0
      %v1240 = vsel %vm689, %v1211, 0
      %v1243 = vsel %vm689, %v1212, 0
      %v1246 = vsel %vm689, %v1213, 0
      %v1249 = vsel %vm689, %v1214, 0
      %v1252 = vsel %vm689, %v1215, 0
      %v1255 = vsel %vm689, %v1216, 0
      %v1258 = vsel %vm689, %v1217, 0
      %v1261 = vsel %vm689, %v1218, 0
      %v1264 = vsel %vm689, %v1219, 0
      %v1267 = vsel %vm689, %v1220, 0
      %1269 = vmatpush.msra.mxu0 0.0
      %1270 = vmatpush.msra.mxu0 0.0
      %1271 = vmatpush.msra.mxu0 0.0
      %1272 = vmatpush.msra.mxu0 0.0
      %1273 = vmatpush.msra.mxu0 0.0
      %1274 = vmatpush.msra.mxu0 0.0
      %1275 = vmatpush.msra.mxu0 0.0
      %1276 = vmatpush.msra.mxu0 0.0
      %1277 = vmatpush.msra.mxu0 0.0
      %1278 = vmatpush.msra.mxu0 0.0
      %1279 = vmatpush.msra.mxu0 0.0
      %1280 = vmatpush.msra.mxu0 0.0
      %1281 = vmatpush.msra.mxu0 0.0
      %1282 = vmatpush.msra.mxu0 0.0
      %1283 = vmatpush.msra.mxu0 0.0
      %1284 = vmatpush.msra.mxu0 %v587
      %1285 = vmatmul.f32.gmra.mxu0 %v1222
      %v1286 = vpop.f32.mrf.mxu0
      %v1287 = vadd.f32 0.0, %v1286
      %1288 = vmatmul.f32.gmra.mxu0 %v1225
      %v1289 = vpop.f32.mrf.mxu0
      %v1290 = vadd.f32 0.0, %v1289
      %1291 = vmatmul.f32.gmra.mxu0 %v1228
      %v1292 = vpop.f32.mrf.mxu0
      %v1293 = vadd.f32 0.0, %v1292
      %1294 = vmatmul.f32.gmra.mxu0 %v1231
      %v1295 = vpop.f32.mrf.mxu0
      %v1296 = vadd.f32 0.0, %v1295
      %1297 = vmatmul.f32.gmra.mxu0 %v1234
      %v1298 = vpop.f32.mrf.mxu0
      %v1299 = vadd.f32 0.0, %v1298
      %1300 = vmatmul.f32.gmra.mxu0 %v1237
      %v1301 = vpop.f32.mrf.mxu0
      %v1302 = vadd.f32 0.0, %v1301
      %1303 = vmatmul.f32.gmra.mxu0 %v1240
      %v1304 = vpop.f32.mrf.mxu0
      %v1305 = vadd.f32 0.0, %v1304
      %1306 = vmatmul.f32.gmra.mxu0 %v1243
      %v1307 = vpop.f32.mrf.mxu0
      %v1308 = vadd.f32 0.0, %v1307
      %1309 = vmatmul.f32.gmra.mxu0 %v1246
      %v1310 = vpop.f32.mrf.mxu0
      %v1311 = vadd.f32 0.0, %v1310
      %1312 = vmatmul.f32.gmra.mxu0 %v1249
      %v1313 = vpop.f32.mrf.mxu0
      %v1314 = vadd.f32 0.0, %v1313
      %1315 = vmatmul.f32.gmra.mxu0 %v1252
      %v1316 = vpop.f32.mrf.mxu0
      %v1317 = vadd.f32 0.0, %v1316
      %1318 = vmatmul.f32.gmra.mxu0 %v1255
      %v1319 = vpop.f32.mrf.mxu0
      %v1320 = vadd.f32 0.0, %v1319
      %1321 = vmatmul.f32.gmra.mxu0 %v1258
      %v1322 = vpop.f32.mrf.mxu0
      %v1323 = vadd.f32 0.0, %v1322
      %1324 = vmatmul.f32.gmra.mxu0 %v1261
      %v1325 = vpop.f32.mrf.mxu0
      %v1326 = vadd.f32 0.0, %v1325
      %1327 = vmatmul.f32.gmra.mxu0 %v1264
      %v1328 = vpop.f32.mrf.mxu0
      %v1329 = vadd.f32 0.0, %v1328
      %1330 = vmatmul.f32.gmra.mxu0 %v1267
      %v1331 = vpop.f32.mrf.mxu0
      %v1332 = vadd.f32 0.0, %v1331
      %1333 = vdwg.mxu0
      %1334 = vmatpush.msra.mxu0 0.0
      %1335 = vmatpush.msra.mxu0 0.0
      %1336 = vmatpush.msra.mxu0 0.0
      %1337 = vmatpush.msra.mxu0 0.0
      %1338 = vmatpush.msra.mxu0 0.0
      %1339 = vmatpush.msra.mxu0 0.0
      %1340 = vmatpush.msra.mxu0 0.0
      %1341 = vmatpush.msra.mxu0 0.0
      %1342 = vmatpush.msra.mxu0 0.0
      %1343 = vmatpush.msra.mxu0 0.0
      %1344 = vmatpush.msra.mxu0 0.0
      %1345 = vmatpush.msra.mxu0 0.0
      %1346 = vmatpush.msra.mxu0 0.0
      %1347 = vmatpush.msra.mxu0 0.0
      %1348 = vmatpush.msra.mxu0 0.0
      %1349 = vmatpush.msra.mxu0 %v607
      %1350 = vmatmul.f32.gmra.mxu0 %v1222
      %v1351 = vpop.f32.mrf.mxu0
      %v1352 = vadd.f32 0.0, %v1351
      %1353 = vmatmul.f32.gmra.mxu0 %v1225
      %v1354 = vpop.f32.mrf.mxu0
      %v1355 = vadd.f32 0.0, %v1354
      %1356 = vmatmul.f32.gmra.mxu0 %v1228
      %v1357 = vpop.f32.mrf.mxu0
      %v1358 = vadd.f32 0.0, %v1357
      %1359 = vmatmul.f32.gmra.mxu0 %v1231
      %v1360 = vpop.f32.mrf.mxu0
      %v1361 = vadd.f32 0.0, %v1360
      %1362 = vmatmul.f32.gmra.mxu0 %v1234
      %v1363 = vpop.f32.mrf.mxu0
      %v1364 = vadd.f32 0.0, %v1363
      %1365 = vmatmul.f32.gmra.mxu0 %v1237
      %v1366 = vpop.f32.mrf.mxu0
      %v1367 = vadd.f32 0.0, %v1366
      %1368 = vmatmul.f32.gmra.mxu0 %v1240
      %v1369 = vpop.f32.mrf.mxu0
      %v1370 = vadd.f32 0.0, %v1369
      %1371 = vmatmul.f32.gmra.mxu0 %v1243
      %v1372 = vpop.f32.mrf.mxu0
      %v1373 = vadd.f32 0.0, %v1372
      %1374 = vmatmul.f32.gmra.mxu0 %v1246
      %v1375 = vpop.f32.mrf.mxu0
      %v1376 = vadd.f32 0.0, %v1375
      %1377 = vmatmul.f32.gmra.mxu0 %v1249
      %v1378 = vpop.f32.mrf.mxu0
      %v1379 = vadd.f32 0.0, %v1378
      %1380 = vmatmul.f32.gmra.mxu0 %v1252
      %v1381 = vpop.f32.mrf.mxu0
      %v1382 = vadd.f32 0.0, %v1381
      %1383 = vmatmul.f32.gmra.mxu0 %v1255
      %v1384 = vpop.f32.mrf.mxu0
      %v1385 = vadd.f32 0.0, %v1384
      %1386 = vmatmul.f32.gmra.mxu0 %v1258
      %v1387 = vpop.f32.mrf.mxu0
      %v1388 = vadd.f32 0.0, %v1387
      %1389 = vmatmul.f32.gmra.mxu0 %v1261
      %v1390 = vpop.f32.mrf.mxu0
      %v1391 = vadd.f32 0.0, %v1390
      %1392 = vmatmul.f32.gmra.mxu0 %v1264
      %v1393 = vpop.f32.mrf.mxu0
      %v1394 = vadd.f32 0.0, %v1393
      %1395 = vmatmul.f32.gmra.mxu0 %v1267
      %v1396 = vpop.f32.mrf.mxu0
      %v1397 = vadd.f32 0.0, %v1396
      %1398 = vdwg.mxu0
      %v1399 = vmax.f32 %v1287, %v1352
      %1400 = vmax.xlane.f32.xlu0 %v1399
      %v1401 = vpop.xlane.xlu0 %1400
      %v1402 = vmax.f32 %v1290, %v1355
      %1403 = vmax.xlane.f32.xlu0 %v1402
      %v1404 = vpop.xlane.xlu0 %1403
      %v1405 = vmax.f32 %v1293, %v1358
      %1406 = vmax.xlane.f32.xlu0 %v1405
      %v1407 = vpop.xlane.xlu0 %1406
      %v1408 = vmax.f32 %v1296, %v1361
      %1409 = vmax.xlane.f32.xlu0 %v1408
      %v1410 = vpop.xlane.xlu0 %1409
      %v1411 = vmax.f32 %v1299, %v1364
      %1412 = vmax.xlane.f32.xlu0 %v1411
      %v1413 = vpop.xlane.xlu0 %1412
      %v1414 = vmax.f32 %v1302, %v1367
      %1415 = vmax.xlane.f32.xlu0 %v1414
      %v1416 = vpop.xlane.xlu0 %1415
      %v1417 = vmax.f32 %v1305, %v1370
      %1418 = vmax.xlane.f32.xlu0 %v1417
      %v1419 = vpop.xlane.xlu0 %1418
      %v1420 = vmax.f32 %v1308, %v1373
      %1421 = vmax.xlane.f32.xlu0 %v1420
      %v1422 = vpop.xlane.xlu0 %1421
      %v1423 = vmax.f32 %v1311, %v1376
      %1424 = vmax.xlane.f32.xlu0 %v1423
      %v1425 = vpop.xlane.xlu0 %1424
      %v1426 = vmax.f32 %v1314, %v1379
      %1427 = vmax.xlane.f32.xlu0 %v1426
      %v1428 = vpop.xlane.xlu0 %1427
      %v1429 = vmax.f32 %v1317, %v1382
      %1430 = vmax.xlane.f32.xlu0 %v1429
      %v1431 = vpop.xlane.xlu0 %1430
      %v1432 = vmax.f32 %v1320, %v1385
      %1433 = vmax.xlane.f32.xlu0 %v1432
      %v1434 = vpop.xlane.xlu0 %1433
      %v1435 = vmax.f32 %v1323, %v1388
      %1436 = vmax.xlane.f32.xlu0 %v1435
      %v1437 = vpop.xlane.xlu0 %1436
      %v1438 = vmax.f32 %v1326, %v1391
      %1439 = vmax.xlane.f32.xlu0 %v1438
      %v1440 = vpop.xlane.xlu0 %1439
      %v1441 = vmax.f32 %v1329, %v1394
      %1442 = vmax.xlane.f32.xlu0 %v1441
      %v1443 = vpop.xlane.xlu0 %1442
      %v1444 = vmax.f32 %v1332, %v1397
      %1445 = vmax.xlane.f32.xlu0 %v1444
      %v1446 = vpop.xlane.xlu0 %1445
      %v1447 = vsub.f32 %v1287, %v1401
      %v1448 = vsub.f32 %v1352, %v1401
      %v1449 = vsub.f32 %v1290, %v1404
      %v1450 = vsub.f32 %v1355, %v1404
      %v1451 = vsub.f32 %v1293, %v1407
      %v1452 = vsub.f32 %v1358, %v1407
      %v1453 = vsub.f32 %v1296, %v1410
      %v1454 = vsub.f32 %v1361, %v1410
      %v1455 = vsub.f32 %v1299, %v1413
      %v1456 = vsub.f32 %v1364, %v1413
      %v1457 = vsub.f32 %v1302, %v1416
      %v1458 = vsub.f32 %v1367, %v1416
      %v1459 = vsub.f32 %v1305, %v1419
      %v1460 = vsub.f32 %v1370, %v1419
      %v1461 = vsub.f32 %v1308, %v1422
      %v1462 = vsub.f32 %v1373, %v1422
      %v1463 = vsub.f32 %v1311, %v1425
      %v1464 = vsub.f32 %v1376, %v1425
      %v1465 = vsub.f32 %v1314, %v1428
      %v1466 = vsub.f32 %v1379, %v1428
      %v1467 = vsub.f32 %v1317, %v1431
      %v1468 = vsub.f32 %v1382, %v1431
      %v1469 = vsub.f32 %v1320, %v1434
      %v1470 = vsub.f32 %v1385, %v1434
      %v1471 = vsub.f32 %v1323, %v1437
      %v1472 = vsub.f32 %v1388, %v1437
      %v1473 = vsub.f32 %v1326, %v1440
      %v1474 = vsub.f32 %v1391, %v1440
      %v1475 = vsub.f32 %v1329, %v1443
      %v1476 = vsub.f32 %v1394, %v1443
      %v1477 = vsub.f32 %v1332, %v1446
      %v1478 = vsub.f32 %v1397, %v1446
      %v1479 = vmul.f32 %v1447, 1.442695
      %v1480 = vpow.pop %v1479
      %v1481 = vmul.f32 %v1448, 1.442695
      %v1482 = vpow.pop %v1481
      %v1483 = vmul.f32 %v1449, 1.442695
      %v1484 = vpow.pop %v1483
      %v1485 = vmul.f32 %v1450, 1.442695
      %v1486 = vpow.pop %v1485
      %v1487 = vmul.f32 %v1451, 1.442695
      %v1488 = vpow.pop %v1487
      %v1489 = vmul.f32 %v1452, 1.442695
      %v1490 = vpow.pop %v1489
      %v1491 = vmul.f32 %v1453, 1.442695
      %v1492 = vpow.pop %v1491
      %v1493 = vmul.f32 %v1454, 1.442695
      %v1494 = vpow.pop %v1493
      %v1495 = vmul.f32 %v1455, 1.442695
      %v1496 = vpow.pop %v1495
      %v1497 = vmul.f32 %v1456, 1.442695
      %v1498 = vpow.pop %v1497
      %v1499 = vmul.f32 %v1457, 1.442695
      %v1500 = vpow.pop %v1499
      %v1501 = vmul.f32 %v1458, 1.442695
      %v1502 = vpow.pop %v1501
      %v1503 = vmul.f32 %v1459, 1.442695
      %v1504 = vpow.pop %v1503
      %v1505 = vmul.f32 %v1460, 1.442695
      %v1506 = vpow.pop %v1505
      %v1507 = vmul.f32 %v1461, 1.442695
      %v1508 = vpow.pop %v1507
      %v1509 = vmul.f32 %v1462, 1.442695
      %v1510 = vpow.pop %v1509
      %v1511 = vmul.f32 %v1463, 1.442695
      %v1512 = vpow.pop %v1511
      %v1513 = vmul.f32 %v1464, 1.442695
      %v1514 = vpow.pop %v1513
      %v1515 = vmul.f32 %v1465, 1.442695
      %v1516 = vpow.pop %v1515
      %v1517 = vmul.f32 %v1466, 1.442695
      %v1518 = vpow.pop %v1517
      %v1519 = vmul.f32 %v1467, 1.442695
      %v1520 = vpow.pop %v1519
      %v1521 = vmul.f32 %v1468, 1.442695
      %v1522 = vpow.pop %v1521
      %v1523 = vmul.f32 %v1469, 1.442695
      %v1524 = vpow.pop %v1523
      %v1525 = vmul.f32 %v1470, 1.442695
      %v1526 = vpow.pop %v1525
      %v1527 = vmul.f32 %v1471, 1.442695
      %v1528 = vpow.pop %v1527
      %v1529 = vmul.f32 %v1472, 1.442695
      %v1530 = vpow.pop %v1529
      %v1531 = vmul.f32 %v1473, 1.442695
      %v1532 = vpow.pop %v1531
      %v1533 = vmul.f32 %v1474, 1.442695
      %v1534 = vpow.pop %v1533
      %v1535 = vmul.f32 %v1475, 1.442695
      %v1536 = vpow.pop %v1535
      %v1537 = vmul.f32 %v1476, 1.442695
      %v1538 = vpow.pop %v1537
      %v1539 = vmul.f32 %v1477, 1.442695
      %v1540 = vpow.pop %v1539
      %v1541 = vmul.f32 %v1478, 1.442695
      %v1542 = vpow.pop %v1541
      %v1543 = vadd.f32 %v1480, %v1482
      %1544 = vadd.xlane.f32.xlu0 %v1543
      %v1545 = vpop.xlane.xlu0 %1544
      %v1546 = vadd.f32 %v1484, %v1486
      %1547 = vadd.xlane.f32.xlu0 %v1546
      %v1548 = vpop.xlane.xlu0 %1547
      %v1549 = vadd.f32 %v1488, %v1490
      %1550 = vadd.xlane.f32.xlu0 %v1549
      %v1551 = vpop.xlane.xlu0 %1550
      %v1552 = vadd.f32 %v1492, %v1494
      %1553 = vadd.xlane.f32.xlu0 %v1552
      %v1554 = vpop.xlane.xlu0 %1553
      %v1555 = vadd.f32 %v1496, %v1498
      %1556 = vadd.xlane.f32.xlu0 %v1555
      %v1557 = vpop.xlane.xlu0 %1556
      %v1558 = vadd.f32 %v1500, %v1502
      %1559 = vadd.xlane.f32.xlu0 %v1558
      %v1560 = vpop.xlane.xlu0 %1559
      %v1561 = vadd.f32 %v1504, %v1506
      %1562 = vadd.xlane.f32.xlu0 %v1561
      %v1563 = vpop.xlane.xlu0 %1562
      %v1564 = vadd.f32 %v1508, %v1510
      %1565 = vadd.xlane.f32.xlu0 %v1564
      %v1566 = vpop.xlane.xlu0 %1565
      %v1567 = vadd.f32 %v1512, %v1514
      %1568 = vadd.xlane.f32.xlu0 %v1567
      %v1569 = vpop.xlane.xlu0 %1568
      %v1570 = vadd.f32 %v1516, %v1518
      %1571 = vadd.xlane.f32.xlu0 %v1570
      %v1572 = vpop.xlane.xlu0 %1571
      %v1573 = vadd.f32 %v1520, %v1522
      %1574 = vadd.xlane.f32.xlu0 %v1573
      %v1575 = vpop.xlane.xlu0 %1574
      %v1576 = vadd.f32 %v1524, %v1526
      %1577 = vadd.xlane.f32.xlu0 %v1576
      %v1578 = vpop.xlane.xlu0 %1577
      %v1579 = vadd.f32 %v1528, %v1530
      %1580 = vadd.xlane.f32.xlu0 %v1579
      %v1581 = vpop.xlane.xlu0 %1580
      %v1582 = vadd.f32 %v1532, %v1534
      %1583 = vadd.xlane.f32.xlu0 %v1582
      %v1584 = vpop.xlane.xlu0 %1583
      %v1585 = vadd.f32 %v1536, %v1538
      %1586 = vadd.xlane.f32.xlu0 %v1585
      %v1587 = vpop.xlane.xlu0 %1586
      %v1588 = vadd.f32 %v1540, %v1542
      %1589 = vadd.xlane.f32.xlu0 %v1588
      %v1590 = vpop.xlane.xlu0 %1589
      %v1591 = vrcp.pop %v1545
      %v1592 = vrcp.pop %v1548
      %v1593 = vrcp.pop %v1551
      %v1594 = vrcp.pop %v1554
      %v1595 = vrcp.pop %v1557
      %v1596 = vrcp.pop %v1560
      %v1597 = vrcp.pop %v1563
      %v1598 = vrcp.pop %v1566
      %v1599 = vrcp.pop %v1569
      %v1600 = vrcp.pop %v1572
      %v1601 = vrcp.pop %v1575
      %v1602 = vrcp.pop %v1578
      %v1603 = vrcp.pop %v1581
      %v1604 = vrcp.pop %v1584
      %v1605 = vrcp.pop %v1587
      %v1606 = vrcp.pop %v1590
      %v1607 = vmul.f32 %v1480, %v1591
      %v1608 = vmul.f32 %v1482, %v1591
      %v1609 = vmul.f32 %v1484, %v1592
      %v1610 = vmul.f32 %v1486, %v1592
      %v1611 = vmul.f32 %v1488, %v1593
      %v1612 = vmul.f32 %v1490, %v1593
      %v1613 = vmul.f32 %v1492, %v1594
      %v1614 = vmul.f32 %v1494, %v1594
      %v1615 = vmul.f32 %v1496, %v1595
      %v1616 = vmul.f32 %v1498, %v1595
      %v1617 = vmul.f32 %v1500, %v1596
      %v1618 = vmul.f32 %v1502, %v1596
      %v1619 = vmul.f32 %v1504, %v1597
      %v1620 = vmul.f32 %v1506, %v1597
      %v1621 = vmul.f32 %v1508, %v1598
      %v1622 = vmul.f32 %v1510, %v1598
      %v1623 = vmul.f32 %v1512, %v1599
      %v1624 = vmul.f32 %v1514, %v1599
      %v1625 = vmul.f32 %v1516, %v1600
      %v1626 = vmul.f32 %v1518, %v1600
      %v1627 = vmul.f32 %v1520, %v1601
      %v1628 = vmul.f32 %v1522, %v1601
      %v1629 = vmul.f32 %v1524, %v1602
      %v1630 = vmul.f32 %v1526, %v1602
      %v1631 = vmul.f32 %v1528, %v1603
      %v1632 = vmul.f32 %v1530, %v1603
      %v1633 = vmul.f32 %v1532, %v1604
      %v1634 = vmul.f32 %v1534, %v1604
      %v1635 = vmul.f32 %v1536, %v1605
      %v1636 = vmul.f32 %v1538, %v1605
      %v1637 = vmul.f32 %v1540, %v1606
      %v1638 = vmul.f32 %v1542, %v1606
      %1639 = vmatpush.xpose.msra.mxu0 %v1637
      %1640 = vmatpush.xpose.msra.mxu0 %v1635
      %1641 = vmatpush.xpose.msra.mxu0 %v1633
      %1642 = vmatpush.xpose.msra.mxu0 %v1631
      %1643 = vmatpush.xpose.msra.mxu0 %v1629
      %1644 = vmatpush.xpose.msra.mxu0 %v1627
      %1645 = vmatpush.xpose.msra.mxu0 %v1625
      %1646 = vmatpush.xpose.msra.mxu0 %v1623
      %1647 = vmatpush.xpose.msra.mxu0 %v1621
      %1648 = vmatpush.xpose.msra.mxu0 %v1619
      %1649 = vmatpush.xpose.msra.mxu0 %v1617
      %1650 = vmatpush.xpose.msra.mxu0 %v1615
      %1651 = vmatpush.xpose.msra.mxu0 %v1613
      %1652 = vmatpush.xpose.msra.mxu0 %v1611
      %1653 = vmatpush.xpose.msra.mxu0 %v1609
      %1654 = vmatpush.xpose.msra.mxu0 %v1607
      %1655 = vmatmul.f32.gmra.mxu0 %v635
      %v1656 = vpop.f32.mrf.mxu0
      %v1657 = vadd.f32 0.0, %v1656
      %1658 = vdwg.mxu0
      %1659 = vmatpush.xpose.msra.mxu0 %v1638
      %1660 = vmatpush.xpose.msra.mxu0 %v1636
      %1661 = vmatpush.xpose.msra.mxu0 %v1634
      %1662 = vmatpush.xpose.msra.mxu0 %v1632
      %1663 = vmatpush.xpose.msra.mxu0 %v1630
      %1664 = vmatpush.xpose.msra.mxu0 %v1628
      %1665 = vmatpush.xpose.msra.mxu0 %v1626
      %1666 = vmatpush.xpose.msra.mxu0 %v1624
      %1667 = vmatpush.xpose.msra.mxu0 %v1622
      %1668 = vmatpush.xpose.msra.mxu0 %v1620
      %1669 = vmatpush.xpose.msra.mxu0 %v1618
      %1670 = vmatpush.xpose.msra.mxu0 %v1616
      %1671 = vmatpush.xpose.msra.mxu0 %v1614
      %1672 = vmatpush.xpose.msra.mxu0 %v1612
      %1673 = vmatpush.xpose.msra.mxu0 %v1610
      %1674 = vmatpush.xpose.msra.mxu0 %v1608
      %1675 = vmatmul.f32.gmra.mxu0 %v655
      %v1676 = vpop.f32.mrf.mxu0
      %v1677 = vadd.f32 %v1657, %v1676
      %1678 = vdwg.mxu0
      %1679 = vmatpush.msra.mxu0 0.0
      %1680 = vmatpush.msra.mxu0 0.0
      %1681 = vmatpush.msra.mxu0 0.0
      %1682 = vmatpush.msra.mxu0 0.0
      %1683 = vmatpush.msra.mxu0 0.0
      %1684 = vmatpush.msra.mxu0 0.0
      %1685 = vmatpush.msra.mxu0 0.0
      %1686 = vmatpush.msra.mxu0 0.0
      %1687 = vmatpush.msra.mxu0 0.0
      %1688 = vmatpush.msra.mxu0 0.0
      %1689 = vmatpush.msra.mxu0 0.0
      %1690 = vmatpush.msra.mxu0 0.0
      %1691 = vmatpush.msra.mxu0 0.0
      %1692 = vmatpush.msra.mxu0 0.0
      %1693 = vmatpush.msra.mxu0 0.0
      %1694 = vmatpush.msra.mxu0 %v1677
      %1695 = vmatmul.f32.gmra.mxu0 %v1149
      %v1696 = vpop.f32.mrf.mxu0
      %v1697 = vadd.f32 0.0, %v1696
      %1698 = vmatmul.f32.gmra.mxu0 %v1152
      %v1699 = vpop.f32.mrf.mxu0
      %v1700 = vadd.f32 0.0, %v1699
      %1701 = vmatmul.f32.gmra.mxu0 %v1155
      %v1702 = vpop.f32.mrf.mxu0
      %v1703 = vadd.f32 0.0, %v1702
      %1704 = vmatmul.f32.gmra.mxu0 %v1158
      %v1705 = vpop.f32.mrf.mxu0
      %v1706 = vadd.f32 0.0, %v1705
      %1707 = vdwg.mxu0
      %v1708 = vadd.f32 %v483, %v1178
      %v1709 = vadd.f32 %v483, %v1697
      %v1710 = vadd.f32 %v488, %v1181
      %v1711 = vadd.f32 %v488, %v1700
      %v1712 = vadd.f32 %v493, %v1184
      %v1713 = vadd.f32 %v493, %v1703
      %v1714 = vadd.f32 %v498, %v1187
      %v1715 = vadd.f32 %v498, %v1706
      %s1716 = scalar_lea.vmem %s1, 24
      %v1717 = vld [vmem:[%s1716] sm:$0xff]
      %v1718 = vld [vmem:[%s1716 + $0x8] sm:$0xff]
      %v1719 = vld [vmem:[%s1716 + $0x10] sm:$0xff]
      %s1720 = scalar_lea.vmem %s2, 24
      %v1721 = vld [vmem:[%s1720] sm:$0xff]
      %v1722 = vld [vmem:[%s1720 + $0x8] sm:$0xff]
      %v1723 = vld [vmem:[%s1720 + $0x10] sm:$0xff]
      %s1724 = scalar_lea.vmem %s3, 32
      %v1725 = vld [vmem:[%s1724] sm:$0xff]
      %v1726 = vld [vmem:[%s1724 + $0x8] sm:$0xff]
      %v1727 = vld [vmem:[%s1724 + $0x10] sm:$0xff]
      %v1728 = vld [vmem:[%s1724 + $0x18] sm:$0xff]
      %1730 = vset.pattern.permute.xlu0 0
      %1731 = vperm.xlu0 %1730, %v1721
      %v1732 = vpop.permute.xlu0 %1731
      %v1735 = vsel %vm515, %v1717, 0
      %1737 = vmatpush.msra.mxu0 0.0
      %1738 = vmatpush.msra.mxu0 0.0
      %1739 = vmatpush.msra.mxu0 0.0
      %1740 = vmatpush.msra.mxu0 0.0
      %1741 = vmatpush.msra.mxu0 0.0
      %1742 = vmatpush.msra.mxu0 0.0
      %1743 = vmatpush.msra.mxu0 0.0
      %1744 = vmatpush.msra.mxu0 0.0
      %1745 = vmatpush.msra.mxu0 0.0
      %1746 = vmatpush.msra.mxu0 0.0
      %1747 = vmatpush.msra.mxu0 0.0
      %1748 = vmatpush.msra.mxu0 0.0
      %1749 = vmatpush.msra.mxu0 %v478
      %1750 = vmatpush.msra.mxu0 %v476
      %1751 = vmatpush.msra.mxu0 %v474
      %1752 = vmatpush.msra.mxu0 %v472
      %1753 = vmatmul.f32.gmra.mxu0 %v1735
      %v1754 = vpop.f32.mrf.mxu0
      %v1755 = vadd.f32 %v1732, %v1754
      %1756 = vdwg.mxu0
      %1757 = vmatpush.msra.mxu0 0.0
      %1758 = vmatpush.msra.mxu0 0.0
      %1759 = vmatpush.msra.mxu0 0.0
      %1760 = vmatpush.msra.mxu0 0.0
      %1761 = vmatpush.msra.mxu0 0.0
      %1762 = vmatpush.msra.mxu0 0.0
      %1763 = vmatpush.msra.mxu0 0.0
      %1764 = vmatpush.msra.mxu0 0.0
      %1765 = vmatpush.msra.mxu0 0.0
      %1766 = vmatpush.msra.mxu0 0.0
      %1767 = vmatpush.msra.mxu0 0.0
      %1768 = vmatpush.msra.mxu0 0.0
      %1769 = vmatpush.msra.mxu0 %v479
      %1770 = vmatpush.msra.mxu0 %v477
      %1771 = vmatpush.msra.mxu0 %v475
      %1772 = vmatpush.msra.mxu0 %v473
      %1773 = vmatmul.f32.gmra.mxu0 %v1735
      %v1774 = vpop.f32.mrf.mxu0
      %v1775 = vadd.f32 %v1732, %v1774
      %1776 = vdwg.mxu0
      %v1777 = vmul.f32 %v1755, 0.35355338
      %v1778 = vmul.f32 %v1775, 0.35355338
      %1780 = vset.pattern.permute.xlu0 0
      %1781 = vperm.xlu0 %1780, %v1722
      %v1782 = vpop.permute.xlu0 %1781
      %v1785 = vsel %vm515, %v1718, 0
      %1787 = vmatpush.msra.mxu0 0.0
      %1788 = vmatpush.msra.mxu0 0.0
      %1789 = vmatpush.msra.mxu0 0.0
      %1790 = vmatpush.msra.mxu0 0.0
      %1791 = vmatpush.msra.mxu0 0.0
      %1792 = vmatpush.msra.mxu0 0.0
      %1793 = vmatpush.msra.mxu0 0.0
      %1794 = vmatpush.msra.mxu0 0.0
      %1795 = vmatpush.msra.mxu0 0.0
      %1796 = vmatpush.msra.mxu0 0.0
      %1797 = vmatpush.msra.mxu0 0.0
      %1798 = vmatpush.msra.mxu0 0.0
      %1799 = vmatpush.msra.mxu0 %v478
      %1800 = vmatpush.msra.mxu0 %v476
      %1801 = vmatpush.msra.mxu0 %v474
      %1802 = vmatpush.msra.mxu0 %v472
      %1803 = vmatmul.f32.gmra.mxu0 %v1785
      %v1804 = vpop.f32.mrf.mxu0
      %v1805 = vadd.f32 %v1782, %v1804
      %1806 = vdwg.mxu0
      %1807 = vmatpush.msra.mxu0 0.0
      %1808 = vmatpush.msra.mxu0 0.0
      %1809 = vmatpush.msra.mxu0 0.0
      %1810 = vmatpush.msra.mxu0 0.0
      %1811 = vmatpush.msra.mxu0 0.0
      %1812 = vmatpush.msra.mxu0 0.0
      %1813 = vmatpush.msra.mxu0 0.0
      %1814 = vmatpush.msra.mxu0 0.0
      %1815 = vmatpush.msra.mxu0 0.0
      %1816 = vmatpush.msra.mxu0 0.0
      %1817 = vmatpush.msra.mxu0 0.0
      %1818 = vmatpush.msra.mxu0 0.0
      %1819 = vmatpush.msra.mxu0 %v479
      %1820 = vmatpush.msra.mxu0 %v477
      %1821 = vmatpush.msra.mxu0 %v475
      %1822 = vmatpush.msra.mxu0 %v473
      %1823 = vmatmul.f32.gmra.mxu0 %v1785
      %v1824 = vpop.f32.mrf.mxu0
      %v1825 = vadd.f32 %v1782, %v1824
      %1826 = vdwg.mxu0
      %1828 = vset.pattern.permute.xlu0 0
      %1829 = vperm.xlu0 %1828, %v1723
      %v1830 = vpop.permute.xlu0 %1829
      %v1833 = vsel %vm515, %v1719, 0
      %1835 = vmatpush.msra.mxu0 0.0
      %1836 = vmatpush.msra.mxu0 0.0
      %1837 = vmatpush.msra.mxu0 0.0
      %1838 = vmatpush.msra.mxu0 0.0
      %1839 = vmatpush.msra.mxu0 0.0
      %1840 = vmatpush.msra.mxu0 0.0
      %1841 = vmatpush.msra.mxu0 0.0
      %1842 = vmatpush.msra.mxu0 0.0
      %1843 = vmatpush.msra.mxu0 0.0
      %1844 = vmatpush.msra.mxu0 0.0
      %1845 = vmatpush.msra.mxu0 0.0
      %1846 = vmatpush.msra.mxu0 0.0
      %1847 = vmatpush.msra.mxu0 %v478
      %1848 = vmatpush.msra.mxu0 %v476
      %1849 = vmatpush.msra.mxu0 %v474
      %1850 = vmatpush.msra.mxu0 %v472
      %1851 = vmatmul.f32.gmra.mxu0 %v1833
      %v1852 = vpop.f32.mrf.mxu0
      %v1853 = vadd.f32 %v1830, %v1852
      %1854 = vdwg.mxu0
      %1855 = vmatpush.msra.mxu0 0.0
      %1856 = vmatpush.msra.mxu0 0.0
      %1857 = vmatpush.msra.mxu0 0.0
      %1858 = vmatpush.msra.mxu0 0.0
      %1859 = vmatpush.msra.mxu0 0.0
      %1860 = vmatpush.msra.mxu0 0.0
      %1861 = vmatpush.msra.mxu0 0.0
      %1862 = vmatpush.msra.mxu0 0.0
      %1863 = vmatpush.msra.mxu0 0.0
      %1864 = vmatpush.msra.mxu0 0.0
      %1865 = vmatpush.msra.mxu0 0.0
      %1866 = vmatpush.msra.mxu0 0.0
      %1867 = vmatpush.msra.mxu0 %v479
      %1868 = vmatpush.msra.mxu0 %v477
      %1869 = vmatpush.msra.mxu0 %v475
      %1870 = vmatpush.msra.mxu0 %v473
      %1871 = vmatmul.f32.gmra.mxu0 %v1833
      %v1872 = vpop.f32.mrf.mxu0
      %v1873 = vadd.f32 %v1830, %v1872
      %1874 = vdwg.mxu0
      %1875 = vxpose.xlu0.b32.start [1/16] %v1777, 128
      %1876 = vxpose.xlu0.b32.cont [2/16] 0.0, 128
      %1877 = vxpose.xlu0.b32.cont [3/16] 0.0, 128
      %1878 = vxpose.xlu0.b32.cont [4/16] 0.0, 128
      %1879 = vxpose.xlu0.b32.cont [5/16] 0.0, 128
      %1880 = vxpose.xlu0.b32.cont [6/16] 0.0, 128
      %1881 = vxpose.xlu0.b32.cont [7/16] 0.0, 128
      %1882 = vxpose.xlu0.b32.cont [8/16] 0.0, 128
      %1883 = vxpose.xlu0.b32.cont [9/16] 0.0, 128
      %1884 = vxpose.xlu0.b32.cont [10/16] 0.0, 128
      %1885 = vxpose.xlu0.b32.cont [11/16] 0.0, 128
      %1886 = vxpose.xlu0.b32.cont [12/16] 0.0, 128
      %1887 = vxpose.xlu0.b32.cont [13/16] 0.0, 128
      %1888 = vxpose.xlu0.b32.cont [14/16] 0.0, 128
      %1889 = vxpose.xlu0.b32.cont [15/16] 0.0, 128
      %1890 = vxpose.xlu0.b32.end [16/16] 0.0, 128
      %v1891 = vpop.trf.xlu0
      %v1892 = vpop.trf.xlu0
      %v1893 = vpop.trf.xlu0
      %v1894 = vpop.trf.xlu0
      %v1895 = vpop.trf.xlu0
      %v1896 = vpop.trf.xlu0
      %v1897 = vpop.trf.xlu0
      %v1898 = vpop.trf.xlu0
      %v1899 = vpop.trf.xlu0
      %v1900 = vpop.trf.xlu0
      %v1901 = vpop.trf.xlu0
      %v1902 = vpop.trf.xlu0
      %v1903 = vpop.trf.xlu0
      %v1904 = vpop.trf.xlu0
      %v1905 = vpop.trf.xlu0
      %v1906 = vpop.trf.xlu0
      %v1908 = vsel %vm689, %v1891, 0
      %v1911 = vsel %vm689, %v1892, 0
      %v1914 = vsel %vm689, %v1893, 0
      %v1917 = vsel %vm689, %v1894, 0
      %v1920 = vsel %vm689, %v1895, 0
      %v1923 = vsel %vm689, %v1896, 0
      %v1926 = vsel %vm689, %v1897, 0
      %v1929 = vsel %vm689, %v1898, 0
      %v1932 = vsel %vm689, %v1899, 0
      %v1935 = vsel %vm689, %v1900, 0
      %v1938 = vsel %vm689, %v1901, 0
      %v1941 = vsel %vm689, %v1902, 0
      %v1944 = vsel %vm689, %v1903, 0
      %v1947 = vsel %vm689, %v1904, 0
      %v1950 = vsel %vm689, %v1905, 0
      %v1953 = vsel %vm689, %v1906, 0
      %1955 = vmatpush.msra.mxu0 0.0
      %1956 = vmatpush.msra.mxu0 0.0
      %1957 = vmatpush.msra.mxu0 0.0
      %1958 = vmatpush.msra.mxu0 0.0
      %1959 = vmatpush.msra.mxu0 0.0
      %1960 = vmatpush.msra.mxu0 0.0
      %1961 = vmatpush.msra.mxu0 0.0
      %1962 = vmatpush.msra.mxu0 0.0
      %1963 = vmatpush.msra.mxu0 0.0
      %1964 = vmatpush.msra.mxu0 0.0
      %1965 = vmatpush.msra.mxu0 0.0
      %1966 = vmatpush.msra.mxu0 0.0
      %1967 = vmatpush.msra.mxu0 0.0
      %1968 = vmatpush.msra.mxu0 0.0
      %1969 = vmatpush.msra.mxu0 0.0
      %1970 = vmatpush.msra.mxu0 %v1805
      %1971 = vmatmul.f32.gmra.mxu0 %v1908
      %v1972 = vpop.f32.mrf.mxu0
      %v1973 = vadd.f32 0.0, %v1972
      %1974 = vmatmul.f32.gmra.mxu0 %v1911
      %v1975 = vpop.f32.mrf.mxu0
      %v1976 = vadd.f32 0.0, %v1975
      %1977 = vmatmul.f32.gmra.mxu0 %v1914
      %v1978 = vpop.f32.mrf.mxu0
      %v1979 = vadd.f32 0.0, %v1978
      %1980 = vmatmul.f32.gmra.mxu0 %v1917
      %v1981 = vpop.f32.mrf.mxu0
      %v1982 = vadd.f32 0.0, %v1981
      %1983 = vmatmul.f32.gmra.mxu0 %v1920
      %v1984 = vpop.f32.mrf.mxu0
      %v1985 = vadd.f32 0.0, %v1984
      %1986 = vmatmul.f32.gmra.mxu0 %v1923
      %v1987 = vpop.f32.mrf.mxu0
      %v1988 = vadd.f32 0.0, %v1987
      %1989 = vmatmul.f32.gmra.mxu0 %v1926
      %v1990 = vpop.f32.mrf.mxu0
      %v1991 = vadd.f32 0.0, %v1990
      %1992 = vmatmul.f32.gmra.mxu0 %v1929
      %v1993 = vpop.f32.mrf.mxu0
      %v1994 = vadd.f32 0.0, %v1993
      %1995 = vmatmul.f32.gmra.mxu0 %v1932
      %v1996 = vpop.f32.mrf.mxu0
      %v1997 = vadd.f32 0.0, %v1996
      %1998 = vmatmul.f32.gmra.mxu0 %v1935
      %v1999 = vpop.f32.mrf.mxu0
      %v2000 = vadd.f32 0.0, %v1999
      %2001 = vmatmul.f32.gmra.mxu0 %v1938
      %v2002 = vpop.f32.mrf.mxu0
      %v2003 = vadd.f32 0.0, %v2002
      %2004 = vmatmul.f32.gmra.mxu0 %v1941
      %v2005 = vpop.f32.mrf.mxu0
      %v2006 = vadd.f32 0.0, %v2005
      %2007 = vmatmul.f32.gmra.mxu0 %v1944
      %v2008 = vpop.f32.mrf.mxu0
      %v2009 = vadd.f32 0.0, %v2008
      %2010 = vmatmul.f32.gmra.mxu0 %v1947
      %v2011 = vpop.f32.mrf.mxu0
      %v2012 = vadd.f32 0.0, %v2011
      %2013 = vmatmul.f32.gmra.mxu0 %v1950
      %v2014 = vpop.f32.mrf.mxu0
      %v2015 = vadd.f32 0.0, %v2014
      %2016 = vmatmul.f32.gmra.mxu0 %v1953
      %v2017 = vpop.f32.mrf.mxu0
      %v2018 = vadd.f32 0.0, %v2017
      %2019 = vdwg.mxu0
      %2020 = vmatpush.msra.mxu0 0.0
      %2021 = vmatpush.msra.mxu0 0.0
      %2022 = vmatpush.msra.mxu0 0.0
      %2023 = vmatpush.msra.mxu0 0.0
      %2024 = vmatpush.msra.mxu0 0.0
      %2025 = vmatpush.msra.mxu0 0.0
      %2026 = vmatpush.msra.mxu0 0.0
      %2027 = vmatpush.msra.mxu0 0.0
      %2028 = vmatpush.msra.mxu0 0.0
      %2029 = vmatpush.msra.mxu0 0.0
      %2030 = vmatpush.msra.mxu0 0.0
      %2031 = vmatpush.msra.mxu0 0.0
      %2032 = vmatpush.msra.mxu0 0.0
      %2033 = vmatpush.msra.mxu0 0.0
      %2034 = vmatpush.msra.mxu0 0.0
      %2035 = vmatpush.msra.mxu0 %v1825
      %2036 = vmatmul.f32.gmra.mxu0 %v1908
      %v2037 = vpop.f32.mrf.mxu0
      %v2038 = vadd.f32 0.0, %v2037
      %2039 = vmatmul.f32.gmra.mxu0 %v1911
      %v2040 = vpop.f32.mrf.mxu0
      %v2041 = vadd.f32 0.0, %v2040
      %2042 = vmatmul.f32.gmra.mxu0 %v1914
      %v2043 = vpop.f32.mrf.mxu0
      %v2044 = vadd.f32 0.0, %v2043
      %2045 = vmatmul.f32.gmra.mxu0 %v1917
      %v2046 = vpop.f32.mrf.mxu0
      %v2047 = vadd.f32 0.0, %v2046
      %2048 = vmatmul.f32.gmra.mxu0 %v1920
      %v2049 = vpop.f32.mrf.mxu0
      %v2050 = vadd.f32 0.0, %v2049
      %2051 = vmatmul.f32.gmra.mxu0 %v1923
      %v2052 = vpop.f32.mrf.mxu0
      %v2053 = vadd.f32 0.0, %v2052
      %2054 = vmatmul.f32.gmra.mxu0 %v1926
      %v2055 = vpop.f32.mrf.mxu0
      %v2056 = vadd.f32 0.0, %v2055
      %2057 = vmatmul.f32.gmra.mxu0 %v1929
      %v2058 = vpop.f32.mrf.mxu0
      %v2059 = vadd.f32 0.0, %v2058
      %2060 = vmatmul.f32.gmra.mxu0 %v1932
      %v2061 = vpop.f32.mrf.mxu0
      %v2062 = vadd.f32 0.0, %v2061
      %2063 = vmatmul.f32.gmra.mxu0 %v1935
      %v2064 = vpop.f32.mrf.mxu0
      %v2065 = vadd.f32 0.0, %v2064
      %2066 = vmatmul.f32.gmra.mxu0 %v1938
      %v2067 = vpop.f32.mrf.mxu0
      %v2068 = vadd.f32 0.0, %v2067
      %2069 = vmatmul.f32.gmra.mxu0 %v1941
      %v2070 = vpop.f32.mrf.mxu0
      %v2071 = vadd.f32 0.0, %v2070
      %2072 = vmatmul.f32.gmra.mxu0 %v1944
      %v2073 = vpop.f32.mrf.mxu0
      %v2074 = vadd.f32 0.0, %v2073
      %2075 = vmatmul.f32.gmra.mxu0 %v1947
      %v2076 = vpop.f32.mrf.mxu0
      %v2077 = vadd.f32 0.0, %v2076
      %2078 = vmatmul.f32.gmra.mxu0 %v1950
      %v2079 = vpop.f32.mrf.mxu0
      %v2080 = vadd.f32 0.0, %v2079
      %2081 = vmatmul.f32.gmra.mxu0 %v1953
      %v2082 = vpop.f32.mrf.mxu0
      %v2083 = vadd.f32 0.0, %v2082
      %2084 = vdwg.mxu0
      %v2085 = vmax.f32 %v1973, %v2038
      %2086 = vmax.xlane.f32.xlu0 %v2085
      %v2087 = vpop.xlane.xlu0 %2086
      %v2088 = vmax.f32 %v1976, %v2041
      %2089 = vmax.xlane.f32.xlu0 %v2088
      %v2090 = vpop.xlane.xlu0 %2089
      %v2091 = vmax.f32 %v1979, %v2044
      %2092 = vmax.xlane.f32.xlu0 %v2091
      %v2093 = vpop.xlane.xlu0 %2092
      %v2094 = vmax.f32 %v1982, %v2047
      %2095 = vmax.xlane.f32.xlu0 %v2094
      %v2096 = vpop.xlane.xlu0 %2095
      %v2097 = vmax.f32 %v1985, %v2050
      %2098 = vmax.xlane.f32.xlu0 %v2097
      %v2099 = vpop.xlane.xlu0 %2098
      %v2100 = vmax.f32 %v1988, %v2053
      %2101 = vmax.xlane.f32.xlu0 %v2100
      %v2102 = vpop.xlane.xlu0 %2101
      %v2103 = vmax.f32 %v1991, %v2056
      %2104 = vmax.xlane.f32.xlu0 %v2103
      %v2105 = vpop.xlane.xlu0 %2104
      %v2106 = vmax.f32 %v1994, %v2059
      %2107 = vmax.xlane.f32.xlu0 %v2106
      %v2108 = vpop.xlane.xlu0 %2107
      %v2109 = vmax.f32 %v1997, %v2062
      %2110 = vmax.xlane.f32.xlu0 %v2109
      %v2111 = vpop.xlane.xlu0 %2110
      %v2112 = vmax.f32 %v2000, %v2065
      %2113 = vmax.xlane.f32.xlu0 %v2112
      %v2114 = vpop.xlane.xlu0 %2113
      %v2115 = vmax.f32 %v2003, %v2068
      %2116 = vmax.xlane.f32.xlu0 %v2115
      %v2117 = vpop.xlane.xlu0 %2116
      %v2118 = vmax.f32 %v2006, %v2071
      %2119 = vmax.xlane.f32.xlu0 %v2118
      %v2120 = vpop.xlane.xlu0 %2119
      %v2121 = vmax.f32 %v2009, %v2074
      %2122 = vmax.xlane.f32.xlu0 %v2121
      %v2123 = vpop.xlane.xlu0 %2122
      %v2124 = vmax.f32 %v2012, %v2077
      %2125 = vmax.xlane.f32.xlu0 %v2124
      %v2126 = vpop.xlane.xlu0 %2125
      %v2127 = vmax.f32 %v2015, %v2080
      %2128 = vmax.xlane.f32.xlu0 %v2127
      %v2129 = vpop.xlane.xlu0 %2128
      %v2130 = vmax.f32 %v2018, %v2083
      %2131 = vmax.xlane.f32.xlu0 %v2130
      %v2132 = vpop.xlane.xlu0 %2131
      %v2133 = vsub.f32 %v1973, %v2087
      %v2134 = vsub.f32 %v2038, %v2087
      %v2135 = vsub.f32 %v1976, %v2090
      %v2136 = vsub.f32 %v2041, %v2090
      %v2137 = vsub.f32 %v1979, %v2093
      %v2138 = vsub.f32 %v2044, %v2093
      %v2139 = vsub.f32 %v1982, %v2096
      %v2140 = vsub.f32 %v2047, %v2096
      %v2141 = vsub.f32 %v1985, %v2099
      %v2142 = vsub.f32 %v2050, %v2099
      %v2143 = vsub.f32 %v1988, %v2102
      %v2144 = vsub.f32 %v2053, %v2102
      %v2145 = vsub.f32 %v1991, %v2105
      %v2146 = vsub.f32 %v2056, %v2105
      %v2147 = vsub.f32 %v1994, %v2108
      %v2148 = vsub.f32 %v2059, %v2108
      %v2149 = vsub.f32 %v1997, %v2111
      %v2150 = vsub.f32 %v2062, %v2111
      %v2151 = vsub.f32 %v2000, %v2114
      %v2152 = vsub.f32 %v2065, %v2114
      %v2153 = vsub.f32 %v2003, %v2117
      %v2154 = vsub.f32 %v2068, %v2117
      %v2155 = vsub.f32 %v2006, %v2120
      %v2156 = vsub.f32 %v2071, %v2120
      %v2157 = vsub.f32 %v2009, %v2123
      %v2158 = vsub.f32 %v2074, %v2123
      %v2159 = vsub.f32 %v2012, %v2126
      %v2160 = vsub.f32 %v2077, %v2126
      %v2161 = vsub.f32 %v2015, %v2129
      %v2162 = vsub.f32 %v2080, %v2129
      %v2163 = vsub.f32 %v2018, %v2132
      %v2164 = vsub.f32 %v2083, %v2132
      %v2165 = vmul.f32 %v2133, 1.442695
      %v2166 = vpow.pop %v2165
      %v2167 = vmul.f32 %v2134, 1.442695
      %v2168 = vpow.pop %v2167
      %v2169 = vmul.f32 %v2135, 1.442695
      %v2170 = vpow.pop %v2169
      %v2171 = vmul.f32 %v2136, 1.442695
      %v2172 = vpow.pop %v2171
      %v2173 = vmul.f32 %v2137, 1.442695
      %v2174 = vpow.pop %v2173
      %v2175 = vmul.f32 %v2138, 1.442695
      %v2176 = vpow.pop %v2175
      %v2177 = vmul.f32 %v2139, 1.442695
      %v2178 = vpow.pop %v2177
      %v2179 = vmul.f32 %v2140, 1.442695
      %v2180 = vpow.pop %v2179
      %v2181 = vmul.f32 %v2141, 1.442695
      %v2182 = vpow.pop %v2181
      %v2183 = vmul.f32 %v2142, 1.442695
      %v2184 = vpow.pop %v2183
      %v2185 = vmul.f32 %v2143, 1.442695
      %v2186 = vpow.pop %v2185
      %v2187 = vmul.f32 %v2144, 1.442695
      %v2188 = vpow.pop %v2187
      %v2189 = vmul.f32 %v2145, 1.442695
      %v2190 = vpow.pop %v2189
      %v2191 = vmul.f32 %v2146, 1.442695
      %v2192 = vpow.pop %v2191
      %v2193 = vmul.f32 %v2147, 1.442695
      %v2194 = vpow.pop %v2193
      %v2195 = vmul.f32 %v2148, 1.442695
      %v2196 = vpow.pop %v2195
      %v2197 = vmul.f32 %v2149, 1.442695
      %v2198 = vpow.pop %v2197
      %v2199 = vmul.f32 %v2150, 1.442695
      %v2200 = vpow.pop %v2199
      %v2201 = vmul.f32 %v2151, 1.442695
      %v2202 = vpow.pop %v2201
      %v2203 = vmul.f32 %v2152, 1.442695
      %v2204 = vpow.pop %v2203
      %v2205 = vmul.f32 %v2153, 1.442695
      %v2206 = vpow.pop %v2205
      %v2207 = vmul.f32 %v2154, 1.442695
      %v2208 = vpow.pop %v2207
      %v2209 = vmul.f32 %v2155, 1.442695
      %v2210 = vpow.pop %v2209
      %v2211 = vmul.f32 %v2156, 1.442695
      %v2212 = vpow.pop %v2211
      %v2213 = vmul.f32 %v2157, 1.442695
      %v2214 = vpow.pop %v2213
      %v2215 = vmul.f32 %v2158, 1.442695
      %v2216 = vpow.pop %v2215
      %v2217 = vmul.f32 %v2159, 1.442695
      %v2218 = vpow.pop %v2217
      %v2219 = vmul.f32 %v2160, 1.442695
      %v2220 = vpow.pop %v2219
      %v2221 = vmul.f32 %v2161, 1.442695
      %v2222 = vpow.pop %v2221
      %v2223 = vmul.f32 %v2162, 1.442695
      %v2224 = vpow.pop %v2223
      %v2225 = vmul.f32 %v2163, 1.442695
      %v2226 = vpow.pop %v2225
      %v2227 = vmul.f32 %v2164, 1.442695
      %v2228 = vpow.pop %v2227
      %v2229 = vadd.f32 %v2166, %v2168
      %2230 = vadd.xlane.f32.xlu0 %v2229
      %v2231 = vpop.xlane.xlu0 %2230
      %v2232 = vadd.f32 %v2170, %v2172
      %2233 = vadd.xlane.f32.xlu0 %v2232
      %v2234 = vpop.xlane.xlu0 %2233
      %v2235 = vadd.f32 %v2174, %v2176
      %2236 = vadd.xlane.f32.xlu0 %v2235
      %v2237 = vpop.xlane.xlu0 %2236
      %v2238 = vadd.f32 %v2178, %v2180
      %2239 = vadd.xlane.f32.xlu0 %v2238
      %v2240 = vpop.xlane.xlu0 %2239
      %v2241 = vadd.f32 %v2182, %v2184
      %2242 = vadd.xlane.f32.xlu0 %v2241
      %v2243 = vpop.xlane.xlu0 %2242
      %v2244 = vadd.f32 %v2186, %v2188
      %2245 = vadd.xlane.f32.xlu0 %v2244
      %v2246 = vpop.xlane.xlu0 %2245
      %v2247 = vadd.f32 %v2190, %v2192
      %2248 = vadd.xlane.f32.xlu0 %v2247
      %v2249 = vpop.xlane.xlu0 %2248
      %v2250 = vadd.f32 %v2194, %v2196
      %2251 = vadd.xlane.f32.xlu0 %v2250
      %v2252 = vpop.xlane.xlu0 %2251
      %v2253 = vadd.f32 %v2198, %v2200
      %2254 = vadd.xlane.f32.xlu0 %v2253
      %v2255 = vpop.xlane.xlu0 %2254
      %v2256 = vadd.f32 %v2202, %v2204
      %2257 = vadd.xlane.f32.xlu0 %v2256
      %v2258 = vpop.xlane.xlu0 %2257
      %v2259 = vadd.f32 %v2206, %v2208
      %2260 = vadd.xlane.f32.xlu0 %v2259
      %v2261 = vpop.xlane.xlu0 %2260
      %v2262 = vadd.f32 %v2210, %v2212
      %2263 = vadd.xlane.f32.xlu0 %v2262
      %v2264 = vpop.xlane.xlu0 %2263
      %v2265 = vadd.f32 %v2214, %v2216
      %2266 = vadd.xlane.f32.xlu0 %v2265
      %v2267 = vpop.xlane.xlu0 %2266
      %v2268 = vadd.f32 %v2218, %v2220
      %2269 = vadd.xlane.f32.xlu0 %v2268
      %v2270 = vpop.xlane.xlu0 %2269
      %v2271 = vadd.f32 %v2222, %v2224
      %2272 = vadd.xlane.f32.xlu0 %v2271
      %v2273 = vpop.xlane.xlu0 %2272
      %v2274 = vadd.f32 %v2226, %v2228
      %2275 = vadd.xlane.f32.xlu0 %v2274
      %v2276 = vpop.xlane.xlu0 %2275
      %v2277 = vrcp.pop %v2231
      %v2278 = vrcp.pop %v2234
      %v2279 = vrcp.pop %v2237
      %v2280 = vrcp.pop %v2240
      %v2281 = vrcp.pop %v2243
      %v2282 = vrcp.pop %v2246
      %v2283 = vrcp.pop %v2249
      %v2284 = vrcp.pop %v2252
      %v2285 = vrcp.pop %v2255
      %v2286 = vrcp.pop %v2258
      %v2287 = vrcp.pop %v2261
      %v2288 = vrcp.pop %v2264
      %v2289 = vrcp.pop %v2267
      %v2290 = vrcp.pop %v2270
      %v2291 = vrcp.pop %v2273
      %v2292 = vrcp.pop %v2276
      %v2293 = vmul.f32 %v2166, %v2277
      %v2294 = vmul.f32 %v2168, %v2277
      %v2295 = vmul.f32 %v2170, %v2278
      %v2296 = vmul.f32 %v2172, %v2278
      %v2297 = vmul.f32 %v2174, %v2279
      %v2298 = vmul.f32 %v2176, %v2279
      %v2299 = vmul.f32 %v2178, %v2280
      %v2300 = vmul.f32 %v2180, %v2280
      %v2301 = vmul.f32 %v2182, %v2281
      %v2302 = vmul.f32 %v2184, %v2281
      %v2303 = vmul.f32 %v2186, %v2282
      %v2304 = vmul.f32 %v2188, %v2282
      %v2305 = vmul.f32 %v2190, %v2283
      %v2306 = vmul.f32 %v2192, %v2283
      %v2307 = vmul.f32 %v2194, %v2284
      %v2308 = vmul.f32 %v2196, %v2284
      %v2309 = vmul.f32 %v2198, %v2285
      %v2310 = vmul.f32 %v2200, %v2285
      %v2311 = vmul.f32 %v2202, %v2286
      %v2312 = vmul.f32 %v2204, %v2286
      %v2313 = vmul.f32 %v2206, %v2287
      %v2314 = vmul.f32 %v2208, %v2287
      %v2315 = vmul.f32 %v2210, %v2288
      %v2316 = vmul.f32 %v2212, %v2288
      %v2317 = vmul.f32 %v2214, %v2289
      %v2318 = vmul.f32 %v2216, %v2289
      %v2319 = vmul.f32 %v2218, %v2290
      %v2320 = vmul.f32 %v2220, %v2290
      %v2321 = vmul.f32 %v2222, %v2291
      %v2322 = vmul.f32 %v2224, %v2291
      %v2323 = vmul.f32 %v2226, %v2292
      %v2324 = vmul.f32 %v2228, %v2292
      %2325 = vmatpush.xpose.msra.mxu0 %v2323
      %2326 = vmatpush.xpose.msra.mxu0 %v2321
      %2327 = vmatpush.xpose.msra.mxu0 %v2319
      %2328 = vmatpush.xpose.msra.mxu0 %v2317
      %2329 = vmatpush.xpose.msra.mxu0 %v2315
      %2330 = vmatpush.xpose.msra.mxu0 %v2313
      %2331 = vmatpush.xpose.msra.mxu0 %v2311
      %2332 = vmatpush.xpose.msra.mxu0 %v2309
      %2333 = vmatpush.xpose.msra.mxu0 %v2307
      %2334 = vmatpush.xpose.msra.mxu0 %v2305
      %2335 = vmatpush.xpose.msra.mxu0 %v2303
      %2336 = vmatpush.xpose.msra.mxu0 %v2301
      %2337 = vmatpush.xpose.msra.mxu0 %v2299
      %2338 = vmatpush.xpose.msra.mxu0 %v2297
      %2339 = vmatpush.xpose.msra.mxu0 %v2295
      %2340 = vmatpush.xpose.msra.mxu0 %v2293
      %2341 = vmatmul.f32.gmra.mxu0 %v1853
      %v2342 = vpop.f32.mrf.mxu0
      %v2343 = vadd.f32 0.0, %v2342
      %2344 = vdwg.mxu0
      %2345 = vmatpush.xpose.msra.mxu0 %v2324
      %2346 = vmatpush.xpose.msra.mxu0 %v2322
      %2347 = vmatpush.xpose.msra.mxu0 %v2320
      %2348 = vmatpush.xpose.msra.mxu0 %v2318
      %2349 = vmatpush.xpose.msra.mxu0 %v2316
      %2350 = vmatpush.xpose.msra.mxu0 %v2314
      %2351 = vmatpush.xpose.msra.mxu0 %v2312
      %2352 = vmatpush.xpose.msra.mxu0 %v2310
      %2353 = vmatpush.xpose.msra.mxu0 %v2308
      %2354 = vmatpush.xpose.msra.mxu0 %v2306
      %2355 = vmatpush.xpose.msra.mxu0 %v2304
      %2356 = vmatpush.xpose.msra.mxu0 %v2302
      %2357 = vmatpush.xpose.msra.mxu0 %v2300
      %2358 = vmatpush.xpose.msra.mxu0 %v2298
      %2359 = vmatpush.xpose.msra.mxu0 %v2296
      %2360 = vmatpush.xpose.msra.mxu0 %v2294
      %2361 = vmatmul.f32.gmra.mxu0 %v1873
      %v2362 = vpop.f32.mrf.mxu0
      %v2363 = vadd.f32 %v2343, %v2362
      %2364 = vdwg.mxu0
      %v2366 = vsel %vm689, %v1725, 0
      %v2369 = vsel %vm689, %v1726, 0
      %v2372 = vsel %vm689, %v1727, 0
      %v2375 = vsel %vm689, %v1728, 0
      %2377 = vmatpush.msra.mxu0 0.0
      %2378 = vmatpush.msra.mxu0 0.0
      %2379 = vmatpush.msra.mxu0 0.0
      %2380 = vmatpush.msra.mxu0 0.0
      %2381 = vmatpush.msra.mxu0 0.0
      %2382 = vmatpush.msra.mxu0 0.0
      %2383 = vmatpush.msra.mxu0 0.0
      %2384 = vmatpush.msra.mxu0 0.0
      %2385 = vmatpush.msra.mxu0 0.0
      %2386 = vmatpush.msra.mxu0 0.0
      %2387 = vmatpush.msra.mxu0 0.0
      %2388 = vmatpush.msra.mxu0 0.0
      %2389 = vmatpush.msra.mxu0 0.0
      %2390 = vmatpush.msra.mxu0 0.0
      %2391 = vmatpush.msra.mxu0 0.0
      %2392 = vmatpush.msra.mxu0 %v2363
      %2393 = vmatmul.f32.gmra.mxu0 %v2366
      %v2394 = vpop.f32.mrf.mxu0
      %v2395 = vadd.f32 0.0, %v2394
      %2396 = vmatmul.f32.gmra.mxu0 %v2369
      %v2397 = vpop.f32.mrf.mxu0
      %v2398 = vadd.f32 0.0, %v2397
      %2399 = vmatmul.f32.gmra.mxu0 %v2372
      %v2400 = vpop.f32.mrf.mxu0
      %v2401 = vadd.f32 0.0, %v2400
      %2402 = vmatmul.f32.gmra.mxu0 %v2375
      %v2403 = vpop.f32.mrf.mxu0
      %v2404 = vadd.f32 0.0, %v2403
      %2405 = vdwg.mxu0
      %2406 = vxpose.xlu0.b32.start [1/16] %v1778, 128
      %2407 = vxpose.xlu0.b32.cont [2/16] 0.0, 128
      %2408 = vxpose.xlu0.b32.cont [3/16] 0.0, 128
      %2409 = vxpose.xlu0.b32.cont [4/16] 0.0, 128
      %2410 = vxpose.xlu0.b32.cont [5/16] 0.0, 128
      %2411 = vxpose.xlu0.b32.cont [6/16] 0.0, 128
      %2412 = vxpose.xlu0.b32.cont [7/16] 0.0, 128
      %2413 = vxpose.xlu0.b32.cont [8/16] 0.0, 128
      %2414 = vxpose.xlu0.b32.cont [9/16] 0.0, 128
      %2415 = vxpose.xlu0.b32.cont [10/16] 0.0, 128
      %2416 = vxpose.xlu0.b32.cont [11/16] 0.0, 128
      %2417 = vxpose.xlu0.b32.cont [12/16] 0.0, 128
      %2418 = vxpose.xlu0.b32.cont [13/16] 0.0, 128
      %2419 = vxpose.xlu0.b32.cont [14/16] 0.0, 128
      %2420 = vxpose.xlu0.b32.cont [15/16] 0.0, 128
      %2421 = vxpose.xlu0.b32.end [16/16] 0.0, 128
      %v2422 = vpop.trf.xlu0
      %v2423 = vpop.trf.xlu0
      %v2424 = vpop.trf.xlu0
      %v2425 = vpop.trf.xlu0
      %v2426 = vpop.trf.xlu0
      %v2427 = vpop.trf.xlu0
      %v2428 = vpop.trf.xlu0
      %v2429 = vpop.trf.xlu0
      %v2430 = vpop.trf.xlu0
      %v2431 = vpop.trf.xlu0
      %v2432 = vpop.trf.xlu0
      %v2433 = vpop.trf.xlu0
      %v2434 = vpop.trf.xlu0
      %v2435 = vpop.trf.xlu0
      %v2436 = vpop.trf.xlu0
      %v2437 = vpop.trf.xlu0
      %v2439 = vsel %vm689, %v2422, 0
      %v2442 = vsel %vm689, %v2423, 0
      %v2445 = vsel %vm689, %v2424, 0
      %v2448 = vsel %vm689, %v2425, 0
      %v2451 = vsel %vm689, %v2426, 0
      %v2454 = vsel %vm689, %v2427, 0
      %v2457 = vsel %vm689, %v2428, 0
      %v2460 = vsel %vm689, %v2429, 0
      %v2463 = vsel %vm689, %v2430, 0
      %v2466 = vsel %vm689, %v2431, 0
      %v2469 = vsel %vm689, %v2432, 0
      %v2472 = vsel %vm689, %v2433, 0
      %v2475 = vsel %vm689, %v2434, 0
      %v2478 = vsel %vm689, %v2435, 0
      %v2481 = vsel %vm689, %v2436, 0
      %v2484 = vsel %vm689, %v2437, 0
      %2486 = vmatpush.msra.mxu0 0.0
      %2487 = vmatpush.msra.mxu0 0.0
      %2488 = vmatpush.msra.mxu0 0.0
      %2489 = vmatpush.msra.mxu0 0.0
      %2490 = vmatpush.msra.mxu0 0.0
      %2491 = vmatpush.msra.mxu0 0.0
      %2492 = vmatpush.msra.mxu0 0.0
      %2493 = vmatpush.msra.mxu0 0.0
      %2494 = vmatpush.msra.mxu0 0.0
      %2495 = vmatpush.msra.mxu0 0.0
      %2496 = vmatpush.msra.mxu0 0.0
      %2497 = vmatpush.msra.mxu0 0.0
      %2498 = vmatpush.msra.mxu0 0.0
      %2499 = vmatpush.msra.mxu0 0.0
      %2500 = vmatpush.msra.mxu0 0.0
      %2501 = vmatpush.msra.mxu0 %v1805
      %2502 = vmatmul.f32.gmra.mxu0 %v2439
      %v2503 = vpop.f32.mrf.mxu0
      %v2504 = vadd.f32 0.0, %v2503
      %2505 = vmatmul.f32.gmra.mxu0 %v2442
      %v2506 = vpop.f32.mrf.mxu0
      %v2507 = vadd.f32 0.0, %v2506
      %2508 = vmatmul.f32.gmra.mxu0 %v2445
      %v2509 = vpop.f32.mrf.mxu0
      %v2510 = vadd.f32 0.0, %v2509
      %2511 = vmatmul.f32.gmra.mxu0 %v2448
      %v2512 = vpop.f32.mrf.mxu0
      %v2513 = vadd.f32 0.0, %v2512
      %2514 = vmatmul.f32.gmra.mxu0 %v2451
      %v2515 = vpop.f32.mrf.mxu0
      %v2516 = vadd.f32 0.0, %v2515
      %2517 = vmatmul.f32.gmra.mxu0 %v2454
      %v2518 = vpop.f32.mrf.mxu0
      %v2519 = vadd.f32 0.0, %v2518
      %2520 = vmatmul.f32.gmra.mxu0 %v2457
      %v2521 = vpop.f32.mrf.mxu0
      %v2522 = vadd.f32 0.0, %v2521
      %2523 = vmatmul.f32.gmra.mxu0 %v2460
      %v2524 = vpop.f32.mrf.mxu0
      %v2525 = vadd.f32 0.0, %v2524
      %2526 = vmatmul.f32.gmra.mxu0 %v2463
      %v2527 = vpop.f32.mrf.mxu0
      %v2528 = vadd.f32 0.0, %v2527
      %2529 = vmatmul.f32.gmra.mxu0 %v2466
      %v2530 = vpop.f32.mrf.mxu0
      %v2531 = vadd.f32 0.0, %v2530
      %2532 = vmatmul.f32.gmra.mxu0 %v2469
      %v2533 = vpop.f32.mrf.mxu0
      %v2534 = vadd.f32 0.0, %v2533
      %2535 = vmatmul.f32.gmra.mxu0 %v2472
      %v2536 = vpop.f32.mrf.mxu0
      %v2537 = vadd.f32 0.0, %v2536
      %2538 = vmatmul.f32.gmra.mxu0 %v2475
      %v2539 = vpop.f32.mrf.mxu0
      %v2540 = vadd.f32 0.0, %v2539
      %2541 = vmatmul.f32.gmra.mxu0 %v2478
      %v2542 = vpop.f32.mrf.mxu0
      %v2543 = vadd.f32 0.0, %v2542
      %2544 = vmatmul.f32.gmra.mxu0 %v2481
      %v2545 = vpop.f32.mrf.mxu0
      %v2546 = vadd.f32 0.0, %v2545
      %2547 = vmatmul.f32.gmra.mxu0 %v2484
      %v2548 = vpop.f32.mrf.mxu0
      %v2549 = vadd.f32 0.0, %v2548
      %2550 = vdwg.mxu0
      %2551 = vmatpush.msra.mxu0 0.0
      %2552 = vmatpush.msra.mxu0 0.0
      %2553 = vmatpush.msra.mxu0 0.0
      %2554 = vmatpush.msra.mxu0 0.0
      %2555 = vmatpush.msra.mxu0 0.0
      %2556 = vmatpush.msra.mxu0 0.0
      %2557 = vmatpush.msra.mxu0 0.0
      %2558 = vmatpush.msra.mxu0 0.0
      %2559 = vmatpush.msra.mxu0 0.0
      %2560 = vmatpush.msra.mxu0 0.0
      %2561 = vmatpush.msra.mxu0 0.0
      %2562 = vmatpush.msra.mxu0 0.0
      %2563 = vmatpush.msra.mxu0 0.0
      %2564 = vmatpush.msra.mxu0 0.0
      %2565 = vmatpush.msra.mxu0 0.0
      %2566 = vmatpush.msra.mxu0 %v1825
      %2567 = vmatmul.f32.gmra.mxu0 %v2439
      %v2568 = vpop.f32.mrf.mxu0
      %v2569 = vadd.f32 0.0, %v2568
      %2570 = vmatmul.f32.gmra.mxu0 %v2442
      %v2571 = vpop.f32.mrf.mxu0
      %v2572 = vadd.f32 0.0, %v2571
      %2573 = vmatmul.f32.gmra.mxu0 %v2445
      %v2574 = vpop.f32.mrf.mxu0
      %v2575 = vadd.f32 0.0, %v2574
      %2576 = vmatmul.f32.gmra.mxu0 %v2448
      %v2577 = vpop.f32.mrf.mxu0
      %v2578 = vadd.f32 0.0, %v2577
      %2579 = vmatmul.f32.gmra.mxu0 %v2451
      %v2580 = vpop.f32.mrf.mxu0
      %v2581 = vadd.f32 0.0, %v2580
      %2582 = vmatmul.f32.gmra.mxu0 %v2454
      %v2583 = vpop.f32.mrf.mxu0
      %v2584 = vadd.f32 0.0, %v2583
      %2585 = vmatmul.f32.gmra.mxu0 %v2457
      %v2586 = vpop.f32.mrf.mxu0
      %v2587 = vadd.f32 0.0, %v2586
      %2588 = vmatmul.f32.gmra.mxu0 %v2460
      %v2589 = vpop.f32.mrf.mxu0
      %v2590 = vadd.f32 0.0, %v2589
      %2591 = vmatmul.f32.gmra.mxu0 %v2463
      %v2592 = vpop.f32.mrf.mxu0
      %v2593 = vadd.f32 0.0, %v2592
      %2594 = vmatmul.f32.gmra.mxu0 %v2466
      %v2595 = vpop.f32.mrf.mxu0
      %v2596 = vadd.f32 0.0, %v2595
      %2597 = vmatmul.f32.gmra.mxu0 %v2469
      %v2598 = vpop.f32.mrf.mxu0
      %v2599 = vadd.f32 0.0, %v2598
      %2600 = vmatmul.f32.gmra.mxu0 %v2472
      %v2601 = vpop.f32.mrf.mxu0
      %v2602 = vadd.f32 0.0, %v2601
      %2603 = vmatmul.f32.gmra.mxu0 %v2475
      %v2604 = vpop.f32.mrf.mxu0
      %v2605 = vadd.f32 0.0, %v2604
      %2606 = vmatmul.f32.gmra.mxu0 %v2478
      %v2607 = vpop.f32.mrf.mxu0
      %v2608 = vadd.f32 0.0, %v2607
      %2609 = vmatmul.f32.gmra.mxu0 %v2481
      %v2610 = vpop.f32.mrf.mxu0
      %v2611 = vadd.f32 0.0, %v2610
      %2612 = vmatmul.f32.gmra.mxu0 %v2484
      %v2613 = vpop.f32.mrf.mxu0
      %v2614 = vadd.f32 0.0, %v2613
      %2615 = vdwg.mxu0
      %v2616 = vmax.f32 %v2504, %v2569
      %2617 = vmax.xlane.f32.xlu0 %v2616
      %v2618 = vpop.xlane.xlu0 %2617
      %v2619 = vmax.f32 %v2507, %v2572
      %2620 = vmax.xlane.f32.xlu0 %v2619
      %v2621 = vpop.xlane.xlu0 %2620
      %v2622 = vmax.f32 %v2510, %v2575
      %2623 = vmax.xlane.f32.xlu0 %v2622
      %v2624 = vpop.xlane.xlu0 %2623
      %v2625 = vmax.f32 %v2513, %v2578
      %2626 = vmax.xlane.f32.xlu0 %v2625
      %v2627 = vpop.xlane.xlu0 %2626
      %v2628 = vmax.f32 %v2516, %v2581
      %2629 = vmax.xlane.f32.xlu0 %v2628
      %v2630 = vpop.xlane.xlu0 %2629
      %v2631 = vmax.f32 %v2519, %v2584
      %2632 = vmax.xlane.f32.xlu0 %v2631
      %v2633 = vpop.xlane.xlu0 %2632
      %v2634 = vmax.f32 %v2522, %v2587
      %2635 = vmax.xlane.f32.xlu0 %v2634
      %v2636 = vpop.xlane.xlu0 %2635
      %v2637 = vmax.f32 %v2525, %v2590
      %2638 = vmax.xlane.f32.xlu0 %v2637
      %v2639 = vpop.xlane.xlu0 %2638
      %v2640 = vmax.f32 %v2528, %v2593
      %2641 = vmax.xlane.f32.xlu0 %v2640
      %v2642 = vpop.xlane.xlu0 %2641
      %v2643 = vmax.f32 %v2531, %v2596
      %2644 = vmax.xlane.f32.xlu0 %v2643
      %v2645 = vpop.xlane.xlu0 %2644
      %v2646 = vmax.f32 %v2534, %v2599
      %2647 = vmax.xlane.f32.xlu0 %v2646
      %v2648 = vpop.xlane.xlu0 %2647
      %v2649 = vmax.f32 %v2537, %v2602
      %2650 = vmax.xlane.f32.xlu0 %v2649
      %v2651 = vpop.xlane.xlu0 %2650
      %v2652 = vmax.f32 %v2540, %v2605
      %2653 = vmax.xlane.f32.xlu0 %v2652
      %v2654 = vpop.xlane.xlu0 %2653
      %v2655 = vmax.f32 %v2543, %v2608
      %2656 = vmax.xlane.f32.xlu0 %v2655
      %v2657 = vpop.xlane.xlu0 %2656
      %v2658 = vmax.f32 %v2546, %v2611
      %2659 = vmax.xlane.f32.xlu0 %v2658
      %v2660 = vpop.xlane.xlu0 %2659
      %v2661 = vmax.f32 %v2549, %v2614
      %2662 = vmax.xlane.f32.xlu0 %v2661
      %v2663 = vpop.xlane.xlu0 %2662
      %v2664 = vsub.f32 %v2504, %v2618
      %v2665 = vsub.f32 %v2569, %v2618
      %v2666 = vsub.f32 %v2507, %v2621
      %v2667 = vsub.f32 %v2572, %v2621
      %v2668 = vsub.f32 %v2510, %v2624
      %v2669 = vsub.f32 %v2575, %v2624
      %v2670 = vsub.f32 %v2513, %v2627
      %v2671 = vsub.f32 %v2578, %v2627
      %v2672 = vsub.f32 %v2516, %v2630
      %v2673 = vsub.f32 %v2581, %v2630
      %v2674 = vsub.f32 %v2519, %v2633
      %v2675 = vsub.f32 %v2584, %v2633
      %v2676 = vsub.f32 %v2522, %v2636
      %v2677 = vsub.f32 %v2587, %v2636
      %v2678 = vsub.f32 %v2525, %v2639
      %v2679 = vsub.f32 %v2590, %v2639
      %v2680 = vsub.f32 %v2528, %v2642
      %v2681 = vsub.f32 %v2593, %v2642
      %v2682 = vsub.f32 %v2531, %v2645
      %v2683 = vsub.f32 %v2596, %v2645
      %v2684 = vsub.f32 %v2534, %v2648
      %v2685 = vsub.f32 %v2599, %v2648
      %v2686 = vsub.f32 %v2537, %v2651
      %v2687 = vsub.f32 %v2602, %v2651
      %v2688 = vsub.f32 %v2540, %v2654
      %v2689 = vsub.f32 %v2605, %v2654
      %v2690 = vsub.f32 %v2543, %v2657
      %v2691 = vsub.f32 %v2608, %v2657
      %v2692 = vsub.f32 %v2546, %v2660
      %v2693 = vsub.f32 %v2611, %v2660
      %v2694 = vsub.f32 %v2549, %v2663
      %v2695 = vsub.f32 %v2614, %v2663
      %v2696 = vmul.f32 %v2664, 1.442695
      %v2697 = vpow.pop %v2696
      %v2698 = vmul.f32 %v2665, 1.442695
      %v2699 = vpow.pop %v2698
      %v2700 = vmul.f32 %v2666, 1.442695
      %v2701 = vpow.pop %v2700
      %v2702 = vmul.f32 %v2667, 1.442695
      %v2703 = vpow.pop %v2702
      %v2704 = vmul.f32 %v2668, 1.442695
      %v2705 = vpow.pop %v2704
      %v2706 = vmul.f32 %v2669, 1.442695
      %v2707 = vpow.pop %v2706
      %v2708 = vmul.f32 %v2670, 1.442695
      %v2709 = vpow.pop %v2708
      %v2710 = vmul.f32 %v2671, 1.442695
      %v2711 = vpow.pop %v2710
      %v2712 = vmul.f32 %v2672, 1.442695
      %v2713 = vpow.pop %v2712
      %v2714 = vmul.f32 %v2673, 1.442695
      %v2715 = vpow.pop %v2714
      %v2716 = vmul.f32 %v2674, 1.442695
      %v2717 = vpow.pop %v2716
      %v2718 = vmul.f32 %v2675, 1.442695
      %v2719 = vpow.pop %v2718
      %v2720 = vmul.f32 %v2676, 1.442695
      %v2721 = vpow.pop %v2720
      %v2722 = vmul.f32 %v2677, 1.442695
      %v2723 = vpow.pop %v2722
      %v2724 = vmul.f32 %v2678, 1.442695
      %v2725 = vpow.pop %v2724
      %v2726 = vmul.f32 %v2679, 1.442695
      %v2727 = vpow.pop %v2726
      %v2728 = vmul.f32 %v2680, 1.442695
      %v2729 = vpow.pop %v2728
      %v2730 = vmul.f32 %v2681, 1.442695
      %v2731 = vpow.pop %v2730
      %v2732 = vmul.f32 %v2682, 1.442695
      %v2733 = vpow.pop %v2732
      %v2734 = vmul.f32 %v2683, 1.442695
      %v2735 = vpow.pop %v2734
      %v2736 = vmul.f32 %v2684, 1.442695
      %v2737 = vpow.pop %v2736
      %v2738 = vmul.f32 %v2685, 1.442695
      %v2739 = vpow.pop %v2738
      %v2740 = vmul.f32 %v2686, 1.442695
      %v2741 = vpow.pop %v2740
      %v2742 = vmul.f32 %v2687, 1.442695
      %v2743 = vpow.pop %v2742
      %v2744 = vmul.f32 %v2688, 1.442695
      %v2745 = vpow.pop %v2744
      %v2746 = vmul.f32 %v2689, 1.442695
      %v2747 = vpow.pop %v2746
      %v2748 = vmul.f32 %v2690, 1.442695
      %v2749 = vpow.pop %v2748
      %v2750 = vmul.f32 %v2691, 1.442695
      %v2751 = vpow.pop %v2750
      %v2752 = vmul.f32 %v2692, 1.442695
      %v2753 = vpow.pop %v2752
      %v2754 = vmul.f32 %v2693, 1.442695
      %v2755 = vpow.pop %v2754
      %v2756 = vmul.f32 %v2694, 1.442695
      %v2757 = vpow.pop %v2756
      %v2758 = vmul.f32 %v2695, 1.442695
      %v2759 = vpow.pop %v2758
      %v2760 = vadd.f32 %v2697, %v2699
      %2761 = vadd.xlane.f32.xlu0 %v2760
      %v2762 = vpop.xlane.xlu0 %2761
      %v2763 = vadd.f32 %v2701, %v2703
      %2764 = vadd.xlane.f32.xlu0 %v2763
      %v2765 = vpop.xlane.xlu0 %2764
      %v2766 = vadd.f32 %v2705, %v2707
      %2767 = vadd.xlane.f32.xlu0 %v2766
      %v2768 = vpop.xlane.xlu0 %2767
      %v2769 = vadd.f32 %v2709, %v2711
      %2770 = vadd.xlane.f32.xlu0 %v2769
      %v2771 = vpop.xlane.xlu0 %2770
      %v2772 = vadd.f32 %v2713, %v2715
      %2773 = vadd.xlane.f32.xlu0 %v2772
      %v2774 = vpop.xlane.xlu0 %2773
      %v2775 = vadd.f32 %v2717, %v2719
      %2776 = vadd.xlane.f32.xlu0 %v2775
      %v2777 = vpop.xlane.xlu0 %2776
      %v2778 = vadd.f32 %v2721, %v2723
      %2779 = vadd.xlane.f32.xlu0 %v2778
      %v2780 = vpop.xlane.xlu0 %2779
      %v2781 = vadd.f32 %v2725, %v2727
      %2782 = vadd.xlane.f32.xlu0 %v2781
      %v2783 = vpop.xlane.xlu0 %2782
      %v2784 = vadd.f32 %v2729, %v2731
      %2785 = vadd.xlane.f32.xlu0 %v2784
      %v2786 = vpop.xlane.xlu0 %2785
      %v2787 = vadd.f32 %v2733, %v2735
      %2788 = vadd.xlane.f32.xlu0 %v2787
      %v2789 = vpop.xlane.xlu0 %2788
      %v2790 = vadd.f32 %v2737, %v2739
      %2791 = vadd.xlane.f32.xlu0 %v2790
      %v2792 = vpop.xlane.xlu0 %2791
      %v2793 = vadd.f32 %v2741, %v2743
      %2794 = vadd.xlane.f32.xlu0 %v2793
      %v2795 = vpop.xlane.xlu0 %2794
      %v2796 = vadd.f32 %v2745, %v2747
      %2797 = vadd.xlane.f32.xlu0 %v2796
      %v2798 = vpop.xlane.xlu0 %2797
      %v2799 = vadd.f32 %v2749, %v2751
      %2800 = vadd.xlane.f32.xlu0 %v2799
      %v2801 = vpop.xlane.xlu0 %2800
      %v2802 = vadd.f32 %v2753, %v2755
      %2803 = vadd.xlane.f32.xlu0 %v2802
      %v2804 = vpop.xlane.xlu0 %2803
      %v2805 = vadd.f32 %v2757, %v2759
      %2806 = vadd.xlane.f32.xlu0 %v2805
      %v2807 = vpop.xlane.xlu0 %2806
      %v2808 = vrcp.pop %v2762
      %v2809 = vrcp.pop %v2765
      %v2810 = vrcp.pop %v2768
      %v2811 = vrcp.pop %v2771
      %v2812 = vrcp.pop %v2774
      %v2813 = vrcp.pop %v2777
      %v2814 = vrcp.pop %v2780
      %v2815 = vrcp.pop %v2783
      %v2816 = vrcp.pop %v2786
      %v2817 = vrcp.pop %v2789
      %v2818 = vrcp.pop %v2792
      %v2819 = vrcp.pop %v2795
      %v2820 = vrcp.pop %v2798
      %v2821 = vrcp.pop %v2801
      %v2822 = vrcp.pop %v2804
      %v2823 = vrcp.pop %v2807
      %v2824 = vmul.f32 %v2697, %v2808
      %v2825 = vmul.f32 %v2699, %v2808
      %v2826 = vmul.f32 %v2701, %v2809
      %v2827 = vmul.f32 %v2703, %v2809
      %v2828 = vmul.f32 %v2705, %v2810
      %v2829 = vmul.f32 %v2707, %v2810
      %v2830 = vmul.f32 %v2709, %v2811
      %v2831 = vmul.f32 %v2711, %v2811
      %v2832 = vmul.f32 %v2713, %v2812
      %v2833 = vmul.f32 %v2715, %v2812
      %v2834 = vmul.f32 %v2717, %v2813
      %v2835 = vmul.f32 %v2719, %v2813
      %v2836 = vmul.f32 %v2721, %v2814
      %v2837 = vmul.f32 %v2723, %v2814
      %v2838 = vmul.f32 %v2725, %v2815
      %v2839 = vmul.f32 %v2727, %v2815
      %v2840 = vmul.f32 %v2729, %v2816
      %v2841 = vmul.f32 %v2731, %v2816
      %v2842 = vmul.f32 %v2733, %v2817
      %v2843 = vmul.f32 %v2735, %v2817
      %v2844 = vmul.f32 %v2737, %v2818
      %v2845 = vmul.f32 %v2739, %v2818
      %v2846 = vmul.f32 %v2741, %v2819
      %v2847 = vmul.f32 %v2743, %v2819
      %v2848 = vmul.f32 %v2745, %v2820
      %v2849 = vmul.f32 %v2747, %v2820
      %v2850 = vmul.f32 %v2749, %v2821
      %v2851 = vmul.f32 %v2751, %v2821
      %v2852 = vmul.f32 %v2753, %v2822
      %v2853 = vmul.f32 %v2755, %v2822
      %v2854 = vmul.f32 %v2757, %v2823
      %v2855 = vmul.f32 %v2759, %v2823
      %2856 = vmatpush.xpose.msra.mxu0 %v2854
      %2857 = vmatpush.xpose.msra.mxu0 %v2852
      %2858 = vmatpush.xpose.msra.mxu0 %v2850
      %2859 = vmatpush.xpose.msra.mxu0 %v2848
      %2860 = vmatpush.xpose.msra.mxu0 %v2846
      %2861 = vmatpush.xpose.msra.mxu0 %v2844
      %2862 = vmatpush.xpose.msra.mxu0 %v2842
      %2863 = vmatpush.xpose.msra.mxu0 %v2840
      %2864 = vmatpush.xpose.msra.mxu0 %v2838
      %2865 = vmatpush.xpose.msra.mxu0 %v2836
      %2866 = vmatpush.xpose.msra.mxu0 %v2834
      %2867 = vmatpush.xpose.msra.mxu0 %v2832
      %2868 = vmatpush.xpose.msra.mxu0 %v2830
      %2869 = vmatpush.xpose.msra.mxu0 %v2828
      %2870 = vmatpush.xpose.msra.mxu0 %v2826
      %2871 = vmatpush.xpose.msra.mxu0 %v2824
      %2872 = vmatmul.f32.gmra.mxu0 %v1853
      %v2873 = vpop.f32.mrf.mxu0
      %v2874 = vadd.f32 0.0, %v2873
      %2875 = vdwg.mxu0
      %2876 = vmatpush.xpose.msra.mxu0 %v2855
      %2877 = vmatpush.xpose.msra.mxu0 %v2853
      %2878 = vmatpush.xpose.msra.mxu0 %v2851
      %2879 = vmatpush.xpose.msra.mxu0 %v2849
      %2880 = vmatpush.xpose.msra.mxu0 %v2847
      %2881 = vmatpush.xpose.msra.mxu0 %v2845
      %2882 = vmatpush.xpose.msra.mxu0 %v2843
      %2883 = vmatpush.xpose.msra.mxu0 %v2841
      %2884 = vmatpush.xpose.msra.mxu0 %v2839
      %2885 = vmatpush.xpose.msra.mxu0 %v2837
      %2886 = vmatpush.xpose.msra.mxu0 %v2835
      %2887 = vmatpush.xpose.msra.mxu0 %v2833
      %2888 = vmatpush.xpose.msra.mxu0 %v2831
      %2889 = vmatpush.xpose.msra.mxu0 %v2829
      %2890 = vmatpush.xpose.msra.mxu0 %v2827
      %2891 = vmatpush.xpose.msra.mxu0 %v2825
      %2892 = vmatmul.f32.gmra.mxu0 %v1873
      %v2893 = vpop.f32.mrf.mxu0
      %v2894 = vadd.f32 %v2874, %v2893
      %2895 = vdwg.mxu0
      %2896 = vmatpush.msra.mxu0 0.0
      %2897 = vmatpush.msra.mxu0 0.0
      %2898 = vmatpush.msra.mxu0 0.0
      %2899 = vmatpush.msra.mxu0 0.0
      %2900 = vmatpush.msra.mxu0 0.0
      %2901 = vmatpush.msra.mxu0 0.0
      %2902 = vmatpush.msra.mxu0 0.0
      %2903 = vmatpush.msra.mxu0 0.0
      %2904 = vmatpush.msra.mxu0 0.0
      %2905 = vmatpush.msra.mxu0 0.0
      %2906 = vmatpush.msra.mxu0 0.0
      %2907 = vmatpush.msra.mxu0 0.0
      %2908 = vmatpush.msra.mxu0 0.0
      %2909 = vmatpush.msra.mxu0 0.0
      %2910 = vmatpush.msra.mxu0 0.0
      %2911 = vmatpush.msra.mxu0 %v2894
      %2912 = vmatmul.f32.gmra.mxu0 %v2366
      %v2913 = vpop.f32.mrf.mxu0
      %v2914 = vadd.f32 0.0, %v2913
      %2915 = vmatmul.f32.gmra.mxu0 %v2369
      %v2916 = vpop.f32.mrf.mxu0
      %v2917 = vadd.f32 0.0, %v2916
      %2918 = vmatmul.f32.gmra.mxu0 %v2372
      %v2919 = vpop.f32.mrf.mxu0
      %v2920 = vadd.f32 0.0, %v2919
      %2921 = vmatmul.f32.gmra.mxu0 %v2375
      %v2922 = vpop.f32.mrf.mxu0
      %v2923 = vadd.f32 0.0, %v2922
      %2924 = vdwg.mxu0
      %v2925 = vadd.f32 %v1708, %v2395
      %v2926 = vadd.f32 %v1709, %v2914
      %v2927 = vadd.f32 %v1710, %v2398
      %v2928 = vadd.f32 %v1711, %v2917
      %v2929 = vadd.f32 %v1712, %v2401
      %v2930 = vadd.f32 %v1713, %v2920
      %v2931 = vadd.f32 %v1714, %v2404
      %v2932 = vadd.f32 %v1715, %v2923
      %s2933 = scalar_lea.vmem %s1, 48
      %v2934 = vld [vmem:[%s2933] sm:$0xff]
      %v2935 = vld [vmem:[%s2933 + $0x8] sm:$0xff]
      %v2936 = vld [vmem:[%s2933 + $0x10] sm:$0xff]
      %s2937 = scalar_lea.vmem %s2, 48
      %v2938 = vld [vmem:[%s2937] sm:$0xff]
      %v2939 = vld [vmem:[%s2937 + $0x8] sm:$0xff]
      %v2940 = vld [vmem:[%s2937 + $0x10] sm:$0xff]
      %s2941 = scalar_lea.vmem %s3, 64
      %v2942 = vld [vmem:[%s2941] sm:$0xff]
      %v2943 = vld [vmem:[%s2941 + $0x8] sm:$0xff]
      %v2944 = vld [vmem:[%s2941 + $0x10] sm:$0xff]
      %v2945 = vld [vmem:[%s2941 + $0x18] sm:$0xff]
      %2947 = vset.pattern.permute.xlu0 0
      %2948 = vperm.xlu0 %2947, %v2938
      %v2949 = vpop.permute.xlu0 %2948
      %v2952 = vsel %vm515, %v2934, 0
      %2954 = vmatpush.msra.mxu0 0.0
      %2955 = vmatpush.msra.mxu0 0.0
      %2956 = vmatpush.msra.mxu0 0.0
      %2957 = vmatpush.msra.mxu0 0.0
      %2958 = vmatpush.msra.mxu0 0.0
      %2959 = vmatpush.msra.mxu0 0.0
      %2960 = vmatpush.msra.mxu0 0.0
      %2961 = vmatpush.msra.mxu0 0.0
      %2962 = vmatpush.msra.mxu0 0.0
      %2963 = vmatpush.msra.mxu0 0.0
      %2964 = vmatpush.msra.mxu0 0.0
      %2965 = vmatpush.msra.mxu0 0.0
      %2966 = vmatpush.msra.mxu0 %v478
      %2967 = vmatpush.msra.mxu0 %v476
      %2968 = vmatpush.msra.mxu0 %v474
      %2969 = vmatpush.msra.mxu0 %v472
      %2970 = vmatmul.f32.gmra.mxu0 %v2952
      %v2971 = vpop.f32.mrf.mxu0
      %v2972 = vadd.f32 %v2949, %v2971
      %2973 = vdwg.mxu0
      %2974 = vmatpush.msra.mxu0 0.0
      %2975 = vmatpush.msra.mxu0 0.0
      %2976 = vmatpush.msra.mxu0 0.0
      %2977 = vmatpush.msra.mxu0 0.0
      %2978 = vmatpush.msra.mxu0 0.0
      %2979 = vmatpush.msra.mxu0 0.0
      %2980 = vmatpush.msra.mxu0 0.0
      %2981 = vmatpush.msra.mxu0 0.0
      %2982 = vmatpush.msra.mxu0 0.0
      %2983 = vmatpush.msra.mxu0 0.0
      %2984 = vmatpush.msra.mxu0 0.0
      %2985 = vmatpush.msra.mxu0 0.0
      %2986 = vmatpush.msra.mxu0 %v479
      %2987 = vmatpush.msra.mxu0 %v477
      %2988 = vmatpush.msra.mxu0 %v475
      %2989 = vmatpush.msra.mxu0 %v473
      %2990 = vmatmul.f32.gmra.mxu0 %v2952
      %v2991 = vpop.f32.mrf.mxu0
      %v2992 = vadd.f32 %v2949, %v2991
      %2993 = vdwg.mxu0
      %v2994 = vmul.f32 %v2972, 0.35355338
      %v2995 = vmul.f32 %v2992, 0.35355338
      %2997 = vset.pattern.permute.xlu0 0
      %2998 = vperm.xlu0 %2997, %v2939
      %v2999 = vpop.permute.xlu0 %2998
      %v3002 = vsel %vm515, %v2935, 0
      %3004 = vmatpush.msra.mxu0 0.0
      %3005 = vmatpush.msra.mxu0 0.0
      %3006 = vmatpush.msra.mxu0 0.0
      %3007 = vmatpush.msra.mxu0 0.0
      %3008 = vmatpush.msra.mxu0 0.0
      %3009 = vmatpush.msra.mxu0 0.0
      %3010 = vmatpush.msra.mxu0 0.0
      %3011 = vmatpush.msra.mxu0 0.0
      %3012 = vmatpush.msra.mxu0 0.0
      %3013 = vmatpush.msra.mxu0 0.0
      %3014 = vmatpush.msra.mxu0 0.0
      %3015 = vmatpush.msra.mxu0 0.0
      %3016 = vmatpush.msra.mxu0 %v478
      %3017 = vmatpush.msra.mxu0 %v476
      %3018 = vmatpush.msra.mxu0 %v474
      %3019 = vmatpush.msra.mxu0 %v472
      %3020 = vmatmul.f32.gmra.mxu0 %v3002
      %v3021 = vpop.f32.mrf.mxu0
      %v3022 = vadd.f32 %v2999, %v3021
      %3023 = vdwg.mxu0
      %3024 = vmatpush.msra.mxu0 0.0
      %3025 = vmatpush.msra.mxu0 0.0
      %3026 = vmatpush.msra.mxu0 0.0
      %3027 = vmatpush.msra.mxu0 0.0
      %3028 = vmatpush.msra.mxu0 0.0
      %3029 = vmatpush.msra.mxu0 0.0
      %3030 = vmatpush.msra.mxu0 0.0
      %3031 = vmatpush.msra.mxu0 0.0
      %3032 = vmatpush.msra.mxu0 0.0
      %3033 = vmatpush.msra.mxu0 0.0
      %3034 = vmatpush.msra.mxu0 0.0
      %3035 = vmatpush.msra.mxu0 0.0
      %3036 = vmatpush.msra.mxu0 %v479
      %3037 = vmatpush.msra.mxu0 %v477
      %3038 = vmatpush.msra.mxu0 %v475
      %3039 = vmatpush.msra.mxu0 %v473
      %3040 = vmatmul.f32.gmra.mxu0 %v3002
      %v3041 = vpop.f32.mrf.mxu0
      %v3042 = vadd.f32 %v2999, %v3041
      %3043 = vdwg.mxu0
      %3045 = vset.pattern.permute.xlu0 0
      %3046 = vperm.xlu0 %3045, %v2940
      %v3047 = vpop.permute.xlu0 %3046
      %v3050 = vsel %vm515, %v2936, 0
      %3052 = vmatpush.msra.mxu0 0.0
      %3053 = vmatpush.msra.mxu0 0.0
      %3054 = vmatpush.msra.mxu0 0.0
      %3055 = vmatpush.msra.mxu0 0.0
      %3056 = vmatpush.msra.mxu0 0.0
      %3057 = vmatpush.msra.mxu0 0.0
      %3058 = vmatpush.msra.mxu0 0.0
      %3059 = vmatpush.msra.mxu0 0.0
      %3060 = vmatpush.msra.mxu0 0.0
      %3061 = vmatpush.msra.mxu0 0.0
      %3062 = vmatpush.msra.mxu0 0.0
      %3063 = vmatpush.msra.mxu0 0.0
      %3064 = vmatpush.msra.mxu0 %v478
      %3065 = vmatpush.msra.mxu0 %v476
      %3066 = vmatpush.msra.mxu0 %v474
      %3067 = vmatpush.msra.mxu0 %v472
      %3068 = vmatmul.f32.gmra.mxu0 %v3050
      %v3069 = vpop.f32.mrf.mxu0
      %v3070 = vadd.f32 %v3047, %v3069
      %3071 = vdwg.mxu0
      %3072 = vmatpush.msra.mxu0 0.0
      %3073 = vmatpush.msra.mxu0 0.0
      %3074 = vmatpush.msra.mxu0 0.0
      %3075 = vmatpush.msra.mxu0 0.0
      %3076 = vmatpush.msra.mxu0 0.0
      %3077 = vmatpush.msra.mxu0 0.0
      %3078 = vmatpush.msra.mxu0 0.0
      %3079 = vmatpush.msra.mxu0 0.0
      %3080 = vmatpush.msra.mxu0 0.0
      %3081 = vmatpush.msra.mxu0 0.0
      %3082 = vmatpush.msra.mxu0 0.0
      %3083 = vmatpush.msra.mxu0 0.0
      %3084 = vmatpush.msra.mxu0 %v479
      %3085 = vmatpush.msra.mxu0 %v477
      %3086 = vmatpush.msra.mxu0 %v475
      %3087 = vmatpush.msra.mxu0 %v473
      %3088 = vmatmul.f32.gmra.mxu0 %v3050
      %v3089 = vpop.f32.mrf.mxu0
      %v3090 = vadd.f32 %v3047, %v3089
      %3091 = vdwg.mxu0
      %3092 = vxpose.xlu0.b32.start [1/16] %v2994, 128
      %3093 = vxpose.xlu0.b32.cont [2/16] 0.0, 128
      %3094 = vxpose.xlu0.b32.cont [3/16] 0.0, 128
      %3095 = vxpose.xlu0.b32.cont [4/16] 0.0, 128
      %3096 = vxpose.xlu0.b32.cont [5/16] 0.0, 128
      %3097 = vxpose.xlu0.b32.cont [6/16] 0.0, 128
      %3098 = vxpose.xlu0.b32.cont [7/16] 0.0, 128
      %3099 = vxpose.xlu0.b32.cont [8/16] 0.0, 128
      %3100 = vxpose.xlu0.b32.cont [9/16] 0.0, 128
      %3101 = vxpose.xlu0.b32.cont [10/16] 0.0, 128
      %3102 = vxpose.xlu0.b32.cont [11/16] 0.0, 128
      %3103 = vxpose.xlu0.b32.cont [12/16] 0.0, 128
      %3104 = vxpose.xlu0.b32.cont [13/16] 0.0, 128
      %3105 = vxpose.xlu0.b32.cont [14/16] 0.0, 128
      %3106 = vxpose.xlu0.b32.cont [15/16] 0.0, 128
      %3107 = vxpose.xlu0.b32.end [16/16] 0.0, 128
      %v3108 = vpop.trf.xlu0
      %v3109 = vpop.trf.xlu0
      %v3110 = vpop.trf.xlu0
      %v3111 = vpop.trf.xlu0
      %v3112 = vpop.trf.xlu0
      %v3113 = vpop.trf.xlu0
      %v3114 = vpop.trf.xlu0
      %v3115 = vpop.trf.xlu0
      %v3116 = vpop.trf.xlu0
      %v3117 = vpop.trf.xlu0
      %v3118 = vpop.trf.xlu0
      %v3119 = vpop.trf.xlu0
      %v3120 = vpop.trf.xlu0
      %v3121 = vpop.trf.xlu0
      %v3122 = vpop.trf.xlu0
      %v3123 = vpop.trf.xlu0
      %v3125 = vsel %vm689, %v3108, 0
      %v3128 = vsel %vm689, %v3109, 0
      %v3131 = vsel %vm689, %v3110, 0
      %v3134 = vsel %vm689, %v3111, 0
      %v3137 = vsel %vm689, %v3112, 0
      %v3140 = vsel %vm689, %v3113, 0
      %v3143 = vsel %vm689, %v3114, 0
      %v3146 = vsel %vm689, %v3115, 0
      %v3149 = vsel %vm689, %v3116, 0
      %v3152 = vsel %vm689, %v3117, 0
      %v3155 = vsel %vm689, %v3118, 0
      %v3158 = vsel %vm689, %v3119, 0
      %v3161 = vsel %vm689, %v3120, 0
      %v3164 = vsel %vm689, %v3121, 0
      %v3167 = vsel %vm689, %v3122, 0
      %v3170 = vsel %vm689, %v3123, 0
      %3172 = vmatpush.msra.mxu0 0.0
      %3173 = vmatpush.msra.mxu0 0.0
      %3174 = vmatpush.msra.mxu0 0.0
      %3175 = vmatpush.msra.mxu0 0.0
      %3176 = vmatpush.msra.mxu0 0.0
      %3177 = vmatpush.msra.mxu0 0.0
      %3178 = vmatpush.msra.mxu0 0.0
      %3179 = vmatpush.msra.mxu0 0.0
      %3180 = vmatpush.msra.mxu0 0.0
      %3181 = vmatpush.msra.mxu0 0.0
      %3182 = vmatpush.msra.mxu0 0.0
      %3183 = vmatpush.msra.mxu0 0.0
      %3184 = vmatpush.msra.mxu0 0.0
      %3185 = vmatpush.msra.mxu0 0.0
      %3186 = vmatpush.msra.mxu0 0.0
      %3187 = vmatpush.msra.mxu0 %v3022
      %3188 = vmatmul.f32.gmra.mxu0 %v3125
      %v3189 = vpop.f32.mrf.mxu0
      %v3190 = vadd.f32 0.0, %v3189
      %3191 = vmatmul.f32.gmra.mxu0 %v3128
      %v3192 = vpop.f32.mrf.mxu0
      %v3193 = vadd.f32 0.0, %v3192
      %3194 = vmatmul.f32.gmra.mxu0 %v3131
      %v3195 = vpop.f32.mrf.mxu0
      %v3196 = vadd.f32 0.0, %v3195
      %3197 = vmatmul.f32.gmra.mxu0 %v3134
      %v3198 = vpop.f32.mrf.mxu0
      %v3199 = vadd.f32 0.0, %v3198
      %3200 = vmatmul.f32.gmra.mxu0 %v3137
      %v3201 = vpop.f32.mrf.mxu0
      %v3202 = vadd.f32 0.0, %v3201
      %3203 = vmatmul.f32.gmra.mxu0 %v3140
      %v3204 = vpop.f32.mrf.mxu0
      %v3205 = vadd.f32 0.0, %v3204
      %3206 = vmatmul.f32.gmra.mxu0 %v3143
      %v3207 = vpop.f32.mrf.mxu0
      %v3208 = vadd.f32 0.0, %v3207
      %3209 = vmatmul.f32.gmra.mxu0 %v3146
      %v3210 = vpop.f32.mrf.mxu0
      %v3211 = vadd.f32 0.0, %v3210
      %3212 = vmatmul.f32.gmra.mxu0 %v3149
      %v3213 = vpop.f32.mrf.mxu0
      %v3214 = vadd.f32 0.0, %v3213
      %3215 = vmatmul.f32.gmra.mxu0 %v3152
      %v3216 = vpop.f32.mrf.mxu0
      %v3217 = vadd.f32 0.0, %v3216
      %3218 = vmatmul.f32.gmra.mxu0 %v3155
      %v3219 = vpop.f32.mrf.mxu0
      %v3220 = vadd.f32 0.0, %v3219
      %3221 = vmatmul.f32.gmra.mxu0 %v3158
      %v3222 = vpop.f32.mrf.mxu0
      %v3223 = vadd.f32 0.0, %v3222
      %3224 = vmatmul.f32.gmra.mxu0 %v3161
      %v3225 = vpop.f32.mrf.mxu0
      %v3226 = vadd.f32 0.0, %v3225
      %3227 = vmatmul.f32.gmra.mxu0 %v3164
      %v3228 = vpop.f32.mrf.mxu0
      %v3229 = vadd.f32 0.0, %v3228
      %3230 = vmatmul.f32.gmra.mxu0 %v3167
      %v3231 = vpop.f32.mrf.mxu0
      %v3232 = vadd.f32 0.0, %v3231
      %3233 = vmatmul.f32.gmra.mxu0 %v3170
      %v3234 = vpop.f32.mrf.mxu0
      %v3235 = vadd.f32 0.0, %v3234
      %3236 = vdwg.mxu0
      %3237 = vmatpush.msra.mxu0 0.0
      %3238 = vmatpush.msra.mxu0 0.0
      %3239 = vmatpush.msra.mxu0 0.0
      %3240 = vmatpush.msra.mxu0 0.0
      %3241 = vmatpush.msra.mxu0 0.0
      %3242 = vmatpush.msra.mxu0 0.0
      %3243 = vmatpush.msra.mxu0 0.0
      %3244 = vmatpush.msra.mxu0 0.0
      %3245 = vmatpush.msra.mxu0 0.0
      %3246 = vmatpush.msra.mxu0 0.0
      %3247 = vmatpush.msra.mxu0 0.0
      %3248 = vmatpush.msra.mxu0 0.0
      %3249 = vmatpush.msra.mxu0 0.0
      %3250 = vmatpush.msra.mxu0 0.0
      %3251 = vmatpush.msra.mxu0 0.0
      %3252 = vmatpush.msra.mxu0 %v3042
      %3253 = vmatmul.f32.gmra.mxu0 %v3125
      %v3254 = vpop.f32.mrf.mxu0
      %v3255 = vadd.f32 0.0, %v3254
      %3256 = vmatmul.f32.gmra.mxu0 %v3128
      %v3257 = vpop.f32.mrf.mxu0
      %v3258 = vadd.f32 0.0, %v3257
      %3259 = vmatmul.f32.gmra.mxu0 %v3131
      %v3260 = vpop.f32.mrf.mxu0
      %v3261 = vadd.f32 0.0, %v3260
      %3262 = vmatmul.f32.gmra.mxu0 %v3134
      %v3263 = vpop.f32.mrf.mxu0
      %v3264 = vadd.f32 0.0, %v3263
      %3265 = vmatmul.f32.gmra.mxu0 %v3137
      %v3266 = vpop.f32.mrf.mxu0
      %v3267 = vadd.f32 0.0, %v3266
      %3268 = vmatmul.f32.gmra.mxu0 %v3140
      %v3269 = vpop.f32.mrf.mxu0
      %v3270 = vadd.f32 0.0, %v3269
      %3271 = vmatmul.f32.gmra.mxu0 %v3143
      %v3272 = vpop.f32.mrf.mxu0
      %v3273 = vadd.f32 0.0, %v3272
      %3274 = vmatmul.f32.gmra.mxu0 %v3146
      %v3275 = vpop.f32.mrf.mxu0
      %v3276 = vadd.f32 0.0, %v3275
      %3277 = vmatmul.f32.gmra.mxu0 %v3149
      %v3278 = vpop.f32.mrf.mxu0
      %v3279 = vadd.f32 0.0, %v3278
      %3280 = vmatmul.f32.gmra.mxu0 %v3152
      %v3281 = vpop.f32.mrf.mxu0
      %v3282 = vadd.f32 0.0, %v3281
      %3283 = vmatmul.f32.gmra.mxu0 %v3155
      %v3284 = vpop.f32.mrf.mxu0
      %v3285 = vadd.f32 0.0, %v3284
      %3286 = vmatmul.f32.gmra.mxu0 %v3158
      %v3287 = vpop.f32.mrf.mxu0
      %v3288 = vadd.f32 0.0, %v3287
      %3289 = vmatmul.f32.gmra.mxu0 %v3161
      %v3290 = vpop.f32.mrf.mxu0
      %v3291 = vadd.f32 0.0, %v3290
      %3292 = vmatmul.f32.gmra.mxu0 %v3164
      %v3293 = vpop.f32.mrf.mxu0
      %v3294 = vadd.f32 0.0, %v3293
      %3295 = vmatmul.f32.gmra.mxu0 %v3167
      %v3296 = vpop.f32.mrf.mxu0
      %v3297 = vadd.f32 0.0, %v3296
      %3298 = vmatmul.f32.gmra.mxu0 %v3170
      %v3299 = vpop.f32.mrf.mxu0
      %v3300 = vadd.f32 0.0, %v3299
      %3301 = vdwg.mxu0
      %v3302 = vmax.f32 %v3190, %v3255
      %3303 = vmax.xlane.f32.xlu0 %v3302
      %v3304 = vpop.xlane.xlu0 %3303
      %v3305 = vmax.f32 %v3193, %v3258
      %3306 = vmax.xlane.f32.xlu0 %v3305
      %v3307 = vpop.xlane.xlu0 %3306
      %v3308 = vmax.f32 %v3196, %v3261
      %3309 = vmax.xlane.f32.xlu0 %v3308
      %v3310 = vpop.xlane.xlu0 %3309
      %v3311 = vmax.f32 %v3199, %v3264
      %3312 = vmax.xlane.f32.xlu0 %v3311
      %v3313 = vpop.xlane.xlu0 %3312
      %v3314 = vmax.f32 %v3202, %v3267
      %3315 = vmax.xlane.f32.xlu0 %v3314
      %v3316 = vpop.xlane.xlu0 %3315
      %v3317 = vmax.f32 %v3205, %v3270
      %3318 = vmax.xlane.f32.xlu0 %v3317
      %v3319 = vpop.xlane.xlu0 %3318
      %v3320 = vmax.f32 %v3208, %v3273
      %3321 = vmax.xlane.f32.xlu0 %v3320
      %v3322 = vpop.xlane.xlu0 %3321
      %v3323 = vmax.f32 %v3211, %v3276
      %3324 = vmax.xlane.f32.xlu0 %v3323
      %v3325 = vpop.xlane.xlu0 %3324
      %v3326 = vmax.f32 %v3214, %v3279
      %3327 = vmax.xlane.f32.xlu0 %v3326
      %v3328 = vpop.xlane.xlu0 %3327
      %v3329 = vmax.f32 %v3217, %v3282
      %3330 = vmax.xlane.f32.xlu0 %v3329
      %v3331 = vpop.xlane.xlu0 %3330
      %v3332 = vmax.f32 %v3220, %v3285
      %3333 = vmax.xlane.f32.xlu0 %v3332
      %v3334 = vpop.xlane.xlu0 %3333
      %v3335 = vmax.f32 %v3223, %v3288
      %3336 = vmax.xlane.f32.xlu0 %v3335
      %v3337 = vpop.xlane.xlu0 %3336
      %v3338 = vmax.f32 %v3226, %v3291
      %3339 = vmax.xlane.f32.xlu0 %v3338
      %v3340 = vpop.xlane.xlu0 %3339
      %v3341 = vmax.f32 %v3229, %v3294
      %3342 = vmax.xlane.f32.xlu0 %v3341
      %v3343 = vpop.xlane.xlu0 %3342
      %v3344 = vmax.f32 %v3232, %v3297
      %3345 = vmax.xlane.f32.xlu0 %v3344
      %v3346 = vpop.xlane.xlu0 %3345
      %v3347 = vmax.f32 %v3235, %v3300
      %3348 = vmax.xlane.f32.xlu0 %v3347
      %v3349 = vpop.xlane.xlu0 %3348
      %v3350 = vsub.f32 %v3190, %v3304
      %v3351 = vsub.f32 %v3255, %v3304
      %v3352 = vsub.f32 %v3193, %v3307
      %v3353 = vsub.f32 %v3258, %v3307
      %v3354 = vsub.f32 %v3196, %v3310
      %v3355 = vsub.f32 %v3261, %v3310
      %v3356 = vsub.f32 %v3199, %v3313
      %v3357 = vsub.f32 %v3264, %v3313
      %v3358 = vsub.f32 %v3202, %v3316
      %v3359 = vsub.f32 %v3267, %v3316
      %v3360 = vsub.f32 %v3205, %v3319
      %v3361 = vsub.f32 %v3270, %v3319
      %v3362 = vsub.f32 %v3208, %v3322
      %v3363 = vsub.f32 %v3273, %v3322
      %v3364 = vsub.f32 %v3211, %v3325
      %v3365 = vsub.f32 %v3276, %v3325
      %v3366 = vsub.f32 %v3214, %v3328
      %v3367 = vsub.f32 %v3279, %v3328
      %v3368 = vsub.f32 %v3217, %v3331
      %v3369 = vsub.f32 %v3282, %v3331
      %v3370 = vsub.f32 %v3220, %v3334
      %v3371 = vsub.f32 %v3285, %v3334
      %v3372 = vsub.f32 %v3223, %v3337
      %v3373 = vsub.f32 %v3288, %v3337
      %v3374 = vsub.f32 %v3226, %v3340
      %v3375 = vsub.f32 %v3291, %v3340
      %v3376 = vsub.f32 %v3229, %v3343
      %v3377 = vsub.f32 %v3294, %v3343
      %v3378 = vsub.f32 %v3232, %v3346
      %v3379 = vsub.f32 %v3297, %v3346
      %v3380 = vsub.f32 %v3235, %v3349
      %v3381 = vsub.f32 %v3300, %v3349
      %v3382 = vmul.f32 %v3350, 1.442695
      %v3383 = vpow.pop %v3382
      %v3384 = vmul.f32 %v3351, 1.442695
      %v3385 = vpow.pop %v3384
      %v3386 = vmul.f32 %v3352, 1.442695
      %v3387 = vpow.pop %v3386
      %v3388 = vmul.f32 %v3353, 1.442695
      %v3389 = vpow.pop %v3388
      %v3390 = vmul.f32 %v3354, 1.442695
      %v3391 = vpow.pop %v3390
      %v3392 = vmul.f32 %v3355, 1.442695
      %v3393 = vpow.pop %v3392
      %v3394 = vmul.f32 %v3356, 1.442695
      %v3395 = vpow.pop %v3394
      %v3396 = vmul.f32 %v3357, 1.442695
      %v3397 = vpow.pop %v3396
      %v3398 = vmul.f32 %v3358, 1.442695
      %v3399 = vpow.pop %v3398
      %v3400 = vmul.f32 %v3359, 1.442695
      %v3401 = vpow.pop %v3400
      %v3402 = vmul.f32 %v3360, 1.442695
      %v3403 = vpow.pop %v3402
      %v3404 = vmul.f32 %v3361, 1.442695
      %v3405 = vpow.pop %v3404
      %v3406 = vmul.f32 %v3362, 1.442695
      %v3407 = vpow.pop %v3406
      %v3408 = vmul.f32 %v3363, 1.442695
      %v3409 = vpow.pop %v3408
      %v3410 = vmul.f32 %v3364, 1.442695
      %v3411 = vpow.pop %v3410
      %v3412 = vmul.f32 %v3365, 1.442695
      %v3413 = vpow.pop %v3412
      %v3414 = vmul.f32 %v3366, 1.442695
      %v3415 = vpow.pop %v3414
      %v3416 = vmul.f32 %v3367, 1.442695
      %v3417 = vpow.pop %v3416
      %v3418 = vmul.f32 %v3368, 1.442695
      %v3419 = vpow.pop %v3418
      %v3420 = vmul.f32 %v3369, 1.442695
      %v3421 = vpow.pop %v3420
      %v3422 = vmul.f32 %v3370, 1.442695
      %v3423 = vpow.pop %v3422
      %v3424 = vmul.f32 %v3371, 1.442695
      %v3425 = vpow.pop %v3424
      %v3426 = vmul.f32 %v3372, 1.442695
      %v3427 = vpow.pop %v3426
      %v3428 = vmul.f32 %v3373, 1.442695
      %v3429 = vpow.pop %v3428
      %v3430 = vmul.f32 %v3374, 1.442695
      %v3431 = vpow.pop %v3430
      %v3432 = vmul.f32 %v3375, 1.442695
      %v3433 = vpow.pop %v3432
      %v3434 = vmul.f32 %v3376, 1.442695
      %v3435 = vpow.pop %v3434
      %v3436 = vmul.f32 %v3377, 1.442695
      %v3437 = vpow.pop %v3436
      %v3438 = vmul.f32 %v3378, 1.442695
      %v3439 = vpow.pop %v3438
      %v3440 = vmul.f32 %v3379, 1.442695
      %v3441 = vpow.pop %v3440
      %v3442 = vmul.f32 %v3380, 1.442695
      %v3443 = vpow.pop %v3442
      %v3444 = vmul.f32 %v3381, 1.442695
      %v3445 = vpow.pop %v3444
      %v3446 = vadd.f32 %v3383, %v3385
      %3447 = vadd.xlane.f32.xlu0 %v3446
      %v3448 = vpop.xlane.xlu0 %3447
      %v3449 = vadd.f32 %v3387, %v3389
      %3450 = vadd.xlane.f32.xlu0 %v3449
      %v3451 = vpop.xlane.xlu0 %3450
      %v3452 = vadd.f32 %v3391, %v3393
      %3453 = vadd.xlane.f32.xlu0 %v3452
      %v3454 = vpop.xlane.xlu0 %3453
      %v3455 = vadd.f32 %v3395, %v3397
      %3456 = vadd.xlane.f32.xlu0 %v3455
      %v3457 = vpop.xlane.xlu0 %3456
      %v3458 = vadd.f32 %v3399, %v3401
      %3459 = vadd.xlane.f32.xlu0 %v3458
      %v3460 = vpop.xlane.xlu0 %3459
      %v3461 = vadd.f32 %v3403, %v3405
      %3462 = vadd.xlane.f32.xlu0 %v3461
      %v3463 = vpop.xlane.xlu0 %3462
      %v3464 = vadd.f32 %v3407, %v3409
      %3465 = vadd.xlane.f32.xlu0 %v3464
      %v3466 = vpop.xlane.xlu0 %3465
      %v3467 = vadd.f32 %v3411, %v3413
      %3468 = vadd.xlane.f32.xlu0 %v3467
      %v3469 = vpop.xlane.xlu0 %3468
      %v3470 = vadd.f32 %v3415, %v3417
      %3471 = vadd.xlane.f32.xlu0 %v3470
      %v3472 = vpop.xlane.xlu0 %3471
      %v3473 = vadd.f32 %v3419, %v3421
      %3474 = vadd.xlane.f32.xlu0 %v3473
      %v3475 = vpop.xlane.xlu0 %3474
      %v3476 = vadd.f32 %v3423, %v3425
      %3477 = vadd.xlane.f32.xlu0 %v3476
      %v3478 = vpop.xlane.xlu0 %3477
      %v3479 = vadd.f32 %v3427, %v3429
      %3480 = vadd.xlane.f32.xlu0 %v3479
      %v3481 = vpop.xlane.xlu0 %3480
      %v3482 = vadd.f32 %v3431, %v3433
      %3483 = vadd.xlane.f32.xlu0 %v3482
      %v3484 = vpop.xlane.xlu0 %3483
      %v3485 = vadd.f32 %v3435, %v3437
      %3486 = vadd.xlane.f32.xlu0 %v3485
      %v3487 = vpop.xlane.xlu0 %3486
      %v3488 = vadd.f32 %v3439, %v3441
      %3489 = vadd.xlane.f32.xlu0 %v3488
      %v3490 = vpop.xlane.xlu0 %3489
      %v3491 = vadd.f32 %v3443, %v3445
      %3492 = vadd.xlane.f32.xlu0 %v3491
      %v3493 = vpop.xlane.xlu0 %3492
      %v3494 = vrcp.pop %v3448
      %v3495 = vrcp.pop %v3451
      %v3496 = vrcp.pop %v3454
      %v3497 = vrcp.pop %v3457
      %v3498 = vrcp.pop %v3460
      %v3499 = vrcp.pop %v3463
      %v3500 = vrcp.pop %v3466
      %v3501 = vrcp.pop %v3469
      %v3502 = vrcp.pop %v3472
      %v3503 = vrcp.pop %v3475
      %v3504 = vrcp.pop %v3478
      %v3505 = vrcp.pop %v3481
      %v3506 = vrcp.pop %v3484
      %v3507 = vrcp.pop %v3487
      %v3508 = vrcp.pop %v3490
      %v3509 = vrcp.pop %v3493
      %v3510 = vmul.f32 %v3383, %v3494
      %v3511 = vmul.f32 %v3385, %v3494
      %v3512 = vmul.f32 %v3387, %v3495
      %v3513 = vmul.f32 %v3389, %v3495
      %v3514 = vmul.f32 %v3391, %v3496
      %v3515 = vmul.f32 %v3393, %v3496
      %v3516 = vmul.f32 %v3395, %v3497
      %v3517 = vmul.f32 %v3397, %v3497
      %v3518 = vmul.f32 %v3399, %v3498
      %v3519 = vmul.f32 %v3401, %v3498
      %v3520 = vmul.f32 %v3403, %v3499
      %v3521 = vmul.f32 %v3405, %v3499
      %v3522 = vmul.f32 %v3407, %v3500
      %v3523 = vmul.f32 %v3409, %v3500
      %v3524 = vmul.f32 %v3411, %v3501
      %v3525 = vmul.f32 %v3413, %v3501
      %v3526 = vmul.f32 %v3415, %v3502
      %v3527 = vmul.f32 %v3417, %v3502
      %v3528 = vmul.f32 %v3419, %v3503
      %v3529 = vmul.f32 %v3421, %v3503
      %v3530 = vmul.f32 %v3423, %v3504
      %v3531 = vmul.f32 %v3425, %v3504
      %v3532 = vmul.f32 %v3427, %v3505
      %v3533 = vmul.f32 %v3429, %v3505
      %v3534 = vmul.f32 %v3431, %v3506
      %v3535 = vmul.f32 %v3433, %v3506
      %v3536 = vmul.f32 %v3435, %v3507
      %v3537 = vmul.f32 %v3437, %v3507
      %v3538 = vmul.f32 %v3439, %v3508
      %v3539 = vmul.f32 %v3441, %v3508
      %v3540 = vmul.f32 %v3443, %v3509
      %v3541 = vmul.f32 %v3445, %v3509
      %3542 = vmatpush.xpose.msra.mxu0 %v3540
      %3543 = vmatpush.xpose.msra.mxu0 %v3538
      %3544 = vmatpush.xpose.msra.mxu0 %v3536
      %3545 = vmatpush.xpose.msra.mxu0 %v3534
      %3546 = vmatpush.xpose.msra.mxu0 %v3532
      %3547 = vmatpush.xpose.msra.mxu0 %v3530
      %3548 = vmatpush.xpose.msra.mxu0 %v3528
      %3549 = vmatpush.xpose.msra.mxu0 %v3526
      %3550 = vmatpush.xpose.msra.mxu0 %v3524
      %3551 = vmatpush.xpose.msra.mxu0 %v3522
      %3552 = vmatpush.xpose.msra.mxu0 %v3520
      %3553 = vmatpush.xpose.msra.mxu0 %v3518
      %3554 = vmatpush.xpose.msra.mxu0 %v3516
      %3555 = vmatpush.xpose.msra.mxu0 %v3514
      %3556 = vmatpush.xpose.msra.mxu0 %v3512
      %3557 = vmatpush.xpose.msra.mxu0 %v3510
      %3558 = vmatmul.f32.gmra.mxu0 %v3070
      %v3559 = vpop.f32.mrf.mxu0
      %v3560 = vadd.f32 0.0, %v3559
      %3561 = vdwg.mxu0
      %3562 = vmatpush.xpose.msra.mxu0 %v3541
      %3563 = vmatpush.xpose.msra.mxu0 %v3539
      %3564 = vmatpush.xpose.msra.mxu0 %v3537
      %3565 = vmatpush.xpose.msra.mxu0 %v3535
      %3566 = vmatpush.xpose.msra.mxu0 %v3533
      %3567 = vmatpush.xpose.msra.mxu0 %v3531
      %3568 = vmatpush.xpose.msra.mxu0 %v3529
      %3569 = vmatpush.xpose.msra.mxu0 %v3527
      %3570 = vmatpush.xpose.msra.mxu0 %v3525
      %3571 = vmatpush.xpose.msra.mxu0 %v3523
      %3572 = vmatpush.xpose.msra.mxu0 %v3521
      %3573 = vmatpush.xpose.msra.mxu0 %v3519
      %3574 = vmatpush.xpose.msra.mxu0 %v3517
      %3575 = vmatpush.xpose.msra.mxu0 %v3515
      %3576 = vmatpush.xpose.msra.mxu0 %v3513
      %3577 = vmatpush.xpose.msra.mxu0 %v3511
      %3578 = vmatmul.f32.gmra.mxu0 %v3090
      %v3579 = vpop.f32.mrf.mxu0
      %v3580 = vadd.f32 %v3560, %v3579
      %3581 = vdwg.mxu0
      %v3583 = vsel %vm689, %v2942, 0
      %v3586 = vsel %vm689, %v2943, 0
      %v3589 = vsel %vm689, %v2944, 0
      %v3592 = vsel %vm689, %v2945, 0
      %3594 = vmatpush.msra.mxu0 0.0
      %3595 = vmatpush.msra.mxu0 0.0
      %3596 = vmatpush.msra.mxu0 0.0
      %3597 = vmatpush.msra.mxu0 0.0
      %3598 = vmatpush.msra.mxu0 0.0
      %3599 = vmatpush.msra.mxu0 0.0
      %3600 = vmatpush.msra.mxu0 0.0
      %3601 = vmatpush.msra.mxu0 0.0
      %3602 = vmatpush.msra.mxu0 0.0
      %3603 = vmatpush.msra.mxu0 0.0
      %3604 = vmatpush.msra.mxu0 0.0
      %3605 = vmatpush.msra.mxu0 0.0
      %3606 = vmatpush.msra.mxu0 0.0
      %3607 = vmatpush.msra.mxu0 0.0
      %3608 = vmatpush.msra.mxu0 0.0
      %3609 = vmatpush.msra.mxu0 %v3580
      %3610 = vmatmul.f32.gmra.mxu0 %v3583
      %v3611 = vpop.f32.mrf.mxu0
      %v3612 = vadd.f32 0.0, %v3611
      %3613 = vmatmul.f32.gmra.mxu0 %v3586
      %v3614 = vpop.f32.mrf.mxu0
      %v3615 = vadd.f32 0.0, %v3614
      %3616 = vmatmul.f32.gmra.mxu0 %v3589
      %v3617 = vpop.f32.mrf.mxu0
      %v3618 = vadd.f32 0.0, %v3617
      %3619 = vmatmul.f32.gmra.mxu0 %v3592
      %v3620 = vpop.f32.mrf.mxu0
      %v3621 = vadd.f32 0.0, %v3620
      %3622 = vdwg.mxu0
      %3623 = vxpose.xlu0.b32.start [1/16] %v2995, 128
      %3624 = vxpose.xlu0.b32.cont [2/16] 0.0, 128
      %3625 = vxpose.xlu0.b32.cont [3/16] 0.0, 128
      %3626 = vxpose.xlu0.b32.cont [4/16] 0.0, 128
      %3627 = vxpose.xlu0.b32.cont [5/16] 0.0, 128
      %3628 = vxpose.xlu0.b32.cont [6/16] 0.0, 128
      %3629 = vxpose.xlu0.b32.cont [7/16] 0.0, 128
      %3630 = vxpose.xlu0.b32.cont [8/16] 0.0, 128
      %3631 = vxpose.xlu0.b32.cont [9/16] 0.0, 128
      %3632 = vxpose.xlu0.b32.cont [10/16] 0.0, 128
      %3633 = vxpose.xlu0.b32.cont [11/16] 0.0, 128
      %3634 = vxpose.xlu0.b32.cont [12/16] 0.0, 128
      %3635 = vxpose.xlu0.b32.cont [13/16] 0.0, 128
      %3636 = vxpose.xlu0.b32.cont [14/16] 0.0, 128
      %3637 = vxpose.xlu0.b32.cont [15/16] 0.0, 128
      %3638 = vxpose.xlu0.b32.end [16/16] 0.0, 128
      %v3639 = vpop.trf.xlu0
      %v3640 = vpop.trf.xlu0
      %v3641 = vpop.trf.xlu0
      %v3642 = vpop.trf.xlu0
      %v3643 = vpop.trf.xlu0
      %v3644 = vpop.trf.xlu0
      %v3645 = vpop.trf.xlu0
      %v3646 = vpop.trf.xlu0
      %v3647 = vpop.trf.xlu0
      %v3648 = vpop.trf.xlu0
      %v3649 = vpop.trf.xlu0
      %v3650 = vpop.trf.xlu0
      %v3651 = vpop.trf.xlu0
      %v3652 = vpop.trf.xlu0
      %v3653 = vpop.trf.xlu0
      %v3654 = vpop.trf.xlu0
      %v3656 = vsel %vm689, %v3639, 0
      %v3659 = vsel %vm689, %v3640, 0
      %v3662 = vsel %vm689, %v3641, 0
      %v3665 = vsel %vm689, %v3642, 0
      %v3668 = vsel %vm689, %v3643, 0
      %v3671 = vsel %vm689, %v3644, 0
      %v3674 = vsel %vm689, %v3645, 0
      %v3677 = vsel %vm689, %v3646, 0
      %v3680 = vsel %vm689, %v3647, 0
      %v3683 = vsel %vm689, %v3648, 0
      %v3686 = vsel %vm689, %v3649, 0
      %v3689 = vsel %vm689, %v3650, 0
      %v3692 = vsel %vm689, %v3651, 0
      %v3695 = vsel %vm689, %v3652, 0
      %v3698 = vsel %vm689, %v3653, 0
      %v3701 = vsel %vm689, %v3654, 0
      %3703 = vmatpush.msra.mxu0 0.0
      %3704 = vmatpush.msra.mxu0 0.0
      %3705 = vmatpush.msra.mxu0 0.0
      %3706 = vmatpush.msra.mxu0 0.0
      %3707 = vmatpush.msra.mxu0 0.0
      %3708 = vmatpush.msra.mxu0 0.0
      %3709 = vmatpush.msra.mxu0 0.0
      %3710 = vmatpush.msra.mxu0 0.0
      %3711 = vmatpush.msra.mxu0 0.0
      %3712 = vmatpush.msra.mxu0 0.0
      %3713 = vmatpush.msra.mxu0 0.0
      %3714 = vmatpush.msra.mxu0 0.0
      %3715 = vmatpush.msra.mxu0 0.0
      %3716 = vmatpush.msra.mxu0 0.0
      %3717 = vmatpush.msra.mxu0 0.0
      %3718 = vmatpush.msra.mxu0 %v3022
      %3719 = vmatmul.f32.gmra.mxu0 %v3656
      %v3720 = vpop.f32.mrf.mxu0
      %v3721 = vadd.f32 0.0, %v3720
      %3722 = vmatmul.f32.gmra.mxu0 %v3659
      %v3723 = vpop.f32.mrf.mxu0
      %v3724 = vadd.f32 0.0, %v3723
      %3725 = vmatmul.f32.gmra.mxu0 %v3662
      %v3726 = vpop.f32.mrf.mxu0
      %v3727 = vadd.f32 0.0, %v3726
      %3728 = vmatmul.f32.gmra.mxu0 %v3665
      %v3729 = vpop.f32.mrf.mxu0
      %v3730 = vadd.f32 0.0, %v3729
      %3731 = vmatmul.f32.gmra.mxu0 %v3668
      %v3732 = vpop.f32.mrf.mxu0
      %v3733 = vadd.f32 0.0, %v3732
      %3734 = vmatmul.f32.gmra.mxu0 %v3671
      %v3735 = vpop.f32.mrf.mxu0
      %v3736 = vadd.f32 0.0, %v3735
      %3737 = vmatmul.f32.gmra.mxu0 %v3674
      %v3738 = vpop.f32.mrf.mxu0
      %v3739 = vadd.f32 0.0, %v3738
      %3740 = vmatmul.f32.gmra.mxu0 %v3677
      %v3741 = vpop.f32.mrf.mxu0
      %v3742 = vadd.f32 0.0, %v3741
      %3743 = vmatmul.f32.gmra.mxu0 %v3680
      %v3744 = vpop.f32.mrf.mxu0
      %v3745 = vadd.f32 0.0, %v3744
      %3746 = vmatmul.f32.gmra.mxu0 %v3683
      %v3747 = vpop.f32.mrf.mxu0
      %v3748 = vadd.f32 0.0, %v3747
      %3749 = vmatmul.f32.gmra.mxu0 %v3686
      %v3750 = vpop.f32.mrf.mxu0
      %v3751 = vadd.f32 0.0, %v3750
      %3752 = vmatmul.f32.gmra.mxu0 %v3689
      %v3753 = vpop.f32.mrf.mxu0
      %v3754 = vadd.f32 0.0, %v3753
      %3755 = vmatmul.f32.gmra.mxu0 %v3692
      %v3756 = vpop.f32.mrf.mxu0
      %v3757 = vadd.f32 0.0, %v3756
      %3758 = vmatmul.f32.gmra.mxu0 %v3695
      %v3759 = vpop.f32.mrf.mxu0
      %v3760 = vadd.f32 0.0, %v3759
      %3761 = vmatmul.f32.gmra.mxu0 %v3698
      %v3762 = vpop.f32.mrf.mxu0
      %v3763 = vadd.f32 0.0, %v3762
      %3764 = vmatmul.f32.gmra.mxu0 %v3701
      %v3765 = vpop.f32.mrf.mxu0
      %v3766 = vadd.f32 0.0, %v3765
      %3767 = vdwg.mxu0
      %3768 = vmatpush.msra.mxu0 0.0
      %3769 = vmatpush.msra.mxu0 0.0
      %3770 = vmatpush.msra.mxu0 0.0
      %3771 = vmatpush.msra.mxu0 0.0
      %3772 = vmatpush.msra.mxu0 0.0
      %3773 = vmatpush.msra.mxu0 0.0
      %3774 = vmatpush.msra.mxu0 0.0
      %3775 = vmatpush.msra.mxu0 0.0
      %3776 = vmatpush.msra.mxu0 0.0
      %3777 = vmatpush.msra.mxu0 0.0
      %3778 = vmatpush.msra.mxu0 0.0
      %3779 = vmatpush.msra.mxu0 0.0
      %3780 = vmatpush.msra.mxu0 0.0
      %3781 = vmatpush.msra.mxu0 0.0
      %3782 = vmatpush.msra.mxu0 0.0
      %3783 = vmatpush.msra.mxu0 %v3042
      %3784 = vmatmul.f32.gmra.mxu0 %v3656
      %v3785 = vpop.f32.mrf.mxu0
      %v3786 = vadd.f32 0.0, %v3785
      %3787 = vmatmul.f32.gmra.mxu0 %v3659
      %v3788 = vpop.f32.mrf.mxu0
      %v3789 = vadd.f32 0.0, %v3788
      %3790 = vmatmul.f32.gmra.mxu0 %v3662
      %v3791 = vpop.f32.mrf.mxu0
      %v3792 = vadd.f32 0.0, %v3791
      %3793 = vmatmul.f32.gmra.mxu0 %v3665
      %v3794 = vpop.f32.mrf.mxu0
      %v3795 = vadd.f32 0.0, %v3794
      %3796 = vmatmul.f32.gmra.mxu0 %v3668
      %v3797 = vpop.f32.mrf.mxu0
      %v3798 = vadd.f32 0.0, %v3797
      %3799 = vmatmul.f32.gmra.mxu0 %v3671
      %v3800 = vpop.f32.mrf.mxu0
      %v3801 = vadd.f32 0.0, %v3800
      %3802 = vmatmul.f32.gmra.mxu0 %v3674
      %v3803 = vpop.f32.mrf.mxu0
      %v3804 = vadd.f32 0.0, %v3803
      %3805 = vmatmul.f32.gmra.mxu0 %v3677
      %v3806 = vpop.f32.mrf.mxu0
      %v3807 = vadd.f32 0.0, %v3806
      %3808 = vmatmul.f32.gmra.mxu0 %v3680
      %v3809 = vpop.f32.mrf.mxu0
      %v3810 = vadd.f32 0.0, %v3809
      %3811 = vmatmul.f32.gmra.mxu0 %v3683
      %v3812 = vpop.f32.mrf.mxu0
      %v3813 = vadd.f32 0.0, %v3812
      %3814 = vmatmul.f32.gmra.mxu0 %v3686
      %v3815 = vpop.f32.mrf.mxu0
      %v3816 = vadd.f32 0.0, %v3815
      %3817 = vmatmul.f32.gmra.mxu0 %v3689
      %v3818 = vpop.f32.mrf.mxu0
      %v3819 = vadd.f32 0.0, %v3818
      %3820 = vmatmul.f32.gmra.mxu0 %v3692
      %v3821 = vpop.f32.mrf.mxu0
      %v3822 = vadd.f32 0.0, %v3821
      %3823 = vmatmul.f32.gmra.mxu0 %v3695
      %v3824 = vpop.f32.mrf.mxu0
      %v3825 = vadd.f32 0.0, %v3824
      %3826 = vmatmul.f32.gmra.mxu0 %v3698
      %v3827 = vpop.f32.mrf.mxu0
      %v3828 = vadd.f32 0.0, %v3827
      %3829 = vmatmul.f32.gmra.mxu0 %v3701
      %v3830 = vpop.f32.mrf.mxu0
      %v3831 = vadd.f32 0.0, %v3830
      %3832 = vdwg.mxu0
      %v3833 = vmax.f32 %v3721, %v3786
      %3834 = vmax.xlane.f32.xlu0 %v3833
      %v3835 = vpop.xlane.xlu0 %3834
      %v3836 = vmax.f32 %v3724, %v3789
      %3837 = vmax.xlane.f32.xlu0 %v3836
      %v3838 = vpop.xlane.xlu0 %3837
      %v3839 = vmax.f32 %v3727, %v3792
      %3840 = vmax.xlane.f32.xlu0 %v3839
      %v3841 = vpop.xlane.xlu0 %3840
      %v3842 = vmax.f32 %v3730, %v3795
      %3843 = vmax.xlane.f32.xlu0 %v3842
      %v3844 = vpop.xlane.xlu0 %3843
      %v3845 = vmax.f32 %v3733, %v3798
      %3846 = vmax.xlane.f32.xlu0 %v3845
      %v3847 = vpop.xlane.xlu0 %3846
      %v3848 = vmax.f32 %v3736, %v3801
      %3849 = vmax.xlane.f32.xlu0 %v3848
      %v3850 = vpop.xlane.xlu0 %3849
      %v3851 = vmax.f32 %v3739, %v3804
      %3852 = vmax.xlane.f32.xlu0 %v3851
      %v3853 = vpop.xlane.xlu0 %3852
      %v3854 = vmax.f32 %v3742, %v3807
      %3855 = vmax.xlane.f32.xlu0 %v3854
      %v3856 = vpop.xlane.xlu0 %3855
      %v3857 = vmax.f32 %v3745, %v3810
      %3858 = vmax.xlane.f32.xlu0 %v3857
      %v3859 = vpop.xlane.xlu0 %3858
      %v3860 = vmax.f32 %v3748, %v3813
      %3861 = vmax.xlane.f32.xlu0 %v3860
      %v3862 = vpop.xlane.xlu0 %3861
      %v3863 = vmax.f32 %v3751, %v3816
      %3864 = vmax.xlane.f32.xlu0 %v3863
      %v3865 = vpop.xlane.xlu0 %3864
      %v3866 = vmax.f32 %v3754, %v3819
      %3867 = vmax.xlane.f32.xlu0 %v3866
      %v3868 = vpop.xlane.xlu0 %3867
      %v3869 = vmax.f32 %v3757, %v3822
      %3870 = vmax.xlane.f32.xlu0 %v3869
      %v3871 = vpop.xlane.xlu0 %3870
      %v3872 = vmax.f32 %v3760, %v3825
      %3873 = vmax.xlane.f32.xlu0 %v3872
      %v3874 = vpop.xlane.xlu0 %3873
      %v3875 = vmax.f32 %v3763, %v3828
      %3876 = vmax.xlane.f32.xlu0 %v3875
      %v3877 = vpop.xlane.xlu0 %3876
      %v3878 = vmax.f32 %v3766, %v3831
      %3879 = vmax.xlane.f32.xlu0 %v3878
      %v3880 = vpop.xlane.xlu0 %3879
      %v3881 = vsub.f32 %v3721, %v3835
      %v3882 = vsub.f32 %v3786, %v3835
      %v3883 = vsub.f32 %v3724, %v3838
      %v3884 = vsub.f32 %v3789, %v3838
      %v3885 = vsub.f32 %v3727, %v3841
      %v3886 = vsub.f32 %v3792, %v3841
      %v3887 = vsub.f32 %v3730, %v3844
      %v3888 = vsub.f32 %v3795, %v3844
      %v3889 = vsub.f32 %v3733, %v3847
      %v3890 = vsub.f32 %v3798, %v3847
      %v3891 = vsub.f32 %v3736, %v3850
      %v3892 = vsub.f32 %v3801, %v3850
      %v3893 = vsub.f32 %v3739, %v3853
      %v3894 = vsub.f32 %v3804, %v3853
      %v3895 = vsub.f32 %v3742, %v3856
      %v3896 = vsub.f32 %v3807, %v3856
      %v3897 = vsub.f32 %v3745, %v3859
      %v3898 = vsub.f32 %v3810, %v3859
      %v3899 = vsub.f32 %v3748, %v3862
      %v3900 = vsub.f32 %v3813, %v3862
      %v3901 = vsub.f32 %v3751, %v3865
      %v3902 = vsub.f32 %v3816, %v3865
      %v3903 = vsub.f32 %v3754, %v3868
      %v3904 = vsub.f32 %v3819, %v3868
      %v3905 = vsub.f32 %v3757, %v3871
      %v3906 = vsub.f32 %v3822, %v3871
      %v3907 = vsub.f32 %v3760, %v3874
      %v3908 = vsub.f32 %v3825, %v3874
      %v3909 = vsub.f32 %v3763, %v3877
      %v3910 = vsub.f32 %v3828, %v3877
      %v3911 = vsub.f32 %v3766, %v3880
      %v3912 = vsub.f32 %v3831, %v3880
      %v3913 = vmul.f32 %v3881, 1.442695
      %v3914 = vpow.pop %v3913
      %v3915 = vmul.f32 %v3882, 1.442695
      %v3916 = vpow.pop %v3915
      %v3917 = vmul.f32 %v3883, 1.442695
      %v3918 = vpow.pop %v3917
      %v3919 = vmul.f32 %v3884, 1.442695
      %v3920 = vpow.pop %v3919
      %v3921 = vmul.f32 %v3885, 1.442695
      %v3922 = vpow.pop %v3921
      %v3923 = vmul.f32 %v3886, 1.442695
      %v3924 = vpow.pop %v3923
      %v3925 = vmul.f32 %v3887, 1.442695
      %v3926 = vpow.pop %v3925
      %v3927 = vmul.f32 %v3888, 1.442695
      %v3928 = vpow.pop %v3927
      %v3929 = vmul.f32 %v3889, 1.442695
      %v3930 = vpow.pop %v3929
      %v3931 = vmul.f32 %v3890, 1.442695
      %v3932 = vpow.pop %v3931
      %v3933 = vmul.f32 %v3891, 1.442695
      %v3934 = vpow.pop %v3933
      %v3935 = vmul.f32 %v3892, 1.442695
      %v3936 = vpow.pop %v3935
      %v3937 = vmul.f32 %v3893, 1.442695
      %v3938 = vpow.pop %v3937
      %v3939 = vmul.f32 %v3894, 1.442695
      %v3940 = vpow.pop %v3939
      %v3941 = vmul.f32 %v3895, 1.442695
      %v3942 = vpow.pop %v3941
      %v3943 = vmul.f32 %v3896, 1.442695
      %v3944 = vpow.pop %v3943
      %v3945 = vmul.f32 %v3897, 1.442695
      %v3946 = vpow.pop %v3945
      %v3947 = vmul.f32 %v3898, 1.442695
      %v3948 = vpow.pop %v3947
      %v3949 = vmul.f32 %v3899, 1.442695
      %v3950 = vpow.pop %v3949
      %v3951 = vmul.f32 %v3900, 1.442695
      %v3952 = vpow.pop %v3951
      %v3953 = vmul.f32 %v3901, 1.442695
      %v3954 = vpow.pop %v3953
      %v3955 = vmul.f32 %v3902, 1.442695
      %v3956 = vpow.pop %v3955
      %v3957 = vmul.f32 %v3903, 1.442695
      %v3958 = vpow.pop %v3957
      %v3959 = vmul.f32 %v3904, 1.442695
      %v3960 = vpow.pop %v3959
      %v3961 = vmul.f32 %v3905, 1.442695
      %v3962 = vpow.pop %v3961
      %v3963 = vmul.f32 %v3906, 1.442695
      %v3964 = vpow.pop %v3963
      %v3965 = vmul.f32 %v3907, 1.442695
      %v3966 = vpow.pop %v3965
      %v3967 = vmul.f32 %v3908, 1.442695
      %v3968 = vpow.pop %v3967
      %v3969 = vmul.f32 %v3909, 1.442695
      %v3970 = vpow.pop %v3969
      %v3971 = vmul.f32 %v3910, 1.442695
      %v3972 = vpow.pop %v3971
      %v3973 = vmul.f32 %v3911, 1.442695
      %v3974 = vpow.pop %v3973
      %v3975 = vmul.f32 %v3912, 1.442695
      %v3976 = vpow.pop %v3975
      %v3977 = vadd.f32 %v3914, %v3916
      %3978 = vadd.xlane.f32.xlu0 %v3977
      %v3979 = vpop.xlane.xlu0 %3978
      %v3980 = vadd.f32 %v3918, %v3920
      %3981 = vadd.xlane.f32.xlu0 %v3980
      %v3982 = vpop.xlane.xlu0 %3981
      %v3983 = vadd.f32 %v3922, %v3924
      %3984 = vadd.xlane.f32.xlu0 %v3983
      %v3985 = vpop.xlane.xlu0 %3984
      %v3986 = vadd.f32 %v3926, %v3928
      %3987 = vadd.xlane.f32.xlu0 %v3986
      %v3988 = vpop.xlane.xlu0 %3987
      %v3989 = vadd.f32 %v3930, %v3932
      %3990 = vadd.xlane.f32.xlu0 %v3989
      %v3991 = vpop.xlane.xlu0 %3990
      %v3992 = vadd.f32 %v3934, %v3936
      %3993 = vadd.xlane.f32.xlu0 %v3992
      %v3994 = vpop.xlane.xlu0 %3993
      %v3995 = vadd.f32 %v3938, %v3940
      %3996 = vadd.xlane.f32.xlu0 %v3995
      %v3997 = vpop.xlane.xlu0 %3996
      %v3998 = vadd.f32 %v3942, %v3944
      %3999 = vadd.xlane.f32.xlu0 %v3998
      %v4000 = vpop.xlane.xlu0 %3999
      %v4001 = vadd.f32 %v3946, %v3948
      %4002 = vadd.xlane.f32.xlu0 %v4001
      %v4003 = vpop.xlane.xlu0 %4002
      %v4004 = vadd.f32 %v3950, %v3952
      %4005 = vadd.xlane.f32.xlu0 %v4004
      %v4006 = vpop.xlane.xlu0 %4005
      %v4007 = vadd.f32 %v3954, %v3956
      %4008 = vadd.xlane.f32.xlu0 %v4007
      %v4009 = vpop.xlane.xlu0 %4008
      %v4010 = vadd.f32 %v3958, %v3960
      %4011 = vadd.xlane.f32.xlu0 %v4010
      %v4012 = vpop.xlane.xlu0 %4011
      %v4013 = vadd.f32 %v3962, %v3964
      %4014 = vadd.xlane.f32.xlu0 %v4013
      %v4015 = vpop.xlane.xlu0 %4014
      %v4016 = vadd.f32 %v3966, %v3968
      %4017 = vadd.xlane.f32.xlu0 %v4016
      %v4018 = vpop.xlane.xlu0 %4017
      %v4019 = vadd.f32 %v3970, %v3972
      %4020 = vadd.xlane.f32.xlu0 %v4019
      %v4021 = vpop.xlane.xlu0 %4020
      %v4022 = vadd.f32 %v3974, %v3976
      %4023 = vadd.xlane.f32.xlu0 %v4022
      %v4024 = vpop.xlane.xlu0 %4023
      %v4025 = vrcp.pop %v3979
      %v4026 = vrcp.pop %v3982
      %v4027 = vrcp.pop %v3985
      %v4028 = vrcp.pop %v3988
      %v4029 = vrcp.pop %v3991
      %v4030 = vrcp.pop %v3994
      %v4031 = vrcp.pop %v3997
      %v4032 = vrcp.pop %v4000
      %v4033 = vrcp.pop %v4003
      %v4034 = vrcp.pop %v4006
      %v4035 = vrcp.pop %v4009
      %v4036 = vrcp.pop %v4012
      %v4037 = vrcp.pop %v4015
      %v4038 = vrcp.pop %v4018
      %v4039 = vrcp.pop %v4021
      %v4040 = vrcp.pop %v4024
      %v4041 = vmul.f32 %v3914, %v4025
      %v4042 = vmul.f32 %v3916, %v4025
      %v4043 = vmul.f32 %v3918, %v4026
      %v4044 = vmul.f32 %v3920, %v4026
      %v4045 = vmul.f32 %v3922, %v4027
      %v4046 = vmul.f32 %v3924, %v4027
      %v4047 = vmul.f32 %v3926, %v4028
      %v4048 = vmul.f32 %v3928, %v4028
      %v4049 = vmul.f32 %v3930, %v4029
      %v4050 = vmul.f32 %v3932, %v4029
      %v4051 = vmul.f32 %v3934, %v4030
      %v4052 = vmul.f32 %v3936, %v4030
      %v4053 = vmul.f32 %v3938, %v4031
      %v4054 = vmul.f32 %v3940, %v4031
      %v4055 = vmul.f32 %v3942, %v4032
      %v4056 = vmul.f32 %v3944, %v4032
      %v4057 = vmul.f32 %v3946, %v4033
      %v4058 = vmul.f32 %v3948, %v4033
      %v4059 = vmul.f32 %v3950, %v4034
      %v4060 = vmul.f32 %v3952, %v4034
      %v4061 = vmul.f32 %v3954, %v4035
      %v4062 = vmul.f32 %v3956, %v4035
      %v4063 = vmul.f32 %v3958, %v4036
      %v4064 = vmul.f32 %v3960, %v4036
      %v4065 = vmul.f32 %v3962, %v4037
      %v4066 = vmul.f32 %v3964, %v4037
      %v4067 = vmul.f32 %v3966, %v4038
      %v4068 = vmul.f32 %v3968, %v4038
      %v4069 = vmul.f32 %v3970, %v4039
      %v4070 = vmul.f32 %v3972, %v4039
      %v4071 = vmul.f32 %v3974, %v4040
      %v4072 = vmul.f32 %v3976, %v4040
      %4073 = vmatpush.xpose.msra.mxu0 %v4071
      %4074 = vmatpush.xpose.msra.mxu0 %v4069
      %4075 = vmatpush.xpose.msra.mxu0 %v4067
      %4076 = vmatpush.xpose.msra.mxu0 %v4065
      %4077 = vmatpush.xpose.msra.mxu0 %v4063
      %4078 = vmatpush.xpose.msra.mxu0 %v4061
      %4079 = vmatpush.xpose.msra.mxu0 %v4059
      %4080 = vmatpush.xpose.msra.mxu0 %v4057
      %4081 = vmatpush.xpose.msra.mxu0 %v4055
      %4082 = vmatpush.xpose.msra.mxu0 %v4053
      %4083 = vmatpush.xpose.msra.mxu0 %v4051
      %4084 = vmatpush.xpose.msra.mxu0 %v4049
      %4085 = vmatpush.xpose.msra.mxu0 %v4047
      %4086 = vmatpush.xpose.msra.mxu0 %v4045
      %4087 = vmatpush.xpose.msra.mxu0 %v4043
      %4088 = vmatpush.xpose.msra.mxu0 %v4041
      %4089 = vmatmul.f32.gmra.mxu0 %v3070
      %v4090 = vpop.f32.mrf.mxu0
      %v4091 = vadd.f32 0.0, %v4090
      %4092 = vdwg.mxu0
      %4093 = vmatpush.xpose.msra.mxu0 %v4072
      %4094 = vmatpush.xpose.msra.mxu0 %v4070
      %4095 = vmatpush.xpose.msra.mxu0 %v4068
      %4096 = vmatpush.xpose.msra.mxu0 %v4066
      %4097 = vmatpush.xpose.msra.mxu0 %v4064
      %4098 = vmatpush.xpose.msra.mxu0 %v4062
      %4099 = vmatpush.xpose.msra.mxu0 %v4060
      %4100 = vmatpush.xpose.msra.mxu0 %v4058
      %4101 = vmatpush.xpose.msra.mxu0 %v4056
      %4102 = vmatpush.xpose.msra.mxu0 %v4054
      %4103 = vmatpush.xpose.msra.mxu0 %v4052
      %4104 = vmatpush.xpose.msra.mxu0 %v4050
      %4105 = vmatpush.xpose.msra.mxu0 %v4048
      %4106 = vmatpush.xpose.msra.mxu0 %v4046
      %4107 = vmatpush.xpose.msra.mxu0 %v4044
      %4108 = vmatpush.xpose.msra.mxu0 %v4042
      %4109 = vmatmul.f32.gmra.mxu0 %v3090
      %v4110 = vpop.f32.mrf.mxu0
      %v4111 = vadd.f32 %v4091, %v4110
      %4112 = vdwg.mxu0
      %4113 = vmatpush.msra.mxu0 0.0
      %4114 = vmatpush.msra.mxu0 0.0
      %4115 = vmatpush.msra.mxu0 0.0
      %4116 = vmatpush.msra.mxu0 0.0
      %4117 = vmatpush.msra.mxu0 0.0
      %4118 = vmatpush.msra.mxu0 0.0
      %4119 = vmatpush.msra.mxu0 0.0
      %4120 = vmatpush.msra.mxu0 0.0
      %4121 = vmatpush.msra.mxu0 0.0
      %4122 = vmatpush.msra.mxu0 0.0
      %4123 = vmatpush.msra.mxu0 0.0
      %4124 = vmatpush.msra.mxu0 0.0
      %4125 = vmatpush.msra.mxu0 0.0
      %4126 = vmatpush.msra.mxu0 0.0
      %4127 = vmatpush.msra.mxu0 0.0
      %4128 = vmatpush.msra.mxu0 %v4111
      %4129 = vmatmul.f32.gmra.mxu0 %v3583
      %v4130 = vpop.f32.mrf.mxu0
      %v4131 = vadd.f32 0.0, %v4130
      %4132 = vmatmul.f32.gmra.mxu0 %v3586
      %v4133 = vpop.f32.mrf.mxu0
      %v4134 = vadd.f32 0.0, %v4133
      %4135 = vmatmul.f32.gmra.mxu0 %v3589
      %v4136 = vpop.f32.mrf.mxu0
      %v4137 = vadd.f32 0.0, %v4136
      %4138 = vmatmul.f32.gmra.mxu0 %v3592
      %v4139 = vpop.f32.mrf.mxu0
      %v4140 = vadd.f32 0.0, %v4139
      %4141 = vdwg.mxu0
      %v4142 = vadd.f32 %v2925, %v3612
      %v4143 = vadd.f32 %v2926, %v4131
      %v4144 = vadd.f32 %v2927, %v3615
      %v4145 = vadd.f32 %v2928, %v4134
      %v4146 = vadd.f32 %v2929, %v3618
      %v4147 = vadd.f32 %v2930, %v4137
      %v4148 = vadd.f32 %v2931, %v3621
      %v4149 = vadd.f32 %v2932, %v4140
      %s4150 = scalar_lea.vmem %s1, 72
      %v4151 = vld [vmem:[%s4150] sm:$0xff]
      %v4152 = vld [vmem:[%s4150 + $0x8] sm:$0xff]
      %v4153 = vld [vmem:[%s4150 + $0x10] sm:$0xff]
      %s4154 = scalar_lea.vmem %s2, 72
      %v4155 = vld [vmem:[%s4154] sm:$0xff]
      %v4156 = vld [vmem:[%s4154 + $0x8] sm:$0xff]
      %v4157 = vld [vmem:[%s4154 + $0x10] sm:$0xff]
      %s4158 = scalar_lea.vmem %s3, 96
      %v4159 = vld [vmem:[%s4158] sm:$0xff]
      %v4160 = vld [vmem:[%s4158 + $0x8] sm:$0xff]
      %v4161 = vld [vmem:[%s4158 + $0x10] sm:$0xff]
      %v4162 = vld [vmem:[%s4158 + $0x18] sm:$0xff]
      %4164 = vset.pattern.permute.xlu0 0
      %4165 = vperm.xlu0 %4164, %v4155
      %v4166 = vpop.permute.xlu0 %4165
      %v4169 = vsel %vm515, %v4151, 0
      %4171 = vmatpush.msra.mxu0 0.0
      %4172 = vmatpush.msra.mxu0 0.0
      %4173 = vmatpush.msra.mxu0 0.0
      %4174 = vmatpush.msra.mxu0 0.0
      %4175 = vmatpush.msra.mxu0 0.0
      %4176 = vmatpush.msra.mxu0 0.0
      %4177 = vmatpush.msra.mxu0 0.0
      %4178 = vmatpush.msra.mxu0 0.0
      %4179 = vmatpush.msra.mxu0 0.0
      %4180 = vmatpush.msra.mxu0 0.0
      %4181 = vmatpush.msra.mxu0 0.0
      %4182 = vmatpush.msra.mxu0 0.0
      %4183 = vmatpush.msra.mxu0 %v478
      %4184 = vmatpush.msra.mxu0 %v476
      %4185 = vmatpush.msra.mxu0 %v474
      %4186 = vmatpush.msra.mxu0 %v472
      %4187 = vmatmul.f32.gmra.mxu0 %v4169
      %v4188 = vpop.f32.mrf.mxu0
      %v4189 = vadd.f32 %v4166, %v4188
      %4190 = vdwg.mxu0
      %4191 = vmatpush.msra.mxu0 0.0
      %4192 = vmatpush.msra.mxu0 0.0
      %4193 = vmatpush.msra.mxu0 0.0
      %4194 = vmatpush.msra.mxu0 0.0
      %4195 = vmatpush.msra.mxu0 0.0
      %4196 = vmatpush.msra.mxu0 0.0
      %4197 = vmatpush.msra.mxu0 0.0
      %4198 = vmatpush.msra.mxu0 0.0
      %4199 = vmatpush.msra.mxu0 0.0
      %4200 = vmatpush.msra.mxu0 0.0
      %4201 = vmatpush.msra.mxu0 0.0
      %4202 = vmatpush.msra.mxu0 0.0
      %4203 = vmatpush.msra.mxu0 %v479
      %4204 = vmatpush.msra.mxu0 %v477
      %4205 = vmatpush.msra.mxu0 %v475
      %4206 = vmatpush.msra.mxu0 %v473
      %4207 = vmatmul.f32.gmra.mxu0 %v4169
      %v4208 = vpop.f32.mrf.mxu0
      %v4209 = vadd.f32 %v4166, %v4208
      %4210 = vdwg.mxu0
      %v4211 = vmul.f32 %v4189, 0.35355338
      %v4212 = vmul.f32 %v4209, 0.35355338
      %4214 = vset.pattern.permute.xlu0 0
      %4215 = vperm.xlu0 %4214, %v4156
      %v4216 = vpop.permute.xlu0 %4215
      %v4219 = vsel %vm515, %v4152, 0
      %4221 = vmatpush.msra.mxu0 0.0
      %4222 = vmatpush.msra.mxu0 0.0
      %4223 = vmatpush.msra.mxu0 0.0
      %4224 = vmatpush.msra.mxu0 0.0
      %4225 = vmatpush.msra.mxu0 0.0
      %4226 = vmatpush.msra.mxu0 0.0
      %4227 = vmatpush.msra.mxu0 0.0
      %4228 = vmatpush.msra.mxu0 0.0
      %4229 = vmatpush.msra.mxu0 0.0
      %4230 = vmatpush.msra.mxu0 0.0
      %4231 = vmatpush.msra.mxu0 0.0
      %4232 = vmatpush.msra.mxu0 0.0
      %4233 = vmatpush.msra.mxu0 %v478
      %4234 = vmatpush.msra.mxu0 %v476
      %4235 = vmatpush.msra.mxu0 %v474
      %4236 = vmatpush.msra.mxu0 %v472
      %4237 = vmatmul.f32.gmra.mxu0 %v4219
      %v4238 = vpop.f32.mrf.mxu0
      %v4239 = vadd.f32 %v4216, %v4238
      %4240 = vdwg.mxu0
      %4241 = vmatpush.msra.mxu0 0.0
      %4242 = vmatpush.msra.mxu0 0.0
      %4243 = vmatpush.msra.mxu0 0.0
      %4244 = vmatpush.msra.mxu0 0.0
      %4245 = vmatpush.msra.mxu0 0.0
      %4246 = vmatpush.msra.mxu0 0.0
      %4247 = vmatpush.msra.mxu0 0.0
      %4248 = vmatpush.msra.mxu0 0.0
      %4249 = vmatpush.msra.mxu0 0.0
      %4250 = vmatpush.msra.mxu0 0.0
      %4251 = vmatpush.msra.mxu0 0.0
      %4252 = vmatpush.msra.mxu0 0.0
      %4253 = vmatpush.msra.mxu0 %v479
      %4254 = vmatpush.msra.mxu0 %v477
      %4255 = vmatpush.msra.mxu0 %v475
      %4256 = vmatpush.msra.mxu0 %v473
      %4257 = vmatmul.f32.gmra.mxu0 %v4219
      %v4258 = vpop.f32.mrf.mxu0
      %v4259 = vadd.f32 %v4216, %v4258
      %4260 = vdwg.mxu0
      %4262 = vset.pattern.permute.xlu0 0
      %4263 = vperm.xlu0 %4262, %v4157
      %v4264 = vpop.permute.xlu0 %4263
      %v4267 = vsel %vm515, %v4153, 0
      %4269 = vmatpush.msra.mxu0 0.0
      %4270 = vmatpush.msra.mxu0 0.0
      %4271 = vmatpush.msra.mxu0 0.0
      %4272 = vmatpush.msra.mxu0 0.0
      %4273 = vmatpush.msra.mxu0 0.0
      %4274 = vmatpush.msra.mxu0 0.0
      %4275 = vmatpush.msra.mxu0 0.0
      %4276 = vmatpush.msra.mxu0 0.0
      %4277 = vmatpush.msra.mxu0 0.0
      %4278 = vmatpush.msra.mxu0 0.0
      %4279 = vmatpush.msra.mxu0 0.0
      %4280 = vmatpush.msra.mxu0 0.0
      %4281 = vmatpush.msra.mxu0 %v478
      %4282 = vmatpush.msra.mxu0 %v476
      %4283 = vmatpush.msra.mxu0 %v474
      %4284 = vmatpush.msra.mxu0 %v472
      %4285 = vmatmul.f32.gmra.mxu0 %v4267
      %v4286 = vpop.f32.mrf.mxu0
      %v4287 = vadd.f32 %v4264, %v4286
      %4288 = vdwg.mxu0
      %4289 = vmatpush.msra.mxu0 0.0
      %4290 = vmatpush.msra.mxu0 0.0
      %4291 = vmatpush.msra.mxu0 0.0
      %4292 = vmatpush.msra.mxu0 0.0
      %4293 = vmatpush.msra.mxu0 0.0
      %4294 = vmatpush.msra.mxu0 0.0
      %4295 = vmatpush.msra.mxu0 0.0
      %4296 = vmatpush.msra.mxu0 0.0
      %4297 = vmatpush.msra.mxu0 0.0
      %4298 = vmatpush.msra.mxu0 0.0
      %4299 = vmatpush.msra.mxu0 0.0
      %4300 = vmatpush.msra.mxu0 0.0
      %4301 = vmatpush.msra.mxu0 %v479
      %4302 = vmatpush.msra.mxu0 %v477
      %4303 = vmatpush.msra.mxu0 %v475
      %4304 = vmatpush.msra.mxu0 %v473
      %4305 = vmatmul.f32.gmra.mxu0 %v4267
      %v4306 = vpop.f32.mrf.mxu0
      %v4307 = vadd.f32 %v4264, %v4306
      %4308 = vdwg.mxu0
      %4309 = vxpose.xlu0.b32.start [1/16] %v4211, 128
      %4310 = vxpose.xlu0.b32.cont [2/16] 0.0, 128
      %4311 = vxpose.xlu0.b32.cont [3/16] 0.0, 128
      %4312 = vxpose.xlu0.b32.cont [4/16] 0.0, 128
      %4313 = vxpose.xlu0.b32.cont [5/16] 0.0, 128
      %4314 = vxpose.xlu0.b32.cont [6/16] 0.0, 128
      %4315 = vxpose.xlu0.b32.cont [7/16] 0.0, 128
      %4316 = vxpose.xlu0.b32.cont [8/16] 0.0, 128
      %4317 = vxpose.xlu0.b32.cont [9/16] 0.0, 128
      %4318 = vxpose.xlu0.b32.cont [10/16] 0.0, 128
      %4319 = vxpose.xlu0.b32.cont [11/16] 0.0, 128
      %4320 = vxpose.xlu0.b32.cont [12/16] 0.0, 128
      %4321 = vxpose.xlu0.b32.cont [13/16] 0.0, 128
      %4322 = vxpose.xlu0.b32.cont [14/16] 0.0, 128
      %4323 = vxpose.xlu0.b32.cont [15/16] 0.0, 128
      %4324 = vxpose.xlu0.b32.end [16/16] 0.0, 128
      %v4325 = vpop.trf.xlu0
      %v4326 = vpop.trf.xlu0
      %v4327 = vpop.trf.xlu0
      %v4328 = vpop.trf.xlu0
      %v4329 = vpop.trf.xlu0
      %v4330 = vpop.trf.xlu0
      %v4331 = vpop.trf.xlu0
      %v4332 = vpop.trf.xlu0
      %v4333 = vpop.trf.xlu0
      %v4334 = vpop.trf.xlu0
      %v4335 = vpop.trf.xlu0
      %v4336 = vpop.trf.xlu0
      %v4337 = vpop.trf.xlu0
      %v4338 = vpop.trf.xlu0
      %v4339 = vpop.trf.xlu0
      %v4340 = vpop.trf.xlu0
      %v4342 = vsel %vm689, %v4325, 0
      %v4345 = vsel %vm689, %v4326, 0
      %v4348 = vsel %vm689, %v4327, 0
      %v4351 = vsel %vm689, %v4328, 0
      %v4354 = vsel %vm689, %v4329, 0
      %v4357 = vsel %vm689, %v4330, 0
      %v4360 = vsel %vm689, %v4331, 0
      %v4363 = vsel %vm689, %v4332, 0
      %v4366 = vsel %vm689, %v4333, 0
      %v4369 = vsel %vm689, %v4334, 0
      %v4372 = vsel %vm689, %v4335, 0
      %v4375 = vsel %vm689, %v4336, 0
      %v4378 = vsel %vm689, %v4337, 0
      %v4381 = vsel %vm689, %v4338, 0
      %v4384 = vsel %vm689, %v4339, 0
      %v4387 = vsel %vm689, %v4340, 0
      %4389 = vmatpush.msra.mxu0 0.0
      %4390 = vmatpush.msra.mxu0 0.0
      %4391 = vmatpush.msra.mxu0 0.0
      %4392 = vmatpush.msra.mxu0 0.0
      %4393 = vmatpush.msra.mxu0 0.0
      %4394 = vmatpush.msra.mxu0 0.0
      %4395 = vmatpush.msra.mxu0 0.0
      %4396 = vmatpush.msra.mxu0 0.0
      %4397 = vmatpush.msra.mxu0 0.0
      %4398 = vmatpush.msra.mxu0 0.0
      %4399 = vmatpush.msra.mxu0 0.0
      %4400 = vmatpush.msra.mxu0 0.0
      %4401 = vmatpush.msra.mxu0 0.0
      %4402 = vmatpush.msra.mxu0 0.0
      %4403 = vmatpush.msra.mxu0 0.0
      %4404 = vmatpush.msra.mxu0 %v4239
      %4405 = vmatmul.f32.gmra.mxu0 %v4342
      %v4406 = vpop.f32.mrf.mxu0
      %v4407 = vadd.f32 0.0, %v4406
      %4408 = vmatmul.f32.gmra.mxu0 %v4345
      %v4409 = vpop.f32.mrf.mxu0
      %v4410 = vadd.f32 0.0, %v4409
      %4411 = vmatmul.f32.gmra.mxu0 %v4348
      %v4412 = vpop.f32.mrf.mxu0
      %v4413 = vadd.f32 0.0, %v4412
      %4414 = vmatmul.f32.gmra.mxu0 %v4351
      %v4415 = vpop.f32.mrf.mxu0
      %v4416 = vadd.f32 0.0, %v4415
      %4417 = vmatmul.f32.gmra.mxu0 %v4354
      %v4418 = vpop.f32.mrf.mxu0
      %v4419 = vadd.f32 0.0, %v4418
      %4420 = vmatmul.f32.gmra.mxu0 %v4357
      %v4421 = vpop.f32.mrf.mxu0
      %v4422 = vadd.f32 0.0, %v4421
      %4423 = vmatmul.f32.gmra.mxu0 %v4360
      %v4424 = vpop.f32.mrf.mxu0
      %v4425 = vadd.f32 0.0, %v4424
      %4426 = vmatmul.f32.gmra.mxu0 %v4363
      %v4427 = vpop.f32.mrf.mxu0
      %v4428 = vadd.f32 0.0, %v4427
      %4429 = vmatmul.f32.gmra.mxu0 %v4366
      %v4430 = vpop.f32.mrf.mxu0
      %v4431 = vadd.f32 0.0, %v4430
      %4432 = vmatmul.f32.gmra.mxu0 %v4369
      %v4433 = vpop.f32.mrf.mxu0
      %v4434 = vadd.f32 0.0, %v4433
      %4435 = vmatmul.f32.gmra.mxu0 %v4372
      %v4436 = vpop.f32.mrf.mxu0
      %v4437 = vadd.f32 0.0, %v4436
      %4438 = vmatmul.f32.gmra.mxu0 %v4375
      %v4439 = vpop.f32.mrf.mxu0
      %v4440 = vadd.f32 0.0, %v4439
      %4441 = vmatmul.f32.gmra.mxu0 %v4378
      %v4442 = vpop.f32.mrf.mxu0
      %v4443 = vadd.f32 0.0, %v4442
      %4444 = vmatmul.f32.gmra.mxu0 %v4381
      %v4445 = vpop.f32.mrf.mxu0
      %v4446 = vadd.f32 0.0, %v4445
      %4447 = vmatmul.f32.gmra.mxu0 %v4384
      %v4448 = vpop.f32.mrf.mxu0
      %v4449 = vadd.f32 0.0, %v4448
      %4450 = vmatmul.f32.gmra.mxu0 %v4387
      %v4451 = vpop.f32.mrf.mxu0
      %v4452 = vadd.f32 0.0, %v4451
      %4453 = vdwg.mxu0
      %4454 = vmatpush.msra.mxu0 0.0
      %4455 = vmatpush.msra.mxu0 0.0
      %4456 = vmatpush.msra.mxu0 0.0
      %4457 = vmatpush.msra.mxu0 0.0
      %4458 = vmatpush.msra.mxu0 0.0
      %4459 = vmatpush.msra.mxu0 0.0
      %4460 = vmatpush.msra.mxu0 0.0
      %4461 = vmatpush.msra.mxu0 0.0
      %4462 = vmatpush.msra.mxu0 0.0
      %4463 = vmatpush.msra.mxu0 0.0
      %4464 = vmatpush.msra.mxu0 0.0
      %4465 = vmatpush.msra.mxu0 0.0
      %4466 = vmatpush.msra.mxu0 0.0
      %4467 = vmatpush.msra.mxu0 0.0
      %4468 = vmatpush.msra.mxu0 0.0
      %4469 = vmatpush.msra.mxu0 %v4259
      %4470 = vmatmul.f32.gmra.mxu0 %v4342
      %v4471 = vpop.f32.mrf.mxu0
      %v4472 = vadd.f32 0.0, %v4471
      %4473 = vmatmul.f32.gmra.mxu0 %v4345
      %v4474 = vpop.f32.mrf.mxu0
      %v4475 = vadd.f32 0.0, %v4474
      %4476 = vmatmul.f32.gmra.mxu0 %v4348
      %v4477 = vpop.f32.mrf.mxu0
      %v4478 = vadd.f32 0.0, %v4477
      %4479 = vmatmul.f32.gmra.mxu0 %v4351
      %v4480 = vpop.f32.mrf.mxu0
      %v4481 = vadd.f32 0.0, %v4480
      %4482 = vmatmul.f32.gmra.mxu0 %v4354
      %v4483 = vpop.f32.mrf.mxu0
      %v4484 = vadd.f32 0.0, %v4483
      %4485 = vmatmul.f32.gmra.mxu0 %v4357
      %v4486 = vpop.f32.mrf.mxu0
      %v4487 = vadd.f32 0.0, %v4486
      %4488 = vmatmul.f32.gmra.mxu0 %v4360
      %v4489 = vpop.f32.mrf.mxu0
      %v4490 = vadd.f32 0.0, %v4489
      %4491 = vmatmul.f32.gmra.mxu0 %v4363
      %v4492 = vpop.f32.mrf.mxu0
      %v4493 = vadd.f32 0.0, %v4492
      %4494 = vmatmul.f32.gmra.mxu0 %v4366
      %v4495 = vpop.f32.mrf.mxu0
      %v4496 = vadd.f32 0.0, %v4495
      %4497 = vmatmul.f32.gmra.mxu0 %v4369
      %v4498 = vpop.f32.mrf.mxu0
      %v4499 = vadd.f32 0.0, %v4498
      %4500 = vmatmul.f32.gmra.mxu0 %v4372
      %v4501 = vpop.f32.mrf.mxu0
      %v4502 = vadd.f32 0.0, %v4501
      %4503 = vmatmul.f32.gmra.mxu0 %v4375
      %v4504 = vpop.f32.mrf.mxu0
      %v4505 = vadd.f32 0.0, %v4504
      %4506 = vmatmul.f32.gmra.mxu0 %v4378
      %v4507 = vpop.f32.mrf.mxu0
      %v4508 = vadd.f32 0.0, %v4507
      %4509 = vmatmul.f32.gmra.mxu0 %v4381
      %v4510 = vpop.f32.mrf.mxu0
      %v4511 = vadd.f32 0.0, %v4510
      %4512 = vmatmul.f32.gmra.mxu0 %v4384
      %v4513 = vpop.f32.mrf.mxu0
      %v4514 = vadd.f32 0.0, %v4513
      %4515 = vmatmul.f32.gmra.mxu0 %v4387
      %v4516 = vpop.f32.mrf.mxu0
      %v4517 = vadd.f32 0.0, %v4516
      %4518 = vdwg.mxu0
      %v4519 = vmax.f32 %v4407, %v4472
      %4520 = vmax.xlane.f32.xlu0 %v4519
      %v4521 = vpop.xlane.xlu0 %4520
      %v4522 = vmax.f32 %v4410, %v4475
      %4523 = vmax.xlane.f32.xlu0 %v4522
      %v4524 = vpop.xlane.xlu0 %4523
      %v4525 = vmax.f32 %v4413, %v4478
      %4526 = vmax.xlane.f32.xlu0 %v4525
      %v4527 = vpop.xlane.xlu0 %4526
      %v4528 = vmax.f32 %v4416, %v4481
      %4529 = vmax.xlane.f32.xlu0 %v4528
      %v4530 = vpop.xlane.xlu0 %4529
      %v4531 = vmax.f32 %v4419, %v4484
      %4532 = vmax.xlane.f32.xlu0 %v4531
      %v4533 = vpop.xlane.xlu0 %4532
      %v4534 = vmax.f32 %v4422, %v4487
      %4535 = vmax.xlane.f32.xlu0 %v4534
      %v4536 = vpop.xlane.xlu0 %4535
      %v4537 = vmax.f32 %v4425, %v4490
      %4538 = vmax.xlane.f32.xlu0 %v4537
      %v4539 = vpop.xlane.xlu0 %4538
      %v4540 = vmax.f32 %v4428, %v4493
      %4541 = vmax.xlane.f32.xlu0 %v4540
      %v4542 = vpop.xlane.xlu0 %4541
      %v4543 = vmax.f32 %v4431, %v4496
      %4544 = vmax.xlane.f32.xlu0 %v4543
      %v4545 = vpop.xlane.xlu0 %4544
      %v4546 = vmax.f32 %v4434, %v4499
      %4547 = vmax.xlane.f32.xlu0 %v4546
      %v4548 = vpop.xlane.xlu0 %4547
      %v4549 = vmax.f32 %v4437, %v4502
      %4550 = vmax.xlane.f32.xlu0 %v4549
      %v4551 = vpop.xlane.xlu0 %4550
      %v4552 = vmax.f32 %v4440, %v4505
      %4553 = vmax.xlane.f32.xlu0 %v4552
      %v4554 = vpop.xlane.xlu0 %4553
      %v4555 = vmax.f32 %v4443, %v4508
      %4556 = vmax.xlane.f32.xlu0 %v4555
      %v4557 = vpop.xlane.xlu0 %4556
      %v4558 = vmax.f32 %v4446, %v4511
      %4559 = vmax.xlane.f32.xlu0 %v4558
      %v4560 = vpop.xlane.xlu0 %4559
      %v4561 = vmax.f32 %v4449, %v4514
      %4562 = vmax.xlane.f32.xlu0 %v4561
      %v4563 = vpop.xlane.xlu0 %4562
      %v4564 = vmax.f32 %v4452, %v4517
      %4565 = vmax.xlane.f32.xlu0 %v4564
      %v4566 = vpop.xlane.xlu0 %4565
      %v4567 = vsub.f32 %v4407, %v4521
      %v4568 = vsub.f32 %v4472, %v4521
      %v4569 = vsub.f32 %v4410, %v4524
      %v4570 = vsub.f32 %v4475, %v4524
      %v4571 = vsub.f32 %v4413, %v4527
      %v4572 = vsub.f32 %v4478, %v4527
      %v4573 = vsub.f32 %v4416, %v4530
      %v4574 = vsub.f32 %v4481, %v4530
      %v4575 = vsub.f32 %v4419, %v4533
      %v4576 = vsub.f32 %v4484, %v4533
      %v4577 = vsub.f32 %v4422, %v4536
      %v4578 = vsub.f32 %v4487, %v4536
      %v4579 = vsub.f32 %v4425, %v4539
      %v4580 = vsub.f32 %v4490, %v4539
      %v4581 = vsub.f32 %v4428, %v4542
      %v4582 = vsub.f32 %v4493, %v4542
      %v4583 = vsub.f32 %v4431, %v4545
      %v4584 = vsub.f32 %v4496, %v4545
      %v4585 = vsub.f32 %v4434, %v4548
      %v4586 = vsub.f32 %v4499, %v4548
      %v4587 = vsub.f32 %v4437, %v4551
      %v4588 = vsub.f32 %v4502, %v4551
      %v4589 = vsub.f32 %v4440, %v4554
      %v4590 = vsub.f32 %v4505, %v4554
      %v4591 = vsub.f32 %v4443, %v4557
      %v4592 = vsub.f32 %v4508, %v4557
      %v4593 = vsub.f32 %v4446, %v4560
      %v4594 = vsub.f32 %v4511, %v4560
      %v4595 = vsub.f32 %v4449, %v4563
      %v4596 = vsub.f32 %v4514, %v4563
      %v4597 = vsub.f32 %v4452, %v4566
      %v4598 = vsub.f32 %v4517, %v4566
      %v4599 = vmul.f32 %v4567, 1.442695
      %v4600 = vpow.pop %v4599
      %v4601 = vmul.f32 %v4568, 1.442695
      %v4602 = vpow.pop %v4601
      %v4603 = vmul.f32 %v4569, 1.442695
      %v4604 = vpow.pop %v4603
      %v4605 = vmul.f32 %v4570, 1.442695
      %v4606 = vpow.pop %v4605
      %v4607 = vmul.f32 %v4571, 1.442695
      %v4608 = vpow.pop %v4607
      %v4609 = vmul.f32 %v4572, 1.442695
      %v4610 = vpow.pop %v4609
      %v4611 = vmul.f32 %v4573, 1.442695
      %v4612 = vpow.pop %v4611
      %v4613 = vmul.f32 %v4574, 1.442695
      %v4614 = vpow.pop %v4613
      %v4615 = vmul.f32 %v4575, 1.442695
      %v4616 = vpow.pop %v4615
      %v4617 = vmul.f32 %v4576, 1.442695
      %v4618 = vpow.pop %v4617
      %v4619 = vmul.f32 %v4577, 1.442695
      %v4620 = vpow.pop %v4619
      %v4621 = vmul.f32 %v4578, 1.442695
      %v4622 = vpow.pop %v4621
      %v4623 = vmul.f32 %v4579, 1.442695
      %v4624 = vpow.pop %v4623
      %v4625 = vmul.f32 %v4580, 1.442695
      %v4626 = vpow.pop %v4625
      %v4627 = vmul.f32 %v4581, 1.442695
      %v4628 = vpow.pop %v4627
      %v4629 = vmul.f32 %v4582, 1.442695
      %v4630 = vpow.pop %v4629
      %v4631 = vmul.f32 %v4583, 1.442695
      %v4632 = vpow.pop %v4631
      %v4633 = vmul.f32 %v4584, 1.442695
      %v4634 = vpow.pop %v4633
      %v4635 = vmul.f32 %v4585, 1.442695
      %v4636 = vpow.pop %v4635
      %v4637 = vmul.f32 %v4586, 1.442695
      %v4638 = vpow.pop %v4637
      %v4639 = vmul.f32 %v4587, 1.442695
      %v4640 = vpow.pop %v4639
      %v4641 = vmul.f32 %v4588, 1.442695
      %v4642 = vpow.pop %v4641
      %v4643 = vmul.f32 %v4589, 1.442695
      %v4644 = vpow.pop %v4643
      %v4645 = vmul.f32 %v4590, 1.442695
      %v4646 = vpow.pop %v4645
      %v4647 = vmul.f32 %v4591, 1.442695
      %v4648 = vpow.pop %v4647
      %v4649 = vmul.f32 %v4592, 1.442695
      %v4650 = vpow.pop %v4649
      %v4651 = vmul.f32 %v4593, 1.442695
      %v4652 = vpow.pop %v4651
      %v4653 = vmul.f32 %v4594, 1.442695
      %v4654 = vpow.pop %v4653
      %v4655 = vmul.f32 %v4595, 1.442695
      %v4656 = vpow.pop %v4655
      %v4657 = vmul.f32 %v4596, 1.442695
      %v4658 = vpow.pop %v4657
      %v4659 = vmul.f32 %v4597, 1.442695
      %v4660 = vpow.pop %v4659
      %v4661 = vmul.f32 %v4598, 1.442695
      %v4662 = vpow.pop %v4661
      %v4663 = vadd.f32 %v4600, %v4602
      %4664 = vadd.xlane.f32.xlu0 %v4663
      %v4665 = vpop.xlane.xlu0 %4664
      %v4666 = vadd.f32 %v4604, %v4606
      %4667 = vadd.xlane.f32.xlu0 %v4666
      %v4668 = vpop.xlane.xlu0 %4667
      %v4669 = vadd.f32 %v4608, %v4610
      %4670 = vadd.xlane.f32.xlu0 %v4669
      %v4671 = vpop.xlane.xlu0 %4670
      %v4672 = vadd.f32 %v4612, %v4614
      %4673 = vadd.xlane.f32.xlu0 %v4672
      %v4674 = vpop.xlane.xlu0 %4673
      %v4675 = vadd.f32 %v4616, %v4618
      %4676 = vadd.xlane.f32.xlu0 %v4675
      %v4677 = vpop.xlane.xlu0 %4676
      %v4678 = vadd.f32 %v4620, %v4622
      %4679 = vadd.xlane.f32.xlu0 %v4678
      %v4680 = vpop.xlane.xlu0 %4679
      %v4681 = vadd.f32 %v4624, %v4626
      %4682 = vadd.xlane.f32.xlu0 %v4681
      %v4683 = vpop.xlane.xlu0 %4682
      %v4684 = vadd.f32 %v4628, %v4630
      %4685 = vadd.xlane.f32.xlu0 %v4684
      %v4686 = vpop.xlane.xlu0 %4685
      %v4687 = vadd.f32 %v4632, %v4634
      %4688 = vadd.xlane.f32.xlu0 %v4687
      %v4689 = vpop.xlane.xlu0 %4688
      %v4690 = vadd.f32 %v4636, %v4638
      %4691 = vadd.xlane.f32.xlu0 %v4690
      %v4692 = vpop.xlane.xlu0 %4691
      %v4693 = vadd.f32 %v4640, %v4642
      %4694 = vadd.xlane.f32.xlu0 %v4693
      %v4695 = vpop.xlane.xlu0 %4694
      %v4696 = vadd.f32 %v4644, %v4646
      %4697 = vadd.xlane.f32.xlu0 %v4696
      %v4698 = vpop.xlane.xlu0 %4697
      %v4699 = vadd.f32 %v4648, %v4650
      %4700 = vadd.xlane.f32.xlu0 %v4699
      %v4701 = vpop.xlane.xlu0 %4700
      %v4702 = vadd.f32 %v4652, %v4654
      %4703 = vadd.xlane.f32.xlu0 %v4702
      %v4704 = vpop.xlane.xlu0 %4703
      %v4705 = vadd.f32 %v4656, %v4658
      %4706 = vadd.xlane.f32.xlu0 %v4705
      %v4707 = vpop.xlane.xlu0 %4706
      %v4708 = vadd.f32 %v4660, %v4662
      %4709 = vadd.xlane.f32.xlu0 %v4708
      %v4710 = vpop.xlane.xlu0 %4709
      %v4711 = vrcp.pop %v4665
      %v4712 = vrcp.pop %v4668
      %v4713 = vrcp.pop %v4671
      %v4714 = vrcp.pop %v4674
      %v4715 = vrcp.pop %v4677
      %v4716 = vrcp.pop %v4680
      %v4717 = vrcp.pop %v4683
      %v4718 = vrcp.pop %v4686
      %v4719 = vrcp.pop %v4689
      %v4720 = vrcp.pop %v4692
      %v4721 = vrcp.pop %v4695
      %v4722 = vrcp.pop %v4698
      %v4723 = vrcp.pop %v4701
      %v4724 = vrcp.pop %v4704
      %v4725 = vrcp.pop %v4707
      %v4726 = vrcp.pop %v4710
      %v4727 = vmul.f32 %v4600, %v4711
      %v4728 = vmul.f32 %v4602, %v4711
      %v4729 = vmul.f32 %v4604, %v4712
      %v4730 = vmul.f32 %v4606, %v4712
      %v4731 = vmul.f32 %v4608, %v4713
      %v4732 = vmul.f32 %v4610, %v4713
      %v4733 = vmul.f32 %v4612, %v4714
      %v4734 = vmul.f32 %v4614, %v4714
      %v4735 = vmul.f32 %v4616, %v4715
      %v4736 = vmul.f32 %v4618, %v4715
      %v4737 = vmul.f32 %v4620, %v4716
      %v4738 = vmul.f32 %v4622, %v4716
      %v4739 = vmul.f32 %v4624, %v4717
      %v4740 = vmul.f32 %v4626, %v4717
      %v4741 = vmul.f32 %v4628, %v4718
      %v4742 = vmul.f32 %v4630, %v4718
      %v4743 = vmul.f32 %v4632, %v4719
      %v4744 = vmul.f32 %v4634, %v4719
      %v4745 = vmul.f32 %v4636, %v4720
      %v4746 = vmul.f32 %v4638, %v4720
      %v4747 = vmul.f32 %v4640, %v4721
      %v4748 = vmul.f32 %v4642, %v4721
      %v4749 = vmul.f32 %v4644, %v4722
      %v4750 = vmul.f32 %v4646, %v4722
      %v4751 = vmul.f32 %v4648, %v4723
      %v4752 = vmul.f32 %v4650, %v4723
      %v4753 = vmul.f32 %v4652, %v4724
      %v4754 = vmul.f32 %v4654, %v4724
      %v4755 = vmul.f32 %v4656, %v4725
      %v4756 = vmul.f32 %v4658, %v4725
      %v4757 = vmul.f32 %v4660, %v4726
      %v4758 = vmul.f32 %v4662, %v4726
      %4759 = vmatpush.xpose.msra.mxu0 %v4757
      %4760 = vmatpush.xpose.msra.mxu0 %v4755
      %4761 = vmatpush.xpose.msra.mxu0 %v4753
      %4762 = vmatpush.xpose.msra.mxu0 %v4751
      %4763 = vmatpush.xpose.msra.mxu0 %v4749
      %4764 = vmatpush.xpose.msra.mxu0 %v4747
      %4765 = vmatpush.xpose.msra.mxu0 %v4745
      %4766 = vmatpush.xpose.msra.mxu0 %v4743
      %4767 = vmatpush.xpose.msra.mxu0 %v4741
      %4768 = vmatpush.xpose.msra.mxu0 %v4739
      %4769 = vmatpush.xpose.msra.mxu0 %v4737
      %4770 = vmatpush.xpose.msra.mxu0 %v4735
      %4771 = vmatpush.xpose.msra.mxu0 %v4733
      %4772 = vmatpush.xpose.msra.mxu0 %v4731
      %4773 = vmatpush.xpose.msra.mxu0 %v4729
      %4774 = vmatpush.xpose.msra.mxu0 %v4727
      %4775 = vmatmul.f32.gmra.mxu0 %v4287
      %v4776 = vpop.f32.mrf.mxu0
      %v4777 = vadd.f32 0.0, %v4776
      %4778 = vdwg.mxu0
      %4779 = vmatpush.xpose.msra.mxu0 %v4758
      %4780 = vmatpush.xpose.msra.mxu0 %v4756
      %4781 = vmatpush.xpose.msra.mxu0 %v4754
      %4782 = vmatpush.xpose.msra.mxu0 %v4752
      %4783 = vmatpush.xpose.msra.mxu0 %v4750
      %4784 = vmatpush.xpose.msra.mxu0 %v4748
      %4785 = vmatpush.xpose.msra.mxu0 %v4746
      %4786 = vmatpush.xpose.msra.mxu0 %v4744
      %4787 = vmatpush.xpose.msra.mxu0 %v4742
      %4788 = vmatpush.xpose.msra.mxu0 %v4740
      %4789 = vmatpush.xpose.msra.mxu0 %v4738
      %4790 = vmatpush.xpose.msra.mxu0 %v4736
      %4791 = vmatpush.xpose.msra.mxu0 %v4734
      %4792 = vmatpush.xpose.msra.mxu0 %v4732
      %4793 = vmatpush.xpose.msra.mxu0 %v4730
      %4794 = vmatpush.xpose.msra.mxu0 %v4728
      %4795 = vmatmul.f32.gmra.mxu0 %v4307
      %v4796 = vpop.f32.mrf.mxu0
      %v4797 = vadd.f32 %v4777, %v4796
      %4798 = vdwg.mxu0
      %v4800 = vsel %vm689, %v4159, 0
      %v4803 = vsel %vm689, %v4160, 0
      %v4806 = vsel %vm689, %v4161, 0
      %v4809 = vsel %vm689, %v4162, 0
      %4811 = vmatpush.msra.mxu0 0.0
      %4812 = vmatpush.msra.mxu0 0.0
      %4813 = vmatpush.msra.mxu0 0.0
      %4814 = vmatpush.msra.mxu0 0.0
      %4815 = vmatpush.msra.mxu0 0.0
      %4816 = vmatpush.msra.mxu0 0.0
      %4817 = vmatpush.msra.mxu0 0.0
      %4818 = vmatpush.msra.mxu0 0.0
      %4819 = vmatpush.msra.mxu0 0.0
      %4820 = vmatpush.msra.mxu0 0.0
      %4821 = vmatpush.msra.mxu0 0.0
      %4822 = vmatpush.msra.mxu0 0.0
      %4823 = vmatpush.msra.mxu0 0.0
      %4824 = vmatpush.msra.mxu0 0.0
      %4825 = vmatpush.msra.mxu0 0.0
      %4826 = vmatpush.msra.mxu0 %v4797
      %4827 = vmatmul.f32.gmra.mxu0 %v4800
      %v4828 = vpop.f32.mrf.mxu0
      %v4829 = vadd.f32 0.0, %v4828
      %4830 = vmatmul.f32.gmra.mxu0 %v4803
      %v4831 = vpop.f32.mrf.mxu0
      %v4832 = vadd.f32 0.0, %v4831
      %4833 = vmatmul.f32.gmra.mxu0 %v4806
      %v4834 = vpop.f32.mrf.mxu0
      %v4835 = vadd.f32 0.0, %v4834
      %4836 = vmatmul.f32.gmra.mxu0 %v4809
      %v4837 = vpop.f32.mrf.mxu0
      %v4838 = vadd.f32 0.0, %v4837
      %4839 = vdwg.mxu0
      %4840 = vxpose.xlu0.b32.start [1/16] %v4212, 128
      %4841 = vxpose.xlu0.b32.cont [2/16] 0.0, 128
      %4842 = vxpose.xlu0.b32.cont [3/16] 0.0, 128
      %4843 = vxpose.xlu0.b32.cont [4/16] 0.0, 128
      %4844 = vxpose.xlu0.b32.cont [5/16] 0.0, 128
      %4845 = vxpose.xlu0.b32.cont [6/16] 0.0, 128
      %4846 = vxpose.xlu0.b32.cont [7/16] 0.0, 128
      %4847 = vxpose.xlu0.b32.cont [8/16] 0.0, 128
      %4848 = vxpose.xlu0.b32.cont [9/16] 0.0, 128
      %4849 = vxpose.xlu0.b32.cont [10/16] 0.0, 128
      %4850 = vxpose.xlu0.b32.cont [11/16] 0.0, 128
      %4851 = vxpose.xlu0.b32.cont [12/16] 0.0, 128
      %4852 = vxpose.xlu0.b32.cont [13/16] 0.0, 128
      %4853 = vxpose.xlu0.b32.cont [14/16] 0.0, 128
      %4854 = vxpose.xlu0.b32.cont [15/16] 0.0, 128
      %4855 = vxpose.xlu0.b32.end [16/16] 0.0, 128
      %v4856 = vpop.trf.xlu0
      %v4857 = vpop.trf.xlu0
      %v4858 = vpop.trf.xlu0
      %v4859 = vpop.trf.xlu0
      %v4860 = vpop.trf.xlu0
      %v4861 = vpop.trf.xlu0
      %v4862 = vpop.trf.xlu0
      %v4863 = vpop.trf.xlu0
      %v4864 = vpop.trf.xlu0
      %v4865 = vpop.trf.xlu0
      %v4866 = vpop.trf.xlu0
      %v4867 = vpop.trf.xlu0
      %v4868 = vpop.trf.xlu0
      %v4869 = vpop.trf.xlu0
      %v4870 = vpop.trf.xlu0
      %v4871 = vpop.trf.xlu0
      %v4873 = vsel %vm689, %v4856, 0
      %v4876 = vsel %vm689, %v4857, 0
      %v4879 = vsel %vm689, %v4858, 0
      %v4882 = vsel %vm689, %v4859, 0
      %v4885 = vsel %vm689, %v4860, 0
      %v4888 = vsel %vm689, %v4861, 0
      %v4891 = vsel %vm689, %v4862, 0
      %v4894 = vsel %vm689, %v4863, 0
      %v4897 = vsel %vm689, %v4864, 0
      %v4900 = vsel %vm689, %v4865, 0
      %v4903 = vsel %vm689, %v4866, 0
      %v4906 = vsel %vm689, %v4867, 0
      %v4909 = vsel %vm689, %v4868, 0
      %v4912 = vsel %vm689, %v4869, 0
      %v4915 = vsel %vm689, %v4870, 0
      %v4918 = vsel %vm689, %v4871, 0
      %4920 = vmatpush.msra.mxu0 0.0
      %4921 = vmatpush.msra.mxu0 0.0
      %4922 = vmatpush.msra.mxu0 0.0
      %4923 = vmatpush.msra.mxu0 0.0
      %4924 = vmatpush.msra.mxu0 0.0
      %4925 = vmatpush.msra.mxu0 0.0
      %4926 = vmatpush.msra.mxu0 0.0
      %4927 = vmatpush.msra.mxu0 0.0
      %4928 = vmatpush.msra.mxu0 0.0
      %4929 = vmatpush.msra.mxu0 0.0
      %4930 = vmatpush.msra.mxu0 0.0
      %4931 = vmatpush.msra.mxu0 0.0
      %4932 = vmatpush.msra.mxu0 0.0
      %4933 = vmatpush.msra.mxu0 0.0
      %4934 = vmatpush.msra.mxu0 0.0
      %4935 = vmatpush.msra.mxu0 %v4239
      %4936 = vmatmul.f32.gmra.mxu0 %v4873
      %v4937 = vpop.f32.mrf.mxu0
      %v4938 = vadd.f32 0.0, %v4937
      %4939 = vmatmul.f32.gmra.mxu0 %v4876
      %v4940 = vpop.f32.mrf.mxu0
      %v4941 = vadd.f32 0.0, %v4940
      %4942 = vmatmul.f32.gmra.mxu0 %v4879
      %v4943 = vpop.f32.mrf.mxu0
      %v4944 = vadd.f32 0.0, %v4943
      %4945 = vmatmul.f32.gmra.mxu0 %v4882
      %v4946 = vpop.f32.mrf.mxu0
      %v4947 = vadd.f32 0.0, %v4946
      %4948 = vmatmul.f32.gmra.mxu0 %v4885
      %v4949 = vpop.f32.mrf.mxu0
      %v4950 = vadd.f32 0.0, %v4949
      %4951 = vmatmul.f32.gmra.mxu0 %v4888
      %v4952 = vpop.f32.mrf.mxu0
      %v4953 = vadd.f32 0.0, %v4952
      %4954 = vmatmul.f32.gmra.mxu0 %v4891
      %v4955 = vpop.f32.mrf.mxu0
      %v4956 = vadd.f32 0.0, %v4955
      %4957 = vmatmul.f32.gmra.mxu0 %v4894
      %v4958 = vpop.f32.mrf.mxu0
      %v4959 = vadd.f32 0.0, %v4958
      %4960 = vmatmul.f32.gmra.mxu0 %v4897
      %v4961 = vpop.f32.mrf.mxu0
      %v4962 = vadd.f32 0.0, %v4961
      %4963 = vmatmul.f32.gmra.mxu0 %v4900
      %v4964 = vpop.f32.mrf.mxu0
      %v4965 = vadd.f32 0.0, %v4964
      %4966 = vmatmul.f32.gmra.mxu0 %v4903
      %v4967 = vpop.f32.mrf.mxu0
      %v4968 = vadd.f32 0.0, %v4967
      %4969 = vmatmul.f32.gmra.mxu0 %v4906
      %v4970 = vpop.f32.mrf.mxu0
      %v4971 = vadd.f32 0.0, %v4970
      %4972 = vmatmul.f32.gmra.mxu0 %v4909
      %v4973 = vpop.f32.mrf.mxu0
      %v4974 = vadd.f32 0.0, %v4973
      %4975 = vmatmul.f32.gmra.mxu0 %v4912
      %v4976 = vpop.f32.mrf.mxu0
      %v4977 = vadd.f32 0.0, %v4976
      %4978 = vmatmul.f32.gmra.mxu0 %v4915
      %v4979 = vpop.f32.mrf.mxu0
      %v4980 = vadd.f32 0.0, %v4979
      %4981 = vmatmul.f32.gmra.mxu0 %v4918
      %v4982 = vpop.f32.mrf.mxu0
      %v4983 = vadd.f32 0.0, %v4982
      %4984 = vdwg.mxu0
      %4985 = vmatpush.msra.mxu0 0.0
      %4986 = vmatpush.msra.mxu0 0.0
      %4987 = vmatpush.msra.mxu0 0.0
      %4988 = vmatpush.msra.mxu0 0.0
      %4989 = vmatpush.msra.mxu0 0.0
      %4990 = vmatpush.msra.mxu0 0.0
      %4991 = vmatpush.msra.mxu0 0.0
      %4992 = vmatpush.msra.mxu0 0.0
      %4993 = vmatpush.msra.mxu0 0.0
      %4994 = vmatpush.msra.mxu0 0.0
      %4995 = vmatpush.msra.mxu0 0.0
      %4996 = vmatpush.msra.mxu0 0.0
      %4997 = vmatpush.msra.mxu0 0.0
      %4998 = vmatpush.msra.mxu0 0.0
      %4999 = vmatpush.msra.mxu0 0.0
      %5000 = vmatpush.msra.mxu0 %v4259
      %5001 = vmatmul.f32.gmra.mxu0 %v4873
      %v5002 = vpop.f32.mrf.mxu0
      %v5003 = vadd.f32 0.0, %v5002
      %5004 = vmatmul.f32.gmra.mxu0 %v4876
      %v5005 = vpop.f32.mrf.mxu0
      %v5006 = vadd.f32 0.0, %v5005
      %5007 = vmatmul.f32.gmra.mxu0 %v4879
      %v5008 = vpop.f32.mrf.mxu0
      %v5009 = vadd.f32 0.0, %v5008
      %5010 = vmatmul.f32.gmra.mxu0 %v4882
      %v5011 = vpop.f32.mrf.mxu0
      %v5012 = vadd.f32 0.0, %v5011
      %5013 = vmatmul.f32.gmra.mxu0 %v4885
      %v5014 = vpop.f32.mrf.mxu0
      %v5015 = vadd.f32 0.0, %v5014
      %5016 = vmatmul.f32.gmra.mxu0 %v4888
      %v5017 = vpop.f32.mrf.mxu0
      %v5018 = vadd.f32 0.0, %v5017
      %5019 = vmatmul.f32.gmra.mxu0 %v4891
      %v5020 = vpop.f32.mrf.mxu0
      %v5021 = vadd.f32 0.0, %v5020
      %5022 = vmatmul.f32.gmra.mxu0 %v4894
      %v5023 = vpop.f32.mrf.mxu0
      %v5024 = vadd.f32 0.0, %v5023
      %5025 = vmatmul.f32.gmra.mxu0 %v4897
      %v5026 = vpop.f32.mrf.mxu0
      %v5027 = vadd.f32 0.0, %v5026
      %5028 = vmatmul.f32.gmra.mxu0 %v4900
      %v5029 = vpop.f32.mrf.mxu0
      %v5030 = vadd.f32 0.0, %v5029
      %5031 = vmatmul.f32.gmra.mxu0 %v4903
      %v5032 = vpop.f32.mrf.mxu0
      %v5033 = vadd.f32 0.0, %v5032
      %5034 = vmatmul.f32.gmra.mxu0 %v4906
      %v5035 = vpop.f32.mrf.mxu0
      %v5036 = vadd.f32 0.0, %v5035
      %5037 = vmatmul.f32.gmra.mxu0 %v4909
      %v5038 = vpop.f32.mrf.mxu0
      %v5039 = vadd.f32 0.0, %v5038
      %5040 = vmatmul.f32.gmra.mxu0 %v4912
      %v5041 = vpop.f32.mrf.mxu0
      %v5042 = vadd.f32 0.0, %v5041
      %5043 = vmatmul.f32.gmra.mxu0 %v4915
      %v5044 = vpop.f32.mrf.mxu0
      %v5045 = vadd.f32 0.0, %v5044
      %5046 = vmatmul.f32.gmra.mxu0 %v4918
      %v5047 = vpop.f32.mrf.mxu0
      %v5048 = vadd.f32 0.0, %v5047
      %5049 = vdwg.mxu0
      %v5050 = vmax.f32 %v4938, %v5003
      %5051 = vmax.xlane.f32.xlu0 %v5050
      %v5052 = vpop.xlane.xlu0 %5051
      %v5053 = vmax.f32 %v4941, %v5006
      %5054 = vmax.xlane.f32.xlu0 %v5053
      %v5055 = vpop.xlane.xlu0 %5054
      %v5056 = vmax.f32 %v4944, %v5009
      %5057 = vmax.xlane.f32.xlu0 %v5056
      %v5058 = vpop.xlane.xlu0 %5057
      %v5059 = vmax.f32 %v4947, %v5012
      %5060 = vmax.xlane.f32.xlu0 %v5059
      %v5061 = vpop.xlane.xlu0 %5060
      %v5062 = vmax.f32 %v4950, %v5015
      %5063 = vmax.xlane.f32.xlu0 %v5062
      %v5064 = vpop.xlane.xlu0 %5063
      %v5065 = vmax.f32 %v4953, %v5018
      %5066 = vmax.xlane.f32.xlu0 %v5065
      %v5067 = vpop.xlane.xlu0 %5066
      %v5068 = vmax.f32 %v4956, %v5021
      %5069 = vmax.xlane.f32.xlu0 %v5068
      %v5070 = vpop.xlane.xlu0 %5069
      %v5071 = vmax.f32 %v4959, %v5024
      %5072 = vmax.xlane.f32.xlu0 %v5071
      %v5073 = vpop.xlane.xlu0 %5072
      %v5074 = vmax.f32 %v4962, %v5027
      %5075 = vmax.xlane.f32.xlu0 %v5074
      %v5076 = vpop.xlane.xlu0 %5075
      %v5077 = vmax.f32 %v4965, %v5030
      %5078 = vmax.xlane.f32.xlu0 %v5077
      %v5079 = vpop.xlane.xlu0 %5078
      %v5080 = vmax.f32 %v4968, %v5033
      %5081 = vmax.xlane.f32.xlu0 %v5080
      %v5082 = vpop.xlane.xlu0 %5081
      %v5083 = vmax.f32 %v4971, %v5036
      %5084 = vmax.xlane.f32.xlu0 %v5083
      %v5085 = vpop.xlane.xlu0 %5084
      %v5086 = vmax.f32 %v4974, %v5039
      %5087 = vmax.xlane.f32.xlu0 %v5086
      %v5088 = vpop.xlane.xlu0 %5087
      %v5089 = vmax.f32 %v4977, %v5042
      %5090 = vmax.xlane.f32.xlu0 %v5089
      %v5091 = vpop.xlane.xlu0 %5090
      %v5092 = vmax.f32 %v4980, %v5045
      %5093 = vmax.xlane.f32.xlu0 %v5092
      %v5094 = vpop.xlane.xlu0 %5093
      %v5095 = vmax.f32 %v4983, %v5048
      %5096 = vmax.xlane.f32.xlu0 %v5095
      %v5097 = vpop.xlane.xlu0 %5096
      %v5098 = vsub.f32 %v4938, %v5052
      %v5099 = vsub.f32 %v5003, %v5052
      %v5100 = vsub.f32 %v4941, %v5055
      %v5101 = vsub.f32 %v5006, %v5055
      %v5102 = vsub.f32 %v4944, %v5058
      %v5103 = vsub.f32 %v5009, %v5058
      %v5104 = vsub.f32 %v4947, %v5061
      %v5105 = vsub.f32 %v5012, %v5061
      %v5106 = vsub.f32 %v4950, %v5064
      %v5107 = vsub.f32 %v5015, %v5064
      %v5108 = vsub.f32 %v4953, %v5067
      %v5109 = vsub.f32 %v5018, %v5067
      %v5110 = vsub.f32 %v4956, %v5070
      %v5111 = vsub.f32 %v5021, %v5070
      %v5112 = vsub.f32 %v4959, %v5073
      %v5113 = vsub.f32 %v5024, %v5073
      %v5114 = vsub.f32 %v4962, %v5076
      %v5115 = vsub.f32 %v5027, %v5076
      %v5116 = vsub.f32 %v4965, %v5079
      %v5117 = vsub.f32 %v5030, %v5079
      %v5118 = vsub.f32 %v4968, %v5082
      %v5119 = vsub.f32 %v5033, %v5082
      %v5120 = vsub.f32 %v4971, %v5085
      %v5121 = vsub.f32 %v5036, %v5085
      %v5122 = vsub.f32 %v4974, %v5088
      %v5123 = vsub.f32 %v5039, %v5088
      %v5124 = vsub.f32 %v4977, %v5091
      %v5125 = vsub.f32 %v5042, %v5091
      %v5126 = vsub.f32 %v4980, %v5094
      %v5127 = vsub.f32 %v5045, %v5094
      %v5128 = vsub.f32 %v4983, %v5097
      %v5129 = vsub.f32 %v5048, %v5097
      %v5130 = vmul.f32 %v5098, 1.442695
      %v5131 = vpow.pop %v5130
      %v5132 = vmul.f32 %v5099, 1.442695
      %v5133 = vpow.pop %v5132
      %v5134 = vmul.f32 %v5100, 1.442695
      %v5135 = vpow.pop %v5134
      %v5136 = vmul.f32 %v5101, 1.442695
      %v5137 = vpow.pop %v5136
      %v5138 = vmul.f32 %v5102, 1.442695
      %v5139 = vpow.pop %v5138
      %v5140 = vmul.f32 %v5103, 1.442695
      %v5141 = vpow.pop %v5140
      %v5142 = vmul.f32 %v5104, 1.442695
      %v5143 = vpow.pop %v5142
      %v5144 = vmul.f32 %v5105, 1.442695
      %v5145 = vpow.pop %v5144
      %v5146 = vmul.f32 %v5106, 1.442695
      %v5147 = vpow.pop %v5146
      %v5148 = vmul.f32 %v5107, 1.442695
      %v5149 = vpow.pop %v5148
      %v5150 = vmul.f32 %v5108, 1.442695
      %v5151 = vpow.pop %v5150
      %v5152 = vmul.f32 %v5109, 1.442695
      %v5153 = vpow.pop %v5152
      %v5154 = vmul.f32 %v5110, 1.442695
      %v5155 = vpow.pop %v5154
      %v5156 = vmul.f32 %v5111, 1.442695
      %v5157 = vpow.pop %v5156
      %v5158 = vmul.f32 %v5112, 1.442695
      %v5159 = vpow.pop %v5158
      %v5160 = vmul.f32 %v5113, 1.442695
      %v5161 = vpow.pop %v5160
      %v5162 = vmul.f32 %v5114, 1.442695
      %v5163 = vpow.pop %v5162
      %v5164 = vmul.f32 %v5115, 1.442695
      %v5165 = vpow.pop %v5164
      %v5166 = vmul.f32 %v5116, 1.442695
      %v5167 = vpow.pop %v5166
      %v5168 = vmul.f32 %v5117, 1.442695
      %v5169 = vpow.pop %v5168
      %v5170 = vmul.f32 %v5118, 1.442695
      %v5171 = vpow.pop %v5170
      %v5172 = vmul.f32 %v5119, 1.442695
      %v5173 = vpow.pop %v5172
      %v5174 = vmul.f32 %v5120, 1.442695
      %v5175 = vpow.pop %v5174
      %v5176 = vmul.f32 %v5121, 1.442695
      %v5177 = vpow.pop %v5176
      %v5178 = vmul.f32 %v5122, 1.442695
      %v5179 = vpow.pop %v5178
      %v5180 = vmul.f32 %v5123, 1.442695
      %v5181 = vpow.pop %v5180
      %v5182 = vmul.f32 %v5124, 1.442695
      %v5183 = vpow.pop %v5182
      %v5184 = vmul.f32 %v5125, 1.442695
      %v5185 = vpow.pop %v5184
      %v5186 = vmul.f32 %v5126, 1.442695
      %v5187 = vpow.pop %v5186
      %v5188 = vmul.f32 %v5127, 1.442695
      %v5189 = vpow.pop %v5188
      %v5190 = vmul.f32 %v5128, 1.442695
      %v5191 = vpow.pop %v5190
      %v5192 = vmul.f32 %v5129, 1.442695
      %v5193 = vpow.pop %v5192
      %v5194 = vadd.f32 %v5131, %v5133
      %5195 = vadd.xlane.f32.xlu0 %v5194
      %v5196 = vpop.xlane.xlu0 %5195
      %v5197 = vadd.f32 %v5135, %v5137
      %5198 = vadd.xlane.f32.xlu0 %v5197
      %v5199 = vpop.xlane.xlu0 %5198
      %v5200 = vadd.f32 %v5139, %v5141
      %5201 = vadd.xlane.f32.xlu0 %v5200
      %v5202 = vpop.xlane.xlu0 %5201
      %v5203 = vadd.f32 %v5143, %v5145
      %5204 = vadd.xlane.f32.xlu0 %v5203
      %v5205 = vpop.xlane.xlu0 %5204
      %v5206 = vadd.f32 %v5147, %v5149
      %5207 = vadd.xlane.f32.xlu0 %v5206
      %v5208 = vpop.xlane.xlu0 %5207
      %v5209 = vadd.f32 %v5151, %v5153
      %5210 = vadd.xlane.f32.xlu0 %v5209
      %v5211 = vpop.xlane.xlu0 %5210
      %v5212 = vadd.f32 %v5155, %v5157
      %5213 = vadd.xlane.f32.xlu0 %v5212
      %v5214 = vpop.xlane.xlu0 %5213
      %v5215 = vadd.f32 %v5159, %v5161
      %5216 = vadd.xlane.f32.xlu0 %v5215
      %v5217 = vpop.xlane.xlu0 %5216
      %v5218 = vadd.f32 %v5163, %v5165
      %5219 = vadd.xlane.f32.xlu0 %v5218
      %v5220 = vpop.xlane.xlu0 %5219
      %v5221 = vadd.f32 %v5167, %v5169
      %5222 = vadd.xlane.f32.xlu0 %v5221
      %v5223 = vpop.xlane.xlu0 %5222
      %v5224 = vadd.f32 %v5171, %v5173
      %5225 = vadd.xlane.f32.xlu0 %v5224
      %v5226 = vpop.xlane.xlu0 %5225
      %v5227 = vadd.f32 %v5175, %v5177
      %5228 = vadd.xlane.f32.xlu0 %v5227
      %v5229 = vpop.xlane.xlu0 %5228
      %v5230 = vadd.f32 %v5179, %v5181
      %5231 = vadd.xlane.f32.xlu0 %v5230
      %v5232 = vpop.xlane.xlu0 %5231
      %v5233 = vadd.f32 %v5183, %v5185
      %5234 = vadd.xlane.f32.xlu0 %v5233
      %v5235 = vpop.xlane.xlu0 %5234
      %v5236 = vadd.f32 %v5187, %v5189
      %5237 = vadd.xlane.f32.xlu0 %v5236
      %v5238 = vpop.xlane.xlu0 %5237
      %v5239 = vadd.f32 %v5191, %v5193
      %5240 = vadd.xlane.f32.xlu0 %v5239
      %v5241 = vpop.xlane.xlu0 %5240
      %v5242 = vrcp.pop %v5196
      %v5243 = vrcp.pop %v5199
      %v5244 = vrcp.pop %v5202
      %v5245 = vrcp.pop %v5205
      %v5246 = vrcp.pop %v5208
      %v5247 = vrcp.pop %v5211
      %v5248 = vrcp.pop %v5214
      %v5249 = vrcp.pop %v5217
      %v5250 = vrcp.pop %v5220
      %v5251 = vrcp.pop %v5223
      %v5252 = vrcp.pop %v5226
      %v5253 = vrcp.pop %v5229
      %v5254 = vrcp.pop %v5232
      %v5255 = vrcp.pop %v5235
      %v5256 = vrcp.pop %v5238
      %v5257 = vrcp.pop %v5241
      %v5258 = vmul.f32 %v5131, %v5242
      %v5259 = vmul.f32 %v5133, %v5242
      %v5260 = vmul.f32 %v5135, %v5243
      %v5261 = vmul.f32 %v5137, %v5243
      %v5262 = vmul.f32 %v5139, %v5244
      %v5263 = vmul.f32 %v5141, %v5244
      %v5264 = vmul.f32 %v5143, %v5245
      %v5265 = vmul.f32 %v5145, %v5245
      %v5266 = vmul.f32 %v5147, %v5246
      %v5267 = vmul.f32 %v5149, %v5246
      %v5268 = vmul.f32 %v5151, %v5247
      %v5269 = vmul.f32 %v5153, %v5247
      %v5270 = vmul.f32 %v5155, %v5248
      %v5271 = vmul.f32 %v5157, %v5248
      %v5272 = vmul.f32 %v5159, %v5249
      %v5273 = vmul.f32 %v5161, %v5249
      %v5274 = vmul.f32 %v5163, %v5250
      %v5275 = vmul.f32 %v5165, %v5250
      %v5276 = vmul.f32 %v5167, %v5251
      %v5277 = vmul.f32 %v5169, %v5251
      %v5278 = vmul.f32 %v5171, %v5252
      %v5279 = vmul.f32 %v5173, %v5252
      %v5280 = vmul.f32 %v5175, %v5253
      %v5281 = vmul.f32 %v5177, %v5253
      %v5282 = vmul.f32 %v5179, %v5254
      %v5283 = vmul.f32 %v5181, %v5254
      %v5284 = vmul.f32 %v5183, %v5255
      %v5285 = vmul.f32 %v5185, %v5255
      %v5286 = vmul.f32 %v5187, %v5256
      %v5287 = vmul.f32 %v5189, %v5256
      %v5288 = vmul.f32 %v5191, %v5257
      %v5289 = vmul.f32 %v5193, %v5257
      %5290 = vmatpush.xpose.msra.mxu0 %v5288
      %5291 = vmatpush.xpose.msra.mxu0 %v5286
      %5292 = vmatpush.xpose.msra.mxu0 %v5284
      %5293 = vmatpush.xpose.msra.mxu0 %v5282
      %5294 = vmatpush.xpose.msra.mxu0 %v5280
      %5295 = vmatpush.xpose.msra.mxu0 %v5278
      %5296 = vmatpush.xpose.msra.mxu0 %v5276
      %5297 = vmatpush.xpose.msra.mxu0 %v5274
      %5298 = vmatpush.xpose.msra.mxu0 %v5272
      %5299 = vmatpush.xpose.msra.mxu0 %v5270
      %5300 = vmatpush.xpose.msra.mxu0 %v5268
      %5301 = vmatpush.xpose.msra.mxu0 %v5266
      %5302 = vmatpush.xpose.msra.mxu0 %v5264
      %5303 = vmatpush.xpose.msra.mxu0 %v5262
      %5304 = vmatpush.xpose.msra.mxu0 %v5260
      %5305 = vmatpush.xpose.msra.mxu0 %v5258
      %5306 = vmatmul.f32.gmra.mxu0 %v4287
      %v5307 = vpop.f32.mrf.mxu0
      %v5308 = vadd.f32 0.0, %v5307
      %5309 = vdwg.mxu0
      %5310 = vmatpush.xpose.msra.mxu0 %v5289
      %5311 = vmatpush.xpose.msra.mxu0 %v5287
      %5312 = vmatpush.xpose.msra.mxu0 %v5285
      %5313 = vmatpush.xpose.msra.mxu0 %v5283
      %5314 = vmatpush.xpose.msra.mxu0 %v5281
      %5315 = vmatpush.xpose.msra.mxu0 %v5279
      %5316 = vmatpush.xpose.msra.mxu0 %v5277
      %5317 = vmatpush.xpose.msra.mxu0 %v5275
      %5318 = vmatpush.xpose.msra.mxu0 %v5273
      %5319 = vmatpush.xpose.msra.mxu0 %v5271
      %5320 = vmatpush.xpose.msra.mxu0 %v5269
      %5321 = vmatpush.xpose.msra.mxu0 %v5267
      %5322 = vmatpush.xpose.msra.mxu0 %v5265
      %5323 = vmatpush.xpose.msra.mxu0 %v5263
      %5324 = vmatpush.xpose.msra.mxu0 %v5261
      %5325 = vmatpush.xpose.msra.mxu0 %v5259
      %5326 = vmatmul.f32.gmra.mxu0 %v4307
      %v5327 = vpop.f32.mrf.mxu0
      %v5328 = vadd.f32 %v5308, %v5327
      %5329 = vdwg.mxu0
      %5330 = vmatpush.msra.mxu0 0.0
      %5331 = vmatpush.msra.mxu0 0.0
      %5332 = vmatpush.msra.mxu0 0.0
      %5333 = vmatpush.msra.mxu0 0.0
      %5334 = vmatpush.msra.mxu0 0.0
      %5335 = vmatpush.msra.mxu0 0.0
      %5336 = vmatpush.msra.mxu0 0.0
      %5337 = vmatpush.msra.mxu0 0.0
      %5338 = vmatpush.msra.mxu0 0.0
      %5339 = vmatpush.msra.mxu0 0.0
      %5340 = vmatpush.msra.mxu0 0.0
      %5341 = vmatpush.msra.mxu0 0.0
      %5342 = vmatpush.msra.mxu0 0.0
      %5343 = vmatpush.msra.mxu0 0.0
      %5344 = vmatpush.msra.mxu0 0.0
      %5345 = vmatpush.msra.mxu0 %v5328
      %5346 = vmatmul.f32.gmra.mxu0 %v4800
      %v5347 = vpop.f32.mrf.mxu0
      %v5348 = vadd.f32 0.0, %v5347
      %5349 = vmatmul.f32.gmra.mxu0 %v4803
      %v5350 = vpop.f32.mrf.mxu0
      %v5351 = vadd.f32 0.0, %v5350
      %5352 = vmatmul.f32.gmra.mxu0 %v4806
      %v5353 = vpop.f32.mrf.mxu0
      %v5354 = vadd.f32 0.0, %v5353
      %5355 = vmatmul.f32.gmra.mxu0 %v4809
      %v5356 = vpop.f32.mrf.mxu0
      %v5357 = vadd.f32 0.0, %v5356
      %5358 = vdwg.mxu0
      %v5359 = vadd.f32 %v4142, %v4829
      %v5360 = vadd.f32 %v4143, %v5348
      %v5361 = vadd.f32 %v4144, %v4832
      %v5362 = vadd.f32 %v4145, %v5351
      %v5363 = vadd.f32 %v4146, %v4835
      %v5364 = vadd.f32 %v4147, %v5354
      %v5365 = vadd.f32 %v4148, %v4838
      %v5366 = vadd.f32 %v4149, %v5357
      %v5367 = vadd.f32 %v5359, %v279
      %v5368 = vadd.f32 %v5360, %v280
      %v5369 = vadd.f32 %v5361, %v281
      %v5370 = vadd.f32 %v5362, %v282
      %v5371 = vadd.f32 %v5363, %v283
      %v5372 = vadd.f32 %v5364, %v284
      %v5373 = vadd.f32 %v5365, %v285
      %v5374 = vadd.f32 %v5366, %v286
      %v5375 = vadd.f32 %v5367, %v5369
      %v5376 = vadd.f32 %v5375, %v5371
      %v5377 = vadd.f32 %v5376, %v5373
      %v5378 = vrot.slane %v5377, 4
      %v5379 = vadd.f32 %v5377, %v5378
      %v5380 = vrot.slane %v5379, 2
      %v5381 = vadd.f32 %v5379, %v5380
      %v5382 = vrot.slane %v5381, 1
      %v5383 = vadd.f32 %v5381, %v5382
      %v5384 = vadd.f32 %v5368, %v5370
      %v5385 = vadd.f32 %v5384, %v5372
      %v5386 = vadd.f32 %v5385, %v5374
      %v5387 = vrot.slane %v5386, 4
      %v5388 = vadd.f32 %v5386, %v5387
      %v5389 = vrot.slane %v5388, 2
      %v5390 = vadd.f32 %v5388, %v5389
      %v5391 = vrot.slane %v5390, 1
      %v5392 = vadd.f32 %v5390, %v5391
      %v5393 = vmul.f32 %v5383, %v355
      %v5394 = vmul.f32 %v5392, %v355
      %v5395 = vsub.f32 %v5367, %v5393
      %v5396 = vsub.f32 %v5368, %v5394
      %v5397 = vsub.f32 %v5369, %v5393
      %v5398 = vsub.f32 %v5370, %v5394
      %v5399 = vsub.f32 %v5371, %v5393
      %v5400 = vsub.f32 %v5372, %v5394
      %v5401 = vsub.f32 %v5373, %v5393
      %v5402 = vsub.f32 %v5374, %v5394
      %v5403 = vmul.f32 %v5395, %v5395
      %v5404 = vmul.f32 %v5396, %v5396
      %v5405 = vmul.f32 %v5397, %v5397
      %v5406 = vmul.f32 %v5398, %v5398
      %v5407 = vmul.f32 %v5399, %v5399
      %v5408 = vmul.f32 %v5400, %v5400
      %v5409 = vmul.f32 %v5401, %v5401
      %v5410 = vmul.f32 %v5402, %v5402
      %v5411 = vadd.f32 %v5403, %v5405
      %v5412 = vadd.f32 %v5411, %v5407
      %v5413 = vadd.f32 %v5412, %v5409
      %v5414 = vrot.slane %v5413, 4
      %v5415 = vadd.f32 %v5413, %v5414
      %v5416 = vrot.slane %v5415, 2
      %v5417 = vadd.f32 %v5415, %v5416
      %v5418 = vrot.slane %v5417, 1
      %v5419 = vadd.f32 %v5417, %v5418
      %v5420 = vadd.f32 %v5404, %v5406
      %v5421 = vadd.f32 %v5420, %v5408
      %v5422 = vadd.f32 %v5421, %v5410
      %v5423 = vrot.slane %v5422, 4
      %v5424 = vadd.f32 %v5422, %v5423
      %v5425 = vrot.slane %v5424, 2
      %v5426 = vadd.f32 %v5424, %v5425
      %v5427 = vrot.slane %v5426, 1
      %v5428 = vadd.f32 %v5426, %v5427
      %v5429 = vmul.f32 %v5419, %v355
      %v5430 = vmul.f32 %v5428, %v355
      %v5431 = vadd.f32 %v5429, 1e-05
      %v5432 = vadd.f32 %v5430, 1e-05
      %v5433 = vrsqrt.pop %v5431
      %v5434 = vmul.f32 %v5433, %v5431
      %v5435 = vmul.f32 %v5434, %v5433
      %v5436 = vmul.f32 0.5, %v5435
      %v5437 = vsub.f32 1.5, %v5436
      %v5438 = vmul.f32 %v5433, %v5437
      %vm5439 = vweird.f32 %v5431
      %vm5440 = vweird.f32 %v5433
      %vm5441 = vmor %vm5439, %vm5440
      %v5442 = vsel %vm5441, %v5433, %v5438
      %v5443 = vrsqrt.pop %v5432
      %v5444 = vmul.f32 %v5443, %v5432
      %v5445 = vmul.f32 %v5444, %v5443
      %v5446 = vmul.f32 0.5, %v5445
      %v5447 = vsub.f32 1.5, %v5446
      %v5448 = vmul.f32 %v5443, %v5447
      %vm5449 = vweird.f32 %v5432
      %vm5450 = vweird.f32 %v5443
      %vm5451 = vmor %vm5449, %vm5450
      %v5452 = vsel %vm5451, %v5443, %v5448
      %v5453 = vmul.f32 %v5395, %v5442
      %v5454 = vmul.f32 %v5396, %v5452
      %v5455 = vmul.f32 %v5397, %v5442
      %v5456 = vmul.f32 %v5398, %v5452
      %v5457 = vmul.f32 %v5399, %v5442
      %v5458 = vmul.f32 %v5400, %v5452
      %v5459 = vmul.f32 %v5401, %v5442
      %v5460 = vmul.f32 %v5402, %v5452
      %5462 = vset.pattern.permute.xlu0 0
      %5463 = vperm.xlu0 %5462, %v302
      %v5464 = vpop.permute.xlu0 %5463
      %5467 = vset.pattern.permute.xlu0 0
      %5468 = vperm.xlu0 %5467, %v303
      %v5469 = vpop.permute.xlu0 %5468
      %5472 = vset.pattern.permute.xlu0 0
      %5473 = vperm.xlu0 %5472, %v304
      %v5474 = vpop.permute.xlu0 %5473
      %5477 = vset.pattern.permute.xlu0 0
      %5478 = vperm.xlu0 %5477, %v305
      %v5479 = vpop.permute.xlu0 %5478
      %v5481 = vmul.f32 %v5453, %v5464
      %v5482 = vmul.f32 %v5454, %v5464
      %v5483 = vmul.f32 %v5455, %v5469
      %v5484 = vmul.f32 %v5456, %v5469
      %v5485 = vmul.f32 %v5457, %v5474
      %v5486 = vmul.f32 %v5458, %v5474
      %v5487 = vmul.f32 %v5459, %v5479
      %v5488 = vmul.f32 %v5460, %v5479
      %5490 = vset.pattern.permute.xlu0 0
      %5491 = vperm.xlu0 %5490, %v307
      %v5492 = vpop.permute.xlu0 %5491
      %5495 = vset.pattern.permute.xlu0 0
      %5496 = vperm.xlu0 %5495, %v308
      %v5497 = vpop.permute.xlu0 %5496
      %5500 = vset.pattern.permute.xlu0 0
      %5501 = vperm.xlu0 %5500, %v309
      %v5502 = vpop.permute.xlu0 %5501
      %5505 = vset.pattern.permute.xlu0 0
      %5506 = vperm.xlu0 %5505, %v310
      %v5507 = vpop.permute.xlu0 %5506
      %v5509 = vadd.f32 %v5481, %v5492
      %v5510 = vadd.f32 %v5482, %v5492
      %v5511 = vadd.f32 %v5483, %v5497
      %v5512 = vadd.f32 %v5484, %v5497
      %v5513 = vadd.f32 %v5485, %v5502
      %v5514 = vadd.f32 %v5486, %v5502
      %v5515 = vadd.f32 %v5487, %v5507
      %v5516 = vadd.f32 %v5488, %v5507
      %v5517 = vld [vmem:[%s4] sm:$0xff]
      %v5518 = vld [vmem:[%s4 + $0x8] sm:$0xff]
      %v5519 = vld [vmem:[%s4 + $0x10] sm:$0xff]
      %v5520 = vld [vmem:[%s4 + $0x18] sm:$0xff]
      %5522 = vset.pattern.permute.xlu0 0
      %5523 = vperm.xlu0 %5522, %v312
      %v5524 = vpop.permute.xlu0 %5523
      %5527 = vset.pattern.permute.xlu0 0
      %5528 = vperm.xlu0 %5527, %v313
      %v5529 = vpop.permute.xlu0 %5528
      %5532 = vset.pattern.permute.xlu0 0
      %5533 = vperm.xlu0 %5532, %v314
      %v5534 = vpop.permute.xlu0 %5533
      %5537 = vset.pattern.permute.xlu0 0
      %5538 = vperm.xlu0 %5537, %v315
      %v5539 = vpop.permute.xlu0 %5538
      %v5542 = vsel %vm515, %v5517, 0
      %v5545 = vsel %vm515, %v5518, 0
      %v5548 = vsel %vm515, %v5519, 0
      %v5551 = vsel %vm515, %v5520, 0
      %5553 = vmatpush.msra.mxu0 0.0
      %5554 = vmatpush.msra.mxu0 0.0
      %5555 = vmatpush.msra.mxu0 0.0
      %5556 = vmatpush.msra.mxu0 0.0
      %5557 = vmatpush.msra.mxu0 0.0
      %5558 = vmatpush.msra.mxu0 0.0
      %5559 = vmatpush.msra.mxu0 0.0
      %5560 = vmatpush.msra.mxu0 0.0
      %5561 = vmatpush.msra.mxu0 0.0
      %5562 = vmatpush.msra.mxu0 0.0
      %5563 = vmatpush.msra.mxu0 0.0
      %5564 = vmatpush.msra.mxu0 0.0
      %5565 = vmatpush.msra.mxu0 %v5515
      %5566 = vmatpush.msra.mxu0 %v5513
      %5567 = vmatpush.msra.mxu0 %v5511
      %5568 = vmatpush.msra.mxu0 %v5509
      %5569 = vmatmul.f32.gmra.mxu0 %v5542
      %v5570 = vpop.f32.mrf.mxu0
      %v5571 = vadd.f32 %v5524, %v5570
      %5572 = vmatmul.f32.gmra.mxu0 %v5545
      %v5573 = vpop.f32.mrf.mxu0
      %v5574 = vadd.f32 %v5529, %v5573
      %5575 = vmatmul.f32.gmra.mxu0 %v5548
      %v5576 = vpop.f32.mrf.mxu0
      %v5577 = vadd.f32 %v5534, %v5576
      %5578 = vmatmul.f32.gmra.mxu0 %v5551
      %v5579 = vpop.f32.mrf.mxu0
      %v5580 = vadd.f32 %v5539, %v5579
      %5581 = vdwg.mxu0
      %5582 = vmatpush.msra.mxu0 0.0
      %5583 = vmatpush.msra.mxu0 0.0
      %5584 = vmatpush.msra.mxu0 0.0
      %5585 = vmatpush.msra.mxu0 0.0
      %5586 = vmatpush.msra.mxu0 0.0
      %5587 = vmatpush.msra.mxu0 0.0
      %5588 = vmatpush.msra.mxu0 0.0
      %5589 = vmatpush.msra.mxu0 0.0
      %5590 = vmatpush.msra.mxu0 0.0
      %5591 = vmatpush.msra.mxu0 0.0
      %5592 = vmatpush.msra.mxu0 0.0
      %5593 = vmatpush.msra.mxu0 0.0
      %5594 = vmatpush.msra.mxu0 %v5516
      %5595 = vmatpush.msra.mxu0 %v5514
      %5596 = vmatpush.msra.mxu0 %v5512
      %5597 = vmatpush.msra.mxu0 %v5510
      %5598 = vmatmul.f32.gmra.mxu0 %v5542
      %v5599 = vpop.f32.mrf.mxu0
      %v5600 = vadd.f32 %v5524, %v5599
      %5601 = vmatmul.f32.gmra.mxu0 %v5545
      %v5602 = vpop.f32.mrf.mxu0
      %v5603 = vadd.f32 %v5529, %v5602
      %5604 = vmatmul.f32.gmra.mxu0 %v5548
      %v5605 = vpop.f32.mrf.mxu0
      %v5606 = vadd.f32 %v5534, %v5605
      %5607 = vmatmul.f32.gmra.mxu0 %v5551
      %v5608 = vpop.f32.mrf.mxu0
      %v5609 = vadd.f32 %v5539, %v5608
      %5610 = vdwg.mxu0
      %v5611 = vadd.f32 %v5571, %v5574
      %v5612 = vadd.f32 %v5611, %v5577
      %v5613 = vadd.f32 %v5612, %v5580
      %v5614 = vrot.slane %v5613, 4
      %v5615 = vadd.f32 %v5613, %v5614
      %v5616 = vrot.slane %v5615, 2
      %v5617 = vadd.f32 %v5615, %v5616
      %v5618 = vrot.slane %v5617, 1
      %v5619 = vadd.f32 %v5617, %v5618
      %v5620 = vadd.f32 %v5600, %v5603
      %v5621 = vadd.f32 %v5620, %v5606
      %v5622 = vadd.f32 %v5621, %v5609
      %v5623 = vrot.slane %v5622, 4
      %v5624 = vadd.f32 %v5622, %v5623
      %v5625 = vrot.slane %v5624, 2
      %v5626 = vadd.f32 %v5624, %v5625
      %v5627 = vrot.slane %v5626, 1
      %v5628 = vadd.f32 %v5626, %v5627
      %v5629 = vmul.f32 %v5619, %v355
      %v5630 = vmul.f32 %v5628, %v355
      %v5631 = vsub.f32 %v5571, %v5629
      %v5632 = vsub.f32 %v5600, %v5630
      %v5633 = vsub.f32 %v5574, %v5629
      %v5634 = vsub.f32 %v5603, %v5630
      %v5635 = vsub.f32 %v5577, %v5629
      %v5636 = vsub.f32 %v5606, %v5630
      %v5637 = vsub.f32 %v5580, %v5629
      %v5638 = vsub.f32 %v5609, %v5630
      %v5639 = vmul.f32 %v5631, %v5631
      %v5640 = vmul.f32 %v5632, %v5632
      %v5641 = vmul.f32 %v5633, %v5633
      %v5642 = vmul.f32 %v5634, %v5634
      %v5643 = vmul.f32 %v5635, %v5635
      %v5644 = vmul.f32 %v5636, %v5636
      %v5645 = vmul.f32 %v5637, %v5637
      %v5646 = vmul.f32 %v5638, %v5638
      %v5647 = vadd.f32 %v5639, %v5641
      %v5648 = vadd.f32 %v5647, %v5643
      %v5649 = vadd.f32 %v5648, %v5645
      %v5650 = vrot.slane %v5649, 4
      %v5651 = vadd.f32 %v5649, %v5650
      %v5652 = vrot.slane %v5651, 2
      %v5653 = vadd.f32 %v5651, %v5652
      %v5654 = vrot.slane %v5653, 1
      %v5655 = vadd.f32 %v5653, %v5654
      %v5656 = vadd.f32 %v5640, %v5642
      %v5657 = vadd.f32 %v5656, %v5644
      %v5658 = vadd.f32 %v5657, %v5646
      %v5659 = vrot.slane %v5658, 4
      %v5660 = vadd.f32 %v5658, %v5659
      %v5661 = vrot.slane %v5660, 2
      %v5662 = vadd.f32 %v5660, %v5661
      %v5663 = vrot.slane %v5662, 1
      %v5664 = vadd.f32 %v5662, %v5663
      %v5665 = vmul.f32 %v5655, %v355
      %v5666 = vmul.f32 %v5664, %v355
      %v5667 = vadd.f32 %v5665, 1e-05
      %v5668 = vadd.f32 %v5666, 1e-05
      %v5669 = vrsqrt.pop %v5667
      %v5670 = vmul.f32 %v5669, %v5667
      %v5671 = vmul.f32 %v5670, %v5669
      %v5672 = vmul.f32 0.5, %v5671
      %v5673 = vsub.f32 1.5, %v5672
      %v5674 = vmul.f32 %v5669, %v5673
      %vm5675 = vweird.f32 %v5667
      %vm5676 = vweird.f32 %v5669
      %vm5677 = vmor %vm5675, %vm5676
      %v5678 = vsel %vm5677, %v5669, %v5674
      %v5679 = vrsqrt.pop %v5668
      %v5680 = vmul.f32 %v5679, %v5668
      %v5681 = vmul.f32 %v5680, %v5679
      %v5682 = vmul.f32 0.5, %v5681
      %v5683 = vsub.f32 1.5, %v5682
      %v5684 = vmul.f32 %v5679, %v5683
      %vm5685 = vweird.f32 %v5668
      %vm5686 = vweird.f32 %v5679
      %vm5687 = vmor %vm5685, %vm5686
      %v5688 = vsel %vm5687, %v5679, %v5684
      %v5689 = vmul.f32 %v5631, %v5678
      %v5690 = vmul.f32 %v5632, %v5688
      %v5691 = vmul.f32 %v5633, %v5678
      %v5692 = vmul.f32 %v5634, %v5688
      %v5693 = vmul.f32 %v5635, %v5678
      %v5694 = vmul.f32 %v5636, %v5688
      %v5695 = vmul.f32 %v5637, %v5678
      %v5696 = vmul.f32 %v5638, %v5688
      %5698 = vset.pattern.permute.xlu0 0
      %5699 = vperm.xlu0 %5698, %v317
      %v5700 = vpop.permute.xlu0 %5699
      %5703 = vset.pattern.permute.xlu0 0
      %5704 = vperm.xlu0 %5703, %v318
      %v5705 = vpop.permute.xlu0 %5704
      %5708 = vset.pattern.permute.xlu0 0
      %5709 = vperm.xlu0 %5708, %v319
      %v5710 = vpop.permute.xlu0 %5709
      %5713 = vset.pattern.permute.xlu0 0
      %5714 = vperm.xlu0 %5713, %v320
      %v5715 = vpop.permute.xlu0 %5714
      %v5717 = vmul.f32 %v5689, %v5700
      %v5718 = vmul.f32 %v5690, %v5700
      %v5719 = vmul.f32 %v5691, %v5705
      %v5720 = vmul.f32 %v5692, %v5705
      %v5721 = vmul.f32 %v5693, %v5710
      %v5722 = vmul.f32 %v5694, %v5710
      %v5723 = vmul.f32 %v5695, %v5715
      %v5724 = vmul.f32 %v5696, %v5715
      %5726 = vset.pattern.permute.xlu0 0
      %5727 = vperm.xlu0 %5726, %v322
      %v5728 = vpop.permute.xlu0 %5727
      %5731 = vset.pattern.permute.xlu0 0
      %5732 = vperm.xlu0 %5731, %v323
      %v5733 = vpop.permute.xlu0 %5732
      %5736 = vset.pattern.permute.xlu0 0
      %5737 = vperm.xlu0 %5736, %v324
      %v5738 = vpop.permute.xlu0 %5737
      %5741 = vset.pattern.permute.xlu0 0
      %5742 = vperm.xlu0 %5741, %v325
      %v5743 = vpop.permute.xlu0 %5742
      %v5745 = vadd.f32 %v5717, %v5728
      %v5746 = vadd.f32 %v5718, %v5728
      %v5747 = vadd.f32 %v5719, %v5733
      %v5748 = vadd.f32 %v5720, %v5733
      %v5749 = vadd.f32 %v5721, %v5738
      %v5750 = vadd.f32 %v5722, %v5738
      %v5751 = vadd.f32 %v5723, %v5743
      %v5752 = vadd.f32 %v5724, %v5743
      %v5753 = vld [vmem:[%s5] sm:$0xff]
      %v5754 = vld [vmem:[%s5 + $0x8] sm:$0xff]
      %v5755 = vld [vmem:[%s5 + $0x10] sm:$0xff]
      %v5756 = vld [vmem:[%s5 + $0x18] sm:$0xff]
      %5758 = vset.pattern.permute.xlu0 0
      %5759 = vperm.xlu0 %5758, %v327
      %v5760 = vpop.permute.xlu0 %5759
      %5763 = vset.pattern.permute.xlu0 0
      %5764 = vperm.xlu0 %5763, %v328
      %v5765 = vpop.permute.xlu0 %5764
      %5768 = vset.pattern.permute.xlu0 0
      %5769 = vperm.xlu0 %5768, %v329
      %v5770 = vpop.permute.xlu0 %5769
      %5773 = vset.pattern.permute.xlu0 0
      %5774 = vperm.xlu0 %5773, %v330
      %v5775 = vpop.permute.xlu0 %5774
      %v5778 = vsel %vm515, %v5753, 0
      %v5781 = vsel %vm515, %v5754, 0
      %v5784 = vsel %vm515, %v5755, 0
      %v5787 = vsel %vm515, %v5756, 0
      %5789 = vmatpush.msra.mxu0 0.0
      %5790 = vmatpush.msra.mxu0 0.0
      %5791 = vmatpush.msra.mxu0 0.0
      %5792 = vmatpush.msra.mxu0 0.0
      %5793 = vmatpush.msra.mxu0 0.0
      %5794 = vmatpush.msra.mxu0 0.0
      %5795 = vmatpush.msra.mxu0 0.0
      %5796 = vmatpush.msra.mxu0 0.0
      %5797 = vmatpush.msra.mxu0 0.0
      %5798 = vmatpush.msra.mxu0 0.0
      %5799 = vmatpush.msra.mxu0 0.0
      %5800 = vmatpush.msra.mxu0 0.0
      %5801 = vmatpush.msra.mxu0 %v5751
      %5802 = vmatpush.msra.mxu0 %v5749
      %5803 = vmatpush.msra.mxu0 %v5747
      %5804 = vmatpush.msra.mxu0 %v5745
      %5805 = vmatmul.f32.gmra.mxu0 %v5778
      %v5806 = vpop.f32.mrf.mxu0
      %v5807 = vadd.f32 %v5760, %v5806
      %5808 = vmatmul.f32.gmra.mxu0 %v5781
      %v5809 = vpop.f32.mrf.mxu0
      %v5810 = vadd.f32 %v5765, %v5809
      %5811 = vmatmul.f32.gmra.mxu0 %v5784
      %v5812 = vpop.f32.mrf.mxu0
      %v5813 = vadd.f32 %v5770, %v5812
      %5814 = vmatmul.f32.gmra.mxu0 %v5787
      %v5815 = vpop.f32.mrf.mxu0
      %v5816 = vadd.f32 %v5775, %v5815
      %5817 = vdwg.mxu0
      %5818 = vmatpush.msra.mxu0 0.0
      %5819 = vmatpush.msra.mxu0 0.0
      %5820 = vmatpush.msra.mxu0 0.0
      %5821 = vmatpush.msra.mxu0 0.0
      %5822 = vmatpush.msra.mxu0 0.0
      %5823 = vmatpush.msra.mxu0 0.0
      %5824 = vmatpush.msra.mxu0 0.0
      %5825 = vmatpush.msra.mxu0 0.0
      %5826 = vmatpush.msra.mxu0 0.0
      %5827 = vmatpush.msra.mxu0 0.0
      %5828 = vmatpush.msra.mxu0 0.0
      %5829 = vmatpush.msra.mxu0 0.0
      %5830 = vmatpush.msra.mxu0 %v5752
      %5831 = vmatpush.msra.mxu0 %v5750
      %5832 = vmatpush.msra.mxu0 %v5748
      %5833 = vmatpush.msra.mxu0 %v5746
      %5834 = vmatmul.f32.gmra.mxu0 %v5778
      %v5835 = vpop.f32.mrf.mxu0
      %v5836 = vadd.f32 %v5760, %v5835
      %5837 = vmatmul.f32.gmra.mxu0 %v5781
      %v5838 = vpop.f32.mrf.mxu0
      %v5839 = vadd.f32 %v5765, %v5838
      %5840 = vmatmul.f32.gmra.mxu0 %v5784
      %v5841 = vpop.f32.mrf.mxu0
      %v5842 = vadd.f32 %v5770, %v5841
      %5843 = vmatmul.f32.gmra.mxu0 %v5787
      %v5844 = vpop.f32.mrf.mxu0
      %v5845 = vadd.f32 %v5775, %v5844
      %5846 = vdwg.mxu0
      %v5847 = vadd.f32 %v5807, %v5367
      %v5848 = vadd.f32 %v5836, %v5368
      %v5849 = vadd.f32 %v5810, %v5369
      %v5850 = vadd.f32 %v5839, %v5370
      %v5851 = vadd.f32 %v5813, %v5371
      %v5852 = vadd.f32 %v5842, %v5372
      %v5853 = vadd.f32 %v5816, %v5373
      %v5854 = vadd.f32 %v5845, %v5374
      %5855 = vst [vmem:[%s278] sm:$0xff] %v5847
      %5856 = vst [vmem:[%s278 + $0x8] sm:$0xff] %v5848
      %5857 = vst [vmem:[%s278 + $0x10] sm:$0xff] %v5849
      %5858 = vst [vmem:[%s278 + $0x18] sm:$0xff] %v5850
      %5859 = vst [vmem:[%s278 + $0x20] sm:$0xff] %v5851
      %5860 = vst [vmem:[%s278 + $0x28] sm:$0xff] %v5852
      %5861 = vst [vmem:[%s278 + $0x30] sm:$0xff] %v5853
      %5862 = vst [vmem:[%s278 + $0x38] sm:$0xff] %v5854
      %p5863 = scmp.lt.s32.totalorder %s18, 1
      %s5864 = scalar_select %p5863, %s18, 1
      %s5865 = smul.addr %s5864, 8
      %s5866 = smul.addr %s5865, 8
      %s5867 = scalar_lea.vmem %s7, %s5866
      // Predicated region
      $region49: #{transformer_encoder_sa.1} parent=47 // pred_check
        %p5868 = pneg %p188
      $region50: #{transformer_encoder_sa.1} parent=47 // pred_check_branch
        %5870 = sbr.rel (%p5868) target = $region52
      $region51: #{transformer_encoder_sa.1} parent=47 // pred_region
        _
      $region52: #{transformer_encoder_sa.1} parent=47 // pred_fallthru
        _
    $region48: #{transformer_encoder_sa.1} parent=5 // pred_fallthru
      _
    %p5871 = scmp.le.s32.totalorder 2, %s13
    // Predicated region
    $region53: #{transformer_encoder_sa.1} parent=5 // pred_check
      %p5872 = pneg %p5871
    $region54: #{transformer_encoder_sa.1} parent=5 // pred_check_branch
      %5874 = sbr.rel (%p5872) target = $region56
    $region55: #{transformer_encoder_sa.1} parent=5 // pred_region
      %s5875 = ssub.s32 %s13, 2
      // Predicated region
      $region57: #{transformer_encoder_sa.1} parent=55 // pred_check
        %p5876 = pneg %p194
      $region58: #{transformer_encoder_sa.1} parent=55 // pred_check_branch
        %5878 = sbr.rel (%p5876) target = $region60
      $region59: #{transformer_encoder_sa.1} parent=55 // pred_region
        %p5879 = scmp.lt.s32.totalorder %s19, 1
        %s5880 = scalar_select %p5879, %s19, 1
        %s5881 = smul.addr %s5880, 8
        %s5882 = smul.addr %s5881, 8
        %s5883 = scalar_lea.vmem %s7, %s5882
      $region60: #{transformer_encoder_sa.1} parent=55 // pred_fallthru
        _
    $region56: #{transformer_encoder_sa.1} parent=5 // pred_fallthru
      _
  $region6: #{transformer_encoder_sa.1} parent=0 // loop_footer
    %s17 = sadd.s32 1, %s13
  $region7: #{transformer_encoder_sa.1} parent=0 // loop_footer_branch
    %12 = sbr.rel target = $region3
  $region8: #{transformer_encoder_sa.1} parent=0 // loop_exit
    _

</llo_original>
